<compile_context>
chip_gen: v7x
topology: tpu7x:2x2x1
jax: 0.10.0
libtpu: 0.0.40
codegen_flags: <defaults>
</compile_context>

<pallas_src>
import jax
import jax.numpy as jnp
import numpy as np
from jax import lax
from jax.experimental import pallas as pl
from jax.experimental.pallas import tpu as pltpu

NEG_SLOPE = 0.01  # torch nn.LeakyReLU default


def leaky(x):
    return jnp.where(x >= 0, x, NEG_SLOPE * x)


def _round_up(x, m):
    return -(-x // m) * m


# --------------------------------------------------------------------------
# Fused LACRB kernel: conv1 -> LeakyReLU -> conv2 -> residual, G images/step
# --------------------------------------------------------------------------
def _make_lacrb_kernel(H, W, C, M, CP, G, LPAD):
    HW = H * W
    GHW = G * HW
    NA = 10                      # rows of A1_aug / A2_aug (9 outputs + ones)

    def kernel(x_ref, mask_ref, wk_ref, ws_ref, out_ref, xbuf, pat):
        # ---- working image buffer ---------------------------------------
        # Zero every step: halo strips + pad rows must be clean (masks
        # multiply, and stale NaN * 0 == NaN).  Only a few vregs of stores.
        xbuf[...] = jnp.zeros(xbuf.shape, xbuf.dtype)
        # Constant-ones pad row (channel C): folds the attention1 biases
        # into the matmuls through the (never-masked) center tap.
        xbuf[C:C + 1, LPAD:LPAD + GHW] = jnp.ones((1, GHW), jnp.float32)
        # Load the G images side by side along the lane axis (128-aligned).
        for g in range(G):
            xbuf[0:C, LPAD + g * HW:LPAD + (g + 1) * HW] = x_ref[g]

        def laconv(idx):
            wk = wk_ref[idx]                               # (RK, 9*CP)
            ws = ws_ref[idx]                               # (RS, SW)
            a1 = wk[0:NA, :]                               # 3x3 attn (+bias)
            wm = wk[NA:NA + M, :]                          # main conv weight
            a2 = ws[0:NA, 0:NA]                            # 1x1 attn (+bias)
            a3 = ws[0:9, NA:2 * NA]                        # 1x1 attn (+bias)
            wb1 = ws[0:M, 2 * NA:2 * NA + C]               # attn3 1x1 #1
            bb1 = ws[0:M, 2 * NA + C:2 * NA + C + 1]
            wb2 = ws[0:M, 2 * NA + C + 1:2 * NA + C + 1 + M]
            bb2 = ws[0:M, 2 * NA + C + 1 + M:2 * NA + C + 2 + M]

            # -- im2col: 9 shifted, pre-masked window copies written once
            #    into the (9*CP, G*HW) patch slab at tile-aligned offsets.
            for ij in range(9):
                di, dj = divmod(ij, 3)
                start = LPAD + (di - 1) * W + (dj - 1)     # static offset
                pat[ij * CP:(ij + 1) * CP, :] = (
                    xbuf[:, start:start + GHW]
                    * mask_ref[ij * CP:(ij + 1) * CP, :])

            patches = pat[...]                             # (9*CP, GHW)

            # -- attention1: 3 bias-free MXU dots (biases ride the ones row)
            s = leaky(jnp.dot(a1, patches,
                              preferred_element_type=jnp.float32))  # (10,GHW)
            s = leaky(jnp.dot(a2, s,
                              preferred_element_type=jnp.float32))  # (10,GHW)
            att = jax.nn.sigmoid(
                jnp.dot(a3, s, preferred_element_type=jnp.float32))  # (9,GHW)

            # -- attention3 bias: per-image (segmented) global avg-pool
            z = xbuf[0:C, LPAD:LPAD + GHW]
            avg = jnp.concatenate(
                [jnp.mean(z[:, g * HW:(g + 1) * HW], axis=1, keepdims=True)
                 for g in range(G)], axis=1)                         # (C, G)
            hid = leaky(jnp.dot(wb1, avg,
                                preferred_element_type=jnp.float32) + bb1)
            bias = jnp.dot(wb2, hid,
                           preferred_element_type=jnp.float32) + bb2  # (M, G)

            # -- adaptive conv: modulate the slab in place (no second
            #    concatenate), then a single K = 9*CP MXU dot.
            for ij in range(9):
                pat[ij * CP:(ij + 1) * CP, :] = (
                    pat[ij * CP:(ij + 1) * CP, :] * att[ij:ij + 1, :])
            y = jnp.dot(wm, pat[...],
                        preferred_element_type=jnp.float32)          # (M,GHW)
            return y, bias

        # ---- conv1 -> LeakyReLU (activation never leaves VMEM) -----------
        y1, b1 = laconv(0)
        for g in range(G):
            xbuf[0:C, LPAD + g * HW:LPAD + (g + 1) * HW] = leaky(
                y1[:, g * HW:(g + 1) * HW] + b1[:, g:g + 1])
        # Halo strips / pad rows are still zero; the ones row is untouched,
        # so the bias fold works unchanged for conv2.

        # ---- conv2 -> residual --------------------------------------------
        y2, b2 = laconv(1)
        for g in range(G):
            out_ref[g] = (x_ref[g] + y2[:, g * HW:(g + 1) * HW]
                          + b2[:, g:g + 1]).astype(out_ref.dtype)

    return kernel


def _mask_slab(H, W, CP, G):
    """(9*CP, G*H*W) 0/1 mask: valid lanes for each shifted 3x3 tap."""
    hh, ww = np.meshgrid(np.arange(H), np.arange(W), indexing="ij")
    m = np.zeros((9, H * W), np.float32)
    for ij in range(9):
        di, dj = divmod(ij, 3)
        valid = ((hh + di - 1 >= 0) & (hh + di - 1 < H) &
                 (ww + dj - 1 >= 0) & (ww + dj - 1 < W))
        m[ij] = valid.reshape(-1)
    m = np.tile(m, (1, G))                 # same pattern for each image slot
    m = np.repeat(m, CP, axis=0)           # expand across the CP sublanes
    return jnp.asarray(m)


def lacrb_pallas(x_nchw, packed1, packed2, group=None):
    """LACRB forward: x + conv2(leaky(conv1(x))).  NCHW in / NCHW out."""
    B, C, H, W = x_nchw.shape
    HW = H * W
    wk1, ws1 = packed1
    wk2, ws2 = packed2
    M = C                                   # LACRB uses in_planes == out_planes
    CP = wk1.shape[1] // 9
    assert HW % 128 == 0, "flat spatial size must be a multiple of 128 lanes"
    assert CP % 8 == 0 and C < CP, "need a spare ones row in the channel pad"

    # Images per grid step (lane-batching).  Largest divisor of B up to 8;
    # on v7x keep B//G >= 2 when B allows it so both TensorCores get work.
    if group is None:
        group = max(g for g in (8, 4, 2, 1) if B % g == 0)
    G = group
    assert B % G == 0
    GHW = G * HW
    LPAD = _round_up(max(W + 1, 128), 128)       # lane-aligned interior start
    XW = _round_up(LPAD + GHW + W + 1, 128)      # flat image buffer width

    masks = _mask_slab(H, W, CP, G)              # (9*CP, G*HW), VMEM-resident
    wk = jnp.stack([wk1, wk2])                   # (2, RK, 9*CP)
    ws = jnp.stack([ws1, ws2])                   # (2, RS, SW)
    x_flat = x_nchw.reshape(B, C, HW)            # channels->sublane, HW->lane

    kernel = _make_lacrb_kernel(H, W, C, M, CP, G, LPAD)

    out = pl.pallas_call(
        kernel,
        out_shape=jax.ShapeDtypeStruct((B, C, HW), x_nchw.dtype),
        grid=(B // G,),
        in_specs=[
            pl.BlockSpec((G, C, HW), lambda b: (b, 0, 0)),
            pl.BlockSpec(masks.shape, lambda b: (0, 0)),
            pl.BlockSpec(wk.shape, lambda b: (0, 0, 0)),
            pl.BlockSpec(ws.shape, lambda b: (0, 0, 0)),
        ],
        out_specs=pl.BlockSpec((G, C, HW), lambda b: (b, 0, 0)),
        scratch_shapes=[
            pltpu.VMEM((CP, XW), jnp.float32),          # padded flat images
            pltpu.VMEM((9 * CP, GHW), jnp.float32),     # im2col patch slab
        ],
        compiler_params=pltpu.CompilerParams(
            dimension_semantics=("parallel",)),
    )(x_flat, masks, wk, ws)
    return out.reshape(B, C, H, W)


# --------------------------------------------------------------------------
# Deterministic parameter init (torch layouts) + packing to kernel layout
# --------------------------------------------------------------------------
def init_laconv_params_torch(key, C, M, scale=0.1):
    ks = jax.random.split(key, 11)
    f = lambda k, s: jax.random.normal(k, s, jnp.float32) * scale
    return {
        "a1_w": f(ks[0], (9, C, 3, 3)), "a1_b": f(ks[1], (9,)),
        "a2_w": f(ks[2], (9, 9, 1, 1)), "a2_b": f(ks[3], (9,)),
        "a3_w": f(ks[4], (9, 9, 1, 1)), "a3_b": f(ks[5], (9,)),
        "b1_w": f(ks[6], (M, C, 1, 1)), "b1_b": f(ks[7], (M,)),
        "b2_w": f(ks[8], (M, M, 1, 1)), "b2_b": f(ks[9], (M,)),
        "w":    f(ks[10], (M, C, 3, 3)),
    }


def to_kernel_layout(t):
    """Pack one LAConv2D's 11 torch-layout params into two padded slabs."""
    M, C = t["w"].shape[0], t["w"].shape[1]
    CP = _round_up(C + 1, 8)            # channel pad, keeps one ones row free
    NA = 10
    K = 9 * CP

    def pack_3x3(w):                    # (O,C,3,3) -> (O, 9*CP), tap-major
        O = w.shape[0]
        w9c = np.transpose(np.asarray(w), (0, 2, 3, 1)).reshape(O, 9, C)
        out = np.zeros((O, 9, CP), np.float32)
        out[:, :, :C] = w9c
        return out.reshape(O, K)

    bias_col = 4 * CP + C               # center tap, ones-row channel

    # wk = [A1_aug (10,K) ; wmain (M,K)], rows padded to a sublane multiple
    RK = _round_up(NA + M, 8)
    wk = np.zeros((RK, K), np.float32)
    wk[0:9, :] = pack_3x3(t["a1_w"])
    wk[0:9, bias_col] = np.asarray(t["a1_b"])        # fold ba1
    wk[9, bias_col] = 1.0                            # ones-row propagation
    wk[NA:NA + M, :] = pack_3x3(t["w"])

    # ws = [A2_aug | A3_aug | wb1 bb1 wb2 bb2]
    SW = 2 * NA + C + M + 2
    RS = _round_up(NA, 8)
    ws = np.zeros((RS, SW), np.float32)
    ws[0:9, 0:9] = np.asarray(t["a2_w"])[:, :, 0, 0]
    ws[0:9, 9] = np.asarray(t["a2_b"])               # fold ba2
    ws[9, 9] = 1.0                                   # ones-row propagation
    ws[0:9, NA:NA + 9] = np.asarray(t["a3_w"])[:, :, 0, 0]
    ws[0:9, NA + 9] = np.asarray(t["a3_b"])          # fold ba3
    ws[0:M, 2 * NA:2 * NA + C] = np.asarray(t["b1_w"])[:, :, 0, 0]
    ws[0:M, 2 * NA + C] = np.asarray(t["b1_b"])
    ws[0:M, 2 * NA + C + 1:2 * NA + C + 1 + M] = np.asarray(t["b2_w"])[:, :, 0, 0]
    ws[0:M, 2 * NA + C + 1 + M] = np.asarray(t["b2_b"])
    return jnp.asarray(wk), jnp.asarray(ws)


# --------------------------------------------------------------------------
# Pure-JAX reference (mirrors the PyTorch code, NCHW) for correctness check
# --------------------------------------------------------------------------
def _conv_nchw(x, w, pad):
    return lax.conv_general_dilated(
        x, w, (1, 1), ((pad, pad), (pad, pad)),
        dimension_numbers=("NCHW", "OIHW", "NCHW"),
        precision=lax.Precision.HIGHEST)


def ref_laconv(x, t):
    b, C, H, W = x.shape
    M = t["w"].shape[0]
    a = leaky(_conv_nchw(x, t["a1_w"], 1) + t["a1_b"][None, :, None, None])
    a = leaky(_conv_nchw(a, t["a2_w"], 0) + t["a2_b"][None, :, None, None])
    a = jax.nn.sigmoid(_conv_nchw(a, t["a3_w"], 0)
                       + t["a3_b"][None, :, None, None])          # (b,9,H,W)

    xp = jnp.pad(x, ((0, 0), (0, 0), (1, 1), (1, 1)))
    pat = jnp.stack([xp[:, :, i:i + H, j:j + W]
                     for i in range(3) for j in range(3)], axis=2)  # (b,C,9,H,W)
    kx = pat.reshape(b, C * 9, H * W)

    atw = jnp.transpose(a, (0, 2, 3, 1))                           # (b,H,W,9)
    atw = jnp.broadcast_to(atw[:, :, :, None, :], (b, H, W, C, 9))
    atw = atw.reshape(b, H * W, C * 9)
    atw = jnp.transpose(atw, (0, 2, 1))                            # (b,C*9,HW)

    atx = atw * kx
    wflat = t["w"].reshape(M, C * 9)
    y = jnp.einsum("bph,mp->bmh", atx, wflat, precision="highest")  # (b,M,HW)

    avg = jnp.mean(x, axis=(2, 3), keepdims=True)                  # (b,C,1,1)
    hid = leaky(_conv_nchw(avg, t["b1_w"], 0) + t["b1_b"][None, :, None, None])
    bias = _conv_nchw(hid, t["b2_w"], 0) + t["b2_b"][None, :, None, None]
    y = y + bias.reshape(b, M, 1)
    return y.reshape(b, M, H, W)


def ref_lacrb(x, t1, t2):
    r = leaky(ref_laconv(x, t1))
    r = ref_laconv(r, t2)
    return x + r


# --------------------------------------------------------------------------
if __name__ == "__main__":
    key = jax.random.PRNGKey(0)
    kx, k1, k2 = jax.random.split(key, 3)

    B, C, H, W = 2, 4, 16, 16            # LACRB(in_planes=4, ms_dim=*)
    x = jax.random.normal(kx, (B, C, H, W), jnp.float32)

    t1 = init_laconv_params_torch(k1, C, C)   # conv1 params (torch layout)
    t2 = init_laconv_params_torch(k2, C, C)   # conv2 params (torch layout)
    p1, p2 = to_kernel_layout(t1), to_kernel_layout(t2)

    y = lacrb_pallas(x, p1, p2)
    jax.block_until_ready(y)

    y_ref = ref_lacrb(x, t1, t2)
    np.testing.assert_allclose(np.asarray(y), np.asarray(y_ref),
                               rtol=1e-3, atol=1e-3)
    print("KERNEL_OK")
</pallas_src>

<mosaic_0001>
module attributes {stable_mosaic.version = 11 : i64} {
  func.func @kernel(%arg0: i32, %arg1: memref<2x4x256xf32, #tpu.memory_space<vmem>>, %arg2: memref<72x512xf32, #tpu.memory_space<vmem>>, %arg3: memref<2x16x72xf32, #tpu.memory_space<vmem>>, %arg4: memref<2x16x30xf32, #tpu.memory_space<vmem>>, %arg5: memref<2x4x256xf32, #tpu.memory_space<vmem>>, %arg6: memref<8x768xf32, #tpu.memory_space<vmem>>, %arg7: memref<72x512xf32, #tpu.memory_space<vmem>>) attributes {dimension_semantics = [#tpu.dimension_semantics<parallel>], iteration_bounds = array<i64: 1>, scalar_prefetch = 0 : i64, scratch_operands = 2 : i64, tpu.core_type = #tpu.core_type<tc>, window_params = [{transform_indices = @transform_0, window_bounds = array<i64: 2, 4, 256>}, {pipeline_mode = #tpu.pipeline_mode<synchronous>, transform_indices = @transform_1, window_bounds = array<i64: 72, 512>}, {pipeline_mode = #tpu.pipeline_mode<synchronous>, transform_indices = @transform_2, window_bounds = array<i64: 2, 16, 72>}, {pipeline_mode = #tpu.pipeline_mode<synchronous>, transform_indices = @transform_3, window_bounds = array<i64: 2, 16, 30>}, {transform_indices = @transform_4, window_bounds = array<i64: 2, 4, 256>}]} {
    %cst = arith.constant 0.000000e+00 : f32
    %0 = vector.broadcast %cst : f32 to vector<8x768xf32>
    %c0 = arith.constant 0 : index
    %c0_0 = arith.constant 0 : index
    %1 = vector.load %arg6[%c0, %c0_0] : memref<8x768xf32, #tpu.memory_space<vmem>>, vector<8x768xf32>
    tpu.vector_store %arg6[%c0, %c0_0], %0 {strides = array<i32>} : memref<8x768xf32, #tpu.memory_space<vmem>>, vector<8x768xf32>,
    %cst_1 = arith.constant 1.000000e+00 : f32
    %2 = vector.broadcast %cst_1 : f32 to vector<1x512xf32>
    %c4 = arith.constant 4 : index
    %c128 = arith.constant 128 : index
    %3 = vector.load %arg6[%c4, %c128] : memref<8x768xf32, #tpu.memory_space<vmem>>, vector<1x512xf32>
    tpu.vector_store %arg6[%c4, %c128], %2 {strides = array<i32>} : memref<8x768xf32, #tpu.memory_space<vmem>>, vector<1x512xf32>,
    %c0_2 = arith.constant 0 : index
    %c0_3 = arith.constant 0 : index
    %c0_4 = arith.constant 0 : index
    %4 = vector.load %arg1[%c0_2, %c0_3, %c0_4] : memref<2x4x256xf32, #tpu.memory_space<vmem>>, vector<1x4x256xf32>
    %5 = vector.shape_cast %4 : vector<1x4x256xf32> to vector<4x256xf32>
    %c0_5 = arith.constant 0 : index
    %c128_6 = arith.constant 128 : index
    %6 = vector.load %arg6[%c0_5, %c128_6] : memref<8x768xf32, #tpu.memory_space<vmem>>, vector<4x256xf32>
    tpu.vector_store %arg6[%c0_5, %c128_6], %5 {strides = array<i32>} : memref<8x768xf32, #tpu.memory_space<vmem>>, vector<4x256xf32>,
    %c1 = arith.constant 1 : index
    %c0_7 = arith.constant 0 : index
    %c0_8 = arith.constant 0 : index
    %7 = vector.load %arg1[%c1, %c0_7, %c0_8] : memref<2x4x256xf32, #tpu.memory_space<vmem>>, vector<1x4x256xf32>
    %8 = vector.shape_cast %7 : vector<1x4x256xf32> to vector<4x256xf32>
    %c0_9 = arith.constant 0 : index
    %c384 = arith.constant 384 : index
    %9 = vector.load %arg6[%c0_9, %c384] : memref<8x768xf32, #tpu.memory_space<vmem>>, vector<4x256xf32>
    tpu.vector_store %arg6[%c0_9, %c384], %8 {strides = array<i32>} : memref<8x768xf32, #tpu.memory_space<vmem>>, vector<4x256xf32>,
    %c0_10 = arith.constant 0 : index
    %c0_11 = arith.constant 0 : index
    %c0_12 = arith.constant 0 : index
    %10 = vector.load %arg3[%c0_10, %c0_11, %c0_12] : memref<2x16x72xf32, #tpu.memory_space<vmem>>, vector<1x16x72xf32>
    %11 = vector.shape_cast %10 : vector<1x16x72xf32> to vector<16x72xf32>
    %c0_13 = arith.constant 0 : index
    %c0_14 = arith.constant 0 : index
    %c0_15 = arith.constant 0 : index
    %12 = vector.load %arg4[%c0_13, %c0_14, %c0_15] : memref<2x16x30xf32, #tpu.memory_space<vmem>>, vector<1x16x30xf32>
    %13 = vector.shape_cast %12 : vector<1x16x30xf32> to vector<16x30xf32>
    %14 = vector.extract_strided_slice %11 {offsets = [0, 0], sizes = [10, 72], strides = [1, 1]} : vector<16x72xf32> to vector<10x72xf32>
    %15 = vector.extract_strided_slice %11 {offsets = [10, 0], sizes = [4, 72], strides = [1, 1]} : vector<16x72xf32> to vector<4x72xf32>
    %16 = vector.extract_strided_slice %13 {offsets = [0, 0], sizes = [10, 10], strides = [1, 1]} : vector<16x30xf32> to vector<10x10xf32>
    %17 = vector.extract_strided_slice %13 {offsets = [0, 10], sizes = [9, 10], strides = [1, 1]} : vector<16x30xf32> to vector<9x10xf32>
    %18 = vector.extract_strided_slice %13 {offsets = [0, 20], sizes = [4, 4], strides = [1, 1]} : vector<16x30xf32> to vector<4x4xf32>
    %19 = vector.extract_strided_slice %13 {offsets = [0, 24], sizes = [4, 1], strides = [1, 1]} : vector<16x30xf32> to vector<4x1xf32>
    %20 = vector.extract_strided_slice %13 {offsets = [0, 25], sizes = [4, 4], strides = [1, 1]} : vector<16x30xf32> to vector<4x4xf32>
    %21 = vector.extract_strided_slice %13 {offsets = [0, 29], sizes = [4, 1], strides = [1, 1]} : vector<16x30xf32> to vector<4x1xf32>
    %c0_16 = arith.constant 0 : index
    %c111 = arith.constant 111 : index
    %22 = vector.load %arg6[%c0_16, %c111] : memref<8x768xf32, #tpu.memory_space<vmem>>, vector<8x512xf32>
    %c0_17 = arith.constant 0 : index
    %c0_18 = arith.constant 0 : index
    %23 = vector.load %arg2[%c0_17, %c0_18] : memref<72x512xf32, #tpu.memory_space<vmem>>, vector<8x512xf32>
    %24 = arith.mulf %22, %23 : vector<8x512xf32>
    %c0_19 = arith.constant 0 : index
    %c0_20 = arith.constant 0 : index
    %25 = vector.load %arg7[%c0_19, %c0_20] : memref<72x512xf32, #tpu.memory_space<vmem>>, vector<8x512xf32>
    tpu.vector_store %arg7[%c0_19, %c0_20], %24 {strides = array<i32>} : memref<72x512xf32, #tpu.memory_space<vmem>>, vector<8x512xf32>,
    %c0_21 = arith.constant 0 : index
    %c112 = arith.constant 112 : index
    %26 = vector.load %arg6[%c0_21, %c112] : memref<8x768xf32, #tpu.memory_space<vmem>>, vector<8x512xf32>
    %c8 = arith.constant 8 : index
    %c0_22 = arith.constant 0 : index
    %27 = vector.load %arg2[%c8, %c0_22] : memref<72x512xf32, #tpu.memory_space<vmem>>, vector<8x512xf32>
    %28 = arith.mulf %26, %27 : vector<8x512xf32>
    %c8_23 = arith.constant 8 : index
    %c0_24 = arith.constant 0 : index
    %29 = vector.load %arg7[%c8_23, %c0_24] : memref<72x512xf32, #tpu.memory_space<vmem>>, vector<8x512xf32>
    tpu.vector_store %arg7[%c8_23, %c0_24], %28 {strides = array<i32>} : memref<72x512xf32, #tpu.memory_space<vmem>>, vector<8x512xf32>,
    %c0_25 = arith.constant 0 : index
    %c113 = arith.constant 113 : index
    %30 = vector.load %arg6[%c0_25, %c113] : memref<8x768xf32, #tpu.memory_space<vmem>>, vector<8x512xf32>
    %c16 = arith.constant 16 : index
    %c0_26 = arith.constant 0 : index
    %31 = vector.load %arg2[%c16, %c0_26] : memref<72x512xf32, #tpu.memory_space<vmem>>, vector<8x512xf32>
    %32 = arith.mulf %30, %31 : vector<8x512xf32>
    %c16_27 = arith.constant 16 : index
    %c0_28 = arith.constant 0 : index
    %33 = vector.load %arg7[%c16_27, %c0_28] : memref<72x512xf32, #tpu.memory_space<vmem>>, vector<8x512xf32>
    tpu.vector_store %arg7[%c16_27, %c0_28], %32 {strides = array<i32>} : memref<72x512xf32, #tpu.memory_space<vmem>>, vector<8x512xf32>,
    %c0_29 = arith.constant 0 : index
    %c127 = arith.constant 127 : index
    %34 = vector.load %arg6[%c0_29, %c127] : memref<8x768xf32, #tpu.memory_space<vmem>>, vector<8x512xf32>
    %c24 = arith.constant 24 : index
    %c0_30 = arith.constant 0 : index
    %35 = vector.load %arg2[%c24, %c0_30] : memref<72x512xf32, #tpu.memory_space<vmem>>, vector<8x512xf32>
    %36 = arith.mulf %34, %35 : vector<8x512xf32>
    %c24_31 = arith.constant 24 : index
    %c0_32 = arith.constant 0 : index
    %37 = vector.load %arg7[%c24_31, %c0_32] : memref<72x512xf32, #tpu.memory_space<vmem>>, vector<8x512xf32>
    tpu.vector_store %arg7[%c24_31, %c0_32], %36 {strides = array<i32>} : memref<72x512xf32, #tpu.memory_space<vmem>>, vector<8x512xf32>,
    %c0_33 = arith.constant 0 : index
    %c128_34 = arith.constant 128 : index
    %38 = vector.load %arg6[%c0_33, %c128_34] : memref<8x768xf32, #tpu.memory_space<vmem>>, vector<8x512xf32>
    %c32 = arith.constant 32 : index
    %c0_35 = arith.constant 0 : index
    %39 = vector.load %arg2[%c32, %c0_35] : memref<72x512xf32, #tpu.memory_space<vmem>>, vector<8x512xf32>
    %40 = arith.mulf %38, %39 : vector<8x512xf32>
    %c32_36 = arith.constant 32 : index
    %c0_37 = arith.constant 0 : index
    %41 = vector.load %arg7[%c32_36, %c0_37] : memref<72x512xf32, #tpu.memory_space<vmem>>, vector<8x512xf32>
    tpu.vector_store %arg7[%c32_36, %c0_37], %40 {strides = array<i32>} : memref<72x512xf32, #tpu.memory_space<vmem>>, vector<8x512xf32>,
    %c0_38 = arith.constant 0 : index
    %c129 = arith.constant 129 : index
    %42 = vector.load %arg6[%c0_38, %c129] : memref<8x768xf32, #tpu.memory_space<vmem>>, vector<8x512xf32>
    %c40 = arith.constant 40 : index
    %c0_39 = arith.constant 0 : index
    %43 = vector.load %arg2[%c40, %c0_39] : memref<72x512xf32, #tpu.memory_space<vmem>>, vector<8x512xf32>
    %44 = arith.mulf %42, %43 : vector<8x512xf32>
    %c40_40 = arith.constant 40 : index
    %c0_41 = arith.constant 0 : index
    %45 = vector.load %arg7[%c40_40, %c0_41] : memref<72x512xf32, #tpu.memory_space<vmem>>, vector<8x512xf32>
    tpu.vector_store %arg7[%c40_40, %c0_41], %44 {strides = array<i32>} : memref<72x512xf32, #tpu.memory_space<vmem>>, vector<8x512xf32>,
    %c0_42 = arith.constant 0 : index
    %c143 = arith.constant 143 : index
    %46 = vector.load %arg6[%c0_42, %c143] : memref<8x768xf32, #tpu.memory_space<vmem>>, vector<8x512xf32>
    %c48 = arith.constant 48 : index
    %c0_43 = arith.constant 0 : index
    %47 = vector.load %arg2[%c48, %c0_43] : memref<72x512xf32, #tpu.memory_space<vmem>>, vector<8x512xf32>
    %48 = arith.mulf %46, %47 : vector<8x512xf32>
    %c48_44 = arith.constant 48 : index
    %c0_45 = arith.constant 0 : index
    %49 = vector.load %arg7[%c48_44, %c0_45] : memref<72x512xf32, #tpu.memory_space<vmem>>, vector<8x512xf32>
    tpu.vector_store %arg7[%c48_44, %c0_45], %48 {strides = array<i32>} : memref<72x512xf32, #tpu.memory_space<vmem>>, vector<8x512xf32>,
    %c0_46 = arith.constant 0 : index
    %c144 = arith.constant 144 : index
    %50 = vector.load %arg6[%c0_46, %c144] : memref<8x768xf32, #tpu.memory_space<vmem>>, vector<8x512xf32>
    %c56 = arith.constant 56 : index
    %c0_47 = arith.constant 0 : index
    %51 = vector.load %arg2[%c56, %c0_47] : memref<72x512xf32, #tpu.memory_space<vmem>>, vector<8x512xf32>
    %52 = arith.mulf %50, %51 : vector<8x512xf32>
    %c56_48 = arith.constant 56 : index
    %c0_49 = arith.constant 0 : index
    %53 = vector.load %arg7[%c56_48, %c0_49] : memref<72x512xf32, #tpu.memory_space<vmem>>, vector<8x512xf32>
    tpu.vector_store %arg7[%c56_48, %c0_49], %52 {strides = array<i32>} : memref<72x512xf32, #tpu.memory_space<vmem>>, vector<8x512xf32>,
    %c0_50 = arith.constant 0 : index
    %c145 = arith.constant 145 : index
    %54 = vector.load %arg6[%c0_50, %c145] : memref<8x768xf32, #tpu.memory_space<vmem>>, vector<8x512xf32>
    %c64 = arith.constant 64 : index
    %c0_51 = arith.constant 0 : index
    %55 = vector.load %arg2[%c64, %c0_51] : memref<72x512xf32, #tpu.memory_space<vmem>>, vector<8x512xf32>
    %56 = arith.mulf %54, %55 : vector<8x512xf32>
    %c64_52 = arith.constant 64 : index
    %c0_53 = arith.constant 0 : index
    %57 = vector.load %arg7[%c64_52, %c0_53] : memref<72x512xf32, #tpu.memory_space<vmem>>, vector<8x512xf32>
    tpu.vector_store %arg7[%c64_52, %c0_53], %56 {strides = array<i32>} : memref<72x512xf32, #tpu.memory_space<vmem>>, vector<8x512xf32>,
    %c0_54 = arith.constant 0 : index
    %c0_55 = arith.constant 0 : index
    %58 = vector.load %arg7[%c0_54, %c0_55] : memref<72x512xf32, #tpu.memory_space<vmem>>, vector<72x512xf32>
    %cst_56 = arith.constant dense<0.000000e+00> : vector<10x512xf32>
    %59 = tpu.matmul %14, %58, %cst_56 {dimension_numbers = #tpu.dot_dimension_numbers<[1], [0], [0], [1], [0, 0, 1, 1], [], []>} : vector<10x72xf32>, vector<72x512xf32>, vector<10x512xf32> -> vector<10x512xf32>
    %cst_57 = arith.constant 0.000000e+00 : f32
    %60 = vector.broadcast %cst_57 : f32 to vector<10x512xf32>
    %61 = arith.cmpf oge, %59, %60 : vector<10x512xf32>
    %cst_58 = arith.constant 0.00999999977 : f32
    %62 = vector.broadcast %cst_58 : f32 to vector<10x512xf32>
    %63 = arith.mulf %62, %59 : vector<10x512xf32>
    %64 = arith.select %61, %59, %63 : vector<10x512xi1>, vector<10x512xf32>
    %cst_59 = arith.constant dense<0.000000e+00> : vector<10x512xf32>
    %65 = tpu.matmul %16, %64, %cst_59 {dimension_numbers = #tpu.dot_dimension_numbers<[1], [0], [0], [1], [0, 0, 1, 1], [], []>} : vector<10x10xf32>, vector<10x512xf32>, vector<10x512xf32> -> vector<10x512xf32>
    %cst_60 = arith.constant 0.000000e+00 : f32
    %66 = vector.broadcast %cst_60 : f32 to vector<10x512xf32>
    %67 = arith.cmpf oge, %65, %66 : vector<10x512xf32>
    %cst_61 = arith.constant 0.00999999977 : f32
    %68 = vector.broadcast %cst_61 : f32 to vector<10x512xf32>
    %69 = arith.mulf %68, %65 : vector<10x512xf32>
    %70 = arith.select %67, %65, %69 : vector<10x512xi1>, vector<10x512xf32>
    %cst_62 = arith.constant dense<0.000000e+00> : vector<9x512xf32>
    %71 = tpu.matmul %17, %70, %cst_62 {dimension_numbers = #tpu.dot_dimension_numbers<[1], [0], [0], [1], [0, 0, 1, 1], [], []>} : vector<9x10xf32>, vector<10x512xf32>, vector<9x512xf32> -> vector<9x512xf32>
    %72 = arith.negf %71 : vector<9x512xf32>
    %73 = math.exp %72 : vector<9x512xf32>
    %cst_63 = arith.constant 1.000000e+00 : f32
    %74 = vector.broadcast %cst_63 : f32 to vector<9x512xf32>
    %75 = arith.addf %74, %73 : vector<9x512xf32>
    %76 = arith.divf %74, %75 : vector<9x512xf32>
    %c0_64 = arith.constant 0 : index
    %c128_65 = arith.constant 128 : index
    %77 = vector.load %arg6[%c0_64, %c128_65] : memref<8x768xf32, #tpu.memory_space<vmem>>, vector<4x512xf32>
    %78 = vector.extract_strided_slice %77 {offsets = [0, 0], sizes = [4, 256], strides = [1, 1]} : vector<4x512xf32> to vector<4x256xf32>
    %cst_66 = arith.constant dense<0.000000e+00> : vector<4xf32>
    %79 = vector.multi_reduction <add>, %78, %cst_66 [1] : vector<4x256xf32> to vector<4xf32>
    %80 = vector.shape_cast %79 : vector<4xf32> to vector<4x1xf32>
    %cst_67 = arith.constant 2.560000e+02 : f32
    %81 = vector.broadcast %cst_67 : f32 to vector<4x1xf32>
    %82 = arith.divf %80, %81 : vector<4x1xf32>
    %83 = vector.extract_strided_slice %77 {offsets = [0, 256], sizes = [4, 256], strides = [1, 1]} : vector<4x512xf32> to vector<4x256xf32>
    %cst_68 = arith.constant dense<0.000000e+00> : vector<4xf32>
    %84 = vector.multi_reduction <add>, %83, %cst_68 [1] : vector<4x256xf32> to vector<4xf32>
    %85 = vector.shape_cast %84 : vector<4xf32> to vector<4x1xf32>
    %cst_69 = arith.constant 2.560000e+02 : f32
    %86 = vector.broadcast %cst_69 : f32 to vector<4x1xf32>
    %87 = arith.divf %85, %86 : vector<4x1xf32>
    %88 = tpu.concatenate %82, %87 in 1 : vector<4x1xf32>, vector<4x1xf32> -> vector<4x2xf32>
    %cst_70 = arith.constant dense<0.000000e+00> : vector<4x2xf32>
    %89 = tpu.matmul %18, %88, %cst_70 {dimension_numbers = #tpu.dot_dimension_numbers<[1], [0], [0], [1], [0, 0, 1, 1], [], []>} : vector<4x4xf32>, vector<4x2xf32>, vector<4x2xf32> -> vector<4x2xf32>
    %90 = vector.broadcast %19 : vector<4x1xf32> to vector<4x2xf32>
    %91 = arith.addf %89, %90 : vector<4x2xf32>
    %cst_71 = arith.constant 0.000000e+00 : f32
    %92 = vector.broadcast %cst_71 : f32 to vector<4x2xf32>
    %93 = arith.cmpf oge, %91, %92 : vector<4x2xf32>
    %cst_72 = arith.constant 0.00999999977 : f32
    %94 = vector.broadcast %cst_72 : f32 to vector<4x2xf32>
    %95 = arith.mulf %94, %91 : vector<4x2xf32>
    %96 = arith.select %93, %91, %95 : vector<4x2xi1>, vector<4x2xf32>
    %cst_73 = arith.constant dense<0.000000e+00> : vector<4x2xf32>
    %97 = tpu.matmul %20, %96, %cst_73 {dimension_numbers = #tpu.dot_dimension_numbers<[1], [0], [0], [1], [0, 0, 1, 1], [], []>} : vector<4x4xf32>, vector<4x2xf32>, vector<4x2xf32> -> vector<4x2xf32>
    %98 = vector.broadcast %21 : vector<4x1xf32> to vector<4x2xf32>
    %99 = arith.addf %97, %98 : vector<4x2xf32>
    %c0_74 = arith.constant 0 : index
    %c0_75 = arith.constant 0 : index
    %100 = vector.load %arg7[%c0_74, %c0_75] : memref<72x512xf32, #tpu.memory_space<vmem>>, vector<8x512xf32>
    %101 = vector.extract_strided_slice %76 {offsets = [0, 0], sizes = [1, 512], strides = [1, 1]} : vector<9x512xf32> to vector<1x512xf32>
    %102 = vector.broadcast %101 : vector<1x512xf32> to vector<8x512xf32>
    %103 = arith.mulf %100, %102 : vector<8x512xf32>
    %c0_76 = arith.constant 0 : index
    %c0_77 = arith.constant 0 : index
    %104 = vector.load %arg7[%c0_76, %c0_77] : memref<72x512xf32, #tpu.memory_space<vmem>>, vector<8x512xf32>
    tpu.vector_store %arg7[%c0_76, %c0_77], %103 {strides = array<i32>} : memref<72x512xf32, #tpu.memory_space<vmem>>, vector<8x512xf32>,
    %c8_78 = arith.constant 8 : index
    %c0_79 = arith.constant 0 : index
    %105 = vector.load %arg7[%c8_78, %c0_79] : memref<72x512xf32, #tpu.memory_space<vmem>>, vector<8x512xf32>
    %106 = vector.extract_strided_slice %76 {offsets = [1, 0], sizes = [1, 512], strides = [1, 1]} : vector<9x512xf32> to vector<1x512xf32>
    %107 = vector.broadcast %106 : vector<1x512xf32> to vector<8x512xf32>
    %108 = arith.mulf %105, %107 : vector<8x512xf32>
    %c8_80 = arith.constant 8 : index
    %c0_81 = arith.constant 0 : index
    %109 = vector.load %arg7[%c8_80, %c0_81] : memref<72x512xf32, #tpu.memory_space<vmem>>, vector<8x512xf32>
    tpu.vector_store %arg7[%c8_80, %c0_81], %108 {strides = array<i32>} : memref<72x512xf32, #tpu.memory_space<vmem>>, vector<8x512xf32>,
    %c16_82 = arith.constant 16 : index
    %c0_83 = arith.constant 0 : index
    %110 = vector.load %arg7[%c16_82, %c0_83] : memref<72x512xf32, #tpu.memory_space<vmem>>, vector<8x512xf32>
    %111 = vector.extract_strided_slice %76 {offsets = [2, 0], sizes = [1, 512], strides = [1, 1]} : vector<9x512xf32> to vector<1x512xf32>
    %112 = vector.broadcast %111 : vector<1x512xf32> to vector<8x512xf32>
    %113 = arith.mulf %110, %112 : vector<8x512xf32>
    %c16_84 = arith.constant 16 : index
    %c0_85 = arith.constant 0 : index
    %114 = vector.load %arg7[%c16_84, %c0_85] : memref<72x512xf32, #tpu.memory_space<vmem>>, vector<8x512xf32>
    tpu.vector_store %arg7[%c16_84, %c0_85], %113 {strides = array<i32>} : memref<72x512xf32, #tpu.memory_space<vmem>>, vector<8x512xf32>,
    %c24_86 = arith.constant 24 : index
    %c0_87 = arith.constant 0 : index
    %115 = vector.load %arg7[%c24_86, %c0_87] : memref<72x512xf32, #tpu.memory_space<vmem>>, vector<8x512xf32>
    %116 = vector.extract_strided_slice %76 {offsets = [3, 0], sizes = [1, 512], strides = [1, 1]} : vector<9x512xf32> to vector<1x512xf32>
    %117 = vector.broadcast %116 : vector<1x512xf32> to vector<8x512xf32>
    %118 = arith.mulf %115, %117 : vector<8x512xf32>
    %c24_88 = arith.constant 24 : index
    %c0_89 = arith.constant 0 : index
    %119 = vector.load %arg7[%c24_88, %c0_89] : memref<72x512xf32, #tpu.memory_space<vmem>>, vector<8x512xf32>
    tpu.vector_store %arg7[%c24_88, %c0_89], %118 {strides = array<i32>} : memref<72x512xf32, #tpu.memory_space<vmem>>, vector<8x512xf32>,
    %c32_90 = arith.constant 32 : index
    %c0_91 = arith.constant 0 : index
    %120 = vector.load %arg7[%c32_90, %c0_91] : memref<72x512xf32, #tpu.memory_space<vmem>>, vector<8x512xf32>
    %121 = vector.extract_strided_slice %76 {offsets = [4, 0], sizes = [1, 512], strides = [1, 1]} : vector<9x512xf32> to vector<1x512xf32>
    %122 = vector.broadcast %121 : vector<1x512xf32> to vector<8x512xf32>
    %123 = arith.mulf %120, %122 : vector<8x512xf32>
    %c32_92 = arith.constant 32 : index
    %c0_93 = arith.constant 0 : index
    %124 = vector.load %arg7[%c32_92, %c0_93] : memref<72x512xf32, #tpu.memory_space<vmem>>, vector<8x512xf32>
    tpu.vector_store %arg7[%c32_92, %c0_93], %123 {strides = array<i32>} : memref<72x512xf32, #tpu.memory_space<vmem>>, vector<8x512xf32>,
    %c40_94 = arith.constant 40 : index
    %c0_95 = arith.constant 0 : index
    %125 = vector.load %arg7[%c40_94, %c0_95] : memref<72x512xf32, #tpu.memory_space<vmem>>, vector<8x512xf32>
    %126 = vector.extract_strided_slice %76 {offsets = [5, 0], sizes = [1, 512], strides = [1, 1]} : vector<9x512xf32> to vector<1x512xf32>
    %127 = vector.broadcast %126 : vector<1x512xf32> to vector<8x512xf32>
    %128 = arith.mulf %125, %127 : vector<8x512xf32>
    %c40_96 = arith.constant 40 : index
    %c0_97 = arith.constant 0 : index
    %129 = vector.load %arg7[%c40_96, %c0_97] : memref<72x512xf32, #tpu.memory_space<vmem>>, vector<8x512xf32>
    tpu.vector_store %arg7[%c40_96, %c0_97], %128 {strides = array<i32>} : memref<72x512xf32, #tpu.memory_space<vmem>>, vector<8x512xf32>,
    %c48_98 = arith.constant 48 : index
    %c0_99 = arith.constant 0 : index
    %130 = vector.load %arg7[%c48_98, %c0_99] : memref<72x512xf32, #tpu.memory_space<vmem>>, vector<8x512xf32>
    %131 = vector.extract_strided_slice %76 {offsets = [6, 0], sizes = [1, 512], strides = [1, 1]} : vector<9x512xf32> to vector<1x512xf32>
    %132 = vector.broadcast %131 : vector<1x512xf32> to vector<8x512xf32>
    %133 = arith.mulf %130, %132 : vector<8x512xf32>
    %c48_100 = arith.constant 48 : index
    %c0_101 = arith.constant 0 : index
    %134 = vector.load %arg7[%c48_100, %c0_101] : memref<72x512xf32, #tpu.memory_space<vmem>>, vector<8x512xf32>
    tpu.vector_store %arg7[%c48_100, %c0_101], %133 {strides = array<i32>} : memref<72x512xf32, #tpu.memory_space<vmem>>, vector<8x512xf32>,
    %c56_102 = arith.constant 56 : index
    %c0_103 = arith.constant 0 : index
    %135 = vector.load %arg7[%c56_102, %c0_103] : memref<72x512xf32, #tpu.memory_space<vmem>>, vector<8x512xf32>
    %136 = vector.extract_strided_slice %76 {offsets = [7, 0], sizes = [1, 512], strides = [1, 1]} : vector<9x512xf32> to vector<1x512xf32>
    %137 = vector.broadcast %136 : vector<1x512xf32> to vector<8x512xf32>
    %138 = arith.mulf %135, %137 : vector<8x512xf32>
    %c56_104 = arith.constant 56 : index
    %c0_105 = arith.constant 0 : index
    %139 = vector.load %arg7[%c56_104, %c0_105] : memref<72x512xf32, #tpu.memory_space<vmem>>, vector<8x512xf32>
    tpu.vector_store %arg7[%c56_104, %c0_105], %138 {strides = array<i32>} : memref<72x512xf32, #tpu.memory_space<vmem>>, vector<8x512xf32>,
    %c64_106 = arith.constant 64 : index
    %c0_107 = arith.constant 0 : index
    %140 = vector.load %arg7[%c64_106, %c0_107] : memref<72x512xf32, #tpu.memory_space<vmem>>, vector<8x512xf32>
    %141 = vector.extract_strided_slice %76 {offsets = [8, 0], sizes = [1, 512], strides = [1, 1]} : vector<9x512xf32> to vector<1x512xf32>
    %142 = vector.broadcast %141 : vector<1x512xf32> to vector<8x512xf32>
    %143 = arith.mulf %140, %142 : vector<8x512xf32>
    %c64_108 = arith.constant 64 : index
    %c0_109 = arith.constant 0 : index
    %144 = vector.load %arg7[%c64_108, %c0_109] : memref<72x512xf32, #tpu.memory_space<vmem>>, vector<8x512xf32>
    tpu.vector_store %arg7[%c64_108, %c0_109], %143 {strides = array<i32>} : memref<72x512xf32, #tpu.memory_space<vmem>>, vector<8x512xf32>,
    %c0_110 = arith.constant 0 : index
    %c0_111 = arith.constant 0 : index
    %145 = vector.load %arg7[%c0_110, %c0_111] : memref<72x512xf32, #tpu.memory_space<vmem>>, vector<72x512xf32>
    %cst_112 = arith.constant dense<0.000000e+00> : vector<4x512xf32>
    %146 = tpu.matmul %15, %145, %cst_112 {dimension_numbers = #tpu.dot_dimension_numbers<[1], [0], [0], [1], [0, 0, 1, 1], [], []>} : vector<4x72xf32>, vector<72x512xf32>, vector<4x512xf32> -> vector<4x512xf32>
    %147 = vector.extract_strided_slice %146 {offsets = [0, 0], sizes = [4, 256], strides = [1, 1]} : vector<4x512xf32> to vector<4x256xf32>
    %148 = vector.extract_strided_slice %99 {offsets = [0, 0], sizes = [4, 1], strides = [1, 1]} : vector<4x2xf32> to vector<4x1xf32>
    %149 = vector.broadcast %148 : vector<4x1xf32> to vector<4x256xf32>
    %150 = arith.addf %147, %149 : vector<4x256xf32>
    %cst_113 = arith.constant 0.000000e+00 : f32
    %151 = vector.broadcast %cst_113 : f32 to vector<4x256xf32>
    %152 = arith.cmpf oge, %150, %151 : vector<4x256xf32>
    %cst_114 = arith.constant 0.00999999977 : f32
    %153 = vector.broadcast %cst_114 : f32 to vector<4x256xf32>
    %154 = arith.mulf %153, %150 : vector<4x256xf32>
    %155 = arith.select %152, %150, %154 : vector<4x256xi1>, vector<4x256xf32>
    %c0_115 = arith.constant 0 : index
    %c128_116 = arith.constant 128 : index
    %156 = vector.load %arg6[%c0_115, %c128_116] : memref<8x768xf32, #tpu.memory_space<vmem>>, vector<4x256xf32>
    tpu.vector_store %arg6[%c0_115, %c128_116], %155 {strides = array<i32>} : memref<8x768xf32, #tpu.memory_space<vmem>>, vector<4x256xf32>,
    %157 = vector.extract_strided_slice %146 {offsets = [0, 256], sizes = [4, 256], strides = [1, 1]} : vector<4x512xf32> to vector<4x256xf32>
    %158 = vector.extract_strided_slice %99 {offsets = [0, 1], sizes = [4, 1], strides = [1, 1]} : vector<4x2xf32> to vector<4x1xf32>
    %159 = vector.broadcast %158 : vector<4x1xf32> to vector<4x256xf32>
    %160 = arith.addf %157, %159 : vector<4x256xf32>
    %cst_117 = arith.constant 0.000000e+00 : f32
    %161 = vector.broadcast %cst_117 : f32 to vector<4x256xf32>
    %162 = arith.cmpf oge, %160, %161 : vector<4x256xf32>
    %cst_118 = arith.constant 0.00999999977 : f32
    %163 = vector.broadcast %cst_118 : f32 to vector<4x256xf32>
    %164 = arith.mulf %163, %160 : vector<4x256xf32>
    %165 = arith.select %162, %160, %164 : vector<4x256xi1>, vector<4x256xf32>
    %c0_119 = arith.constant 0 : index
    %c384_120 = arith.constant 384 : index
    %166 = vector.load %arg6[%c0_119, %c384_120] : memref<8x768xf32, #tpu.memory_space<vmem>>, vector<4x256xf32>
    tpu.vector_store %arg6[%c0_119, %c384_120], %165 {strides = array<i32>} : memref<8x768xf32, #tpu.memory_space<vmem>>, vector<4x256xf32>,
    %c1_121 = arith.constant 1 : index
    %c0_122 = arith.constant 0 : index
    %c0_123 = arith.constant 0 : index
    %167 = vector.load %arg3[%c1_121, %c0_122, %c0_123] : memref<2x16x72xf32, #tpu.memory_space<vmem>>, vector<1x16x72xf32>
    %168 = vector.shape_cast %167 : vector<1x16x72xf32> to vector<16x72xf32>
    %c1_124 = arith.constant 1 : index
    %c0_125 = arith.constant 0 : index
    %c0_126 = arith.constant 0 : index
    %169 = vector.load %arg4[%c1_124, %c0_125, %c0_126] : memref<2x16x30xf32, #tpu.memory_space<vmem>>, vector<1x16x30xf32>
    %170 = vector.shape_cast %169 : vector<1x16x30xf32> to vector<16x30xf32>
    %171 = vector.extract_strided_slice %168 {offsets = [0, 0], sizes = [10, 72], strides = [1, 1]} : vector<16x72xf32> to vector<10x72xf32>
    %172 = vector.extract_strided_slice %168 {offsets = [10, 0], sizes = [4, 72], strides = [1, 1]} : vector<16x72xf32> to vector<4x72xf32>
    %173 = vector.extract_strided_slice %170 {offsets = [0, 0], sizes = [10, 10], strides = [1, 1]} : vector<16x30xf32> to vector<10x10xf32>
    %174 = vector.extract_strided_slice %170 {offsets = [0, 10], sizes = [9, 10], strides = [1, 1]} : vector<16x30xf32> to vector<9x10xf32>
    %175 = vector.extract_strided_slice %170 {offsets = [0, 20], sizes = [4, 4], strides = [1, 1]} : vector<16x30xf32> to vector<4x4xf32>
    %176 = vector.extract_strided_slice %170 {offsets = [0, 24], sizes = [4, 1], strides = [1, 1]} : vector<16x30xf32> to vector<4x1xf32>
    %177 = vector.extract_strided_slice %170 {offsets = [0, 25], sizes = [4, 4], strides = [1, 1]} : vector<16x30xf32> to vector<4x4xf32>
    %178 = vector.extract_strided_slice %170 {offsets = [0, 29], sizes = [4, 1], strides = [1, 1]} : vector<16x30xf32> to vector<4x1xf32>
    %c0_127 = arith.constant 0 : index
    %c111_128 = arith.constant 111 : index
    %179 = vector.load %arg6[%c0_127, %c111_128] : memref<8x768xf32, #tpu.memory_space<vmem>>, vector<8x512xf32>
    %c0_129 = arith.constant 0 : index
    %c0_130 = arith.constant 0 : index
    %180 = vector.load %arg2[%c0_129, %c0_130] : memref<72x512xf32, #tpu.memory_space<vmem>>, vector<8x512xf32>
    %181 = arith.mulf %179, %180 : vector<8x512xf32>
    %c0_131 = arith.constant 0 : index
    %c0_132 = arith.constant 0 : index
    %182 = vector.load %arg7[%c0_131, %c0_132] : memref<72x512xf32, #tpu.memory_space<vmem>>, vector<8x512xf32>
    tpu.vector_store %arg7[%c0_131, %c0_132], %181 {strides = array<i32>} : memref<72x512xf32, #tpu.memory_space<vmem>>, vector<8x512xf32>,
    %c0_133 = arith.constant 0 : index
    %c112_134 = arith.constant 112 : index
    %183 = vector.load %arg6[%c0_133, %c112_134] : memref<8x768xf32, #tpu.memory_space<vmem>>, vector<8x512xf32>
    %c8_135 = arith.constant 8 : index
    %c0_136 = arith.constant 0 : index
    %184 = vector.load %arg2[%c8_135, %c0_136] : memref<72x512xf32, #tpu.memory_space<vmem>>, vector<8x512xf32>
    %185 = arith.mulf %183, %184 : vector<8x512xf32>
    %c8_137 = arith.constant 8 : index
    %c0_138 = arith.constant 0 : index
    %186 = vector.load %arg7[%c8_137, %c0_138] : memref<72x512xf32, #tpu.memory_space<vmem>>, vector<8x512xf32>
    tpu.vector_store %arg7[%c8_137, %c0_138], %185 {strides = array<i32>} : memref<72x512xf32, #tpu.memory_space<vmem>>, vector<8x512xf32>,
    %c0_139 = arith.constant 0 : index
    %c113_140 = arith.constant 113 : index
    %187 = vector.load %arg6[%c0_139, %c113_140] : memref<8x768xf32, #tpu.memory_space<vmem>>, vector<8x512xf32>
    %c16_141 = arith.constant 16 : index
    %c0_142 = arith.constant 0 : index
    %188 = vector.load %arg2[%c16_141, %c0_142] : memref<72x512xf32, #tpu.memory_space<vmem>>, vector<8x512xf32>
    %189 = arith.mulf %187, %188 : vector<8x512xf32>
    %c16_143 = arith.constant 16 : index
    %c0_144 = arith.constant 0 : index
    %190 = vector.load %arg7[%c16_143, %c0_144] : memref<72x512xf32, #tpu.memory_space<vmem>>, vector<8x512xf32>
    tpu.vector_store %arg7[%c16_143, %c0_144], %189 {strides = array<i32>} : memref<72x512xf32, #tpu.memory_space<vmem>>, vector<8x512xf32>,
    %c0_145 = arith.constant 0 : index
    %c127_146 = arith.constant 127 : index
    %191 = vector.load %arg6[%c0_145, %c127_146] : memref<8x768xf32, #tpu.memory_space<vmem>>, vector<8x512xf32>
    %c24_147 = arith.constant 24 : index
    %c0_148 = arith.constant 0 : index
    %192 = vector.load %arg2[%c24_147, %c0_148] : memref<72x512xf32, #tpu.memory_space<vmem>>, vector<8x512xf32>
    %193 = arith.mulf %191, %192 : vector<8x512xf32>
    %c24_149 = arith.constant 24 : index
    %c0_150 = arith.constant 0 : index
    %194 = vector.load %arg7[%c24_149, %c0_150] : memref<72x512xf32, #tpu.memory_space<vmem>>, vector<8x512xf32>
    tpu.vector_store %arg7[%c24_149, %c0_150], %193 {strides = array<i32>} : memref<72x512xf32, #tpu.memory_space<vmem>>, vector<8x512xf32>,
    %c0_151 = arith.constant 0 : index
    %c128_152 = arith.constant 128 : index
    %195 = vector.load %arg6[%c0_151, %c128_152] : memref<8x768xf32, #tpu.memory_space<vmem>>, vector<8x512xf32>
    %c32_153 = arith.constant 32 : index
    %c0_154 = arith.constant 0 : index
    %196 = vector.load %arg2[%c32_153, %c0_154] : memref<72x512xf32, #tpu.memory_space<vmem>>, vector<8x512xf32>
    %197 = arith.mulf %195, %196 : vector<8x512xf32>
    %c32_155 = arith.constant 32 : index
    %c0_156 = arith.constant 0 : index
    %198 = vector.load %arg7[%c32_155, %c0_156] : memref<72x512xf32, #tpu.memory_space<vmem>>, vector<8x512xf32>
    tpu.vector_store %arg7[%c32_155, %c0_156], %197 {strides = array<i32>} : memref<72x512xf32, #tpu.memory_space<vmem>>, vector<8x512xf32>,
    %c0_157 = arith.constant 0 : index
    %c129_158 = arith.constant 129 : index
    %199 = vector.load %arg6[%c0_157, %c129_158] : memref<8x768xf32, #tpu.memory_space<vmem>>, vector<8x512xf32>
    %c40_159 = arith.constant 40 : index
    %c0_160 = arith.constant 0 : index
    %200 = vector.load %arg2[%c40_159, %c0_160] : memref<72x512xf32, #tpu.memory_space<vmem>>, vector<8x512xf32>
    %201 = arith.mulf %199, %200 : vector<8x512xf32>
    %c40_161 = arith.constant 40 : index
    %c0_162 = arith.constant 0 : index
    %202 = vector.load %arg7[%c40_161, %c0_162] : memref<72x512xf32, #tpu.memory_space<vmem>>, vector<8x512xf32>
    tpu.vector_store %arg7[%c40_161, %c0_162], %201 {strides = array<i32>} : memref<72x512xf32, #tpu.memory_space<vmem>>, vector<8x512xf32>,
    %c0_163 = arith.constant 0 : index
    %c143_164 = arith.constant 143 : index
    %203 = vector.load %arg6[%c0_163, %c143_164] : memref<8x768xf32, #tpu.memory_space<vmem>>, vector<8x512xf32>
    %c48_165 = arith.constant 48 : index
    %c0_166 = arith.constant 0 : index
    %204 = vector.load %arg2[%c48_165, %c0_166] : memref<72x512xf32, #tpu.memory_space<vmem>>, vector<8x512xf32>
    %205 = arith.mulf %203, %204 : vector<8x512xf32>
    %c48_167 = arith.constant 48 : index
    %c0_168 = arith.constant 0 : index
    %206 = vector.load %arg7[%c48_167, %c0_168] : memref<72x512xf32, #tpu.memory_space<vmem>>, vector<8x512xf32>
    tpu.vector_store %arg7[%c48_167, %c0_168], %205 {strides = array<i32>} : memref<72x512xf32, #tpu.memory_space<vmem>>, vector<8x512xf32>,
    %c0_169 = arith.constant 0 : index
    %c144_170 = arith.constant 144 : index
    %207 = vector.load %arg6[%c0_169, %c144_170] : memref<8x768xf32, #tpu.memory_space<vmem>>, vector<8x512xf32>
    %c56_171 = arith.constant 56 : index
    %c0_172 = arith.constant 0 : index
    %208 = vector.load %arg2[%c56_171, %c0_172] : memref<72x512xf32, #tpu.memory_space<vmem>>, vector<8x512xf32>
    %209 = arith.mulf %207, %208 : vector<8x512xf32>
    %c56_173 = arith.constant 56 : index
    %c0_174 = arith.constant 0 : index
    %210 = vector.load %arg7[%c56_173, %c0_174] : memref<72x512xf32, #tpu.memory_space<vmem>>, vector<8x512xf32>
    tpu.vector_store %arg7[%c56_173, %c0_174], %209 {strides = array<i32>} : memref<72x512xf32, #tpu.memory_space<vmem>>, vector<8x512xf32>,
    %c0_175 = arith.constant 0 : index
    %c145_176 = arith.constant 145 : index
    %211 = vector.load %arg6[%c0_175, %c145_176] : memref<8x768xf32, #tpu.memory_space<vmem>>, vector<8x512xf32>
    %c64_177 = arith.constant 64 : index
    %c0_178 = arith.constant 0 : index
    %212 = vector.load %arg2[%c64_177, %c0_178] : memref<72x512xf32, #tpu.memory_space<vmem>>, vector<8x512xf32>
    %213 = arith.mulf %211, %212 : vector<8x512xf32>
    %c64_179 = arith.constant 64 : index
    %c0_180 = arith.constant 0 : index
    %214 = vector.load %arg7[%c64_179, %c0_180] : memref<72x512xf32, #tpu.memory_space<vmem>>, vector<8x512xf32>
    tpu.vector_store %arg7[%c64_179, %c0_180], %213 {strides = array<i32>} : memref<72x512xf32, #tpu.memory_space<vmem>>, vector<8x512xf32>,
    %c0_181 = arith.constant 0 : index
    %c0_182 = arith.constant 0 : index
    %215 = vector.load %arg7[%c0_181, %c0_182] : memref<72x512xf32, #tpu.memory_space<vmem>>, vector<72x512xf32>
    %cst_183 = arith.constant dense<0.000000e+00> : vector<10x512xf32>
    %216 = tpu.matmul %171, %215, %cst_183 {dimension_numbers = #tpu.dot_dimension_numbers<[1], [0], [0], [1], [0, 0, 1, 1], [], []>} : vector<10x72xf32>, vector<72x512xf32>, vector<10x512xf32> -> vector<10x512xf32>
    %cst_184 = arith.constant 0.000000e+00 : f32
    %217 = vector.broadcast %cst_184 : f32 to vector<10x512xf32>
    %218 = arith.cmpf oge, %216, %217 : vector<10x512xf32>
    %cst_185 = arith.constant 0.00999999977 : f32
    %219 = vector.broadcast %cst_185 : f32 to vector<10x512xf32>
    %220 = arith.mulf %219, %216 : vector<10x512xf32>
    %221 = arith.select %218, %216, %220 : vector<10x512xi1>, vector<10x512xf32>
    %cst_186 = arith.constant dense<0.000000e+00> : vector<10x512xf32>
    %222 = tpu.matmul %173, %221, %cst_186 {dimension_numbers = #tpu.dot_dimension_numbers<[1], [0], [0], [1], [0, 0, 1, 1], [], []>} : vector<10x10xf32>, vector<10x512xf32>, vector<10x512xf32> -> vector<10x512xf32>
    %cst_187 = arith.constant 0.000000e+00 : f32
    %223 = vector.broadcast %cst_187 : f32 to vector<10x512xf32>
    %224 = arith.cmpf oge, %222, %223 : vector<10x512xf32>
    %cst_188 = arith.constant 0.00999999977 : f32
    %225 = vector.broadcast %cst_188 : f32 to vector<10x512xf32>
    %226 = arith.mulf %225, %222 : vector<10x512xf32>
    %227 = arith.select %224, %222, %226 : vector<10x512xi1>, vector<10x512xf32>
    %cst_189 = arith.constant dense<0.000000e+00> : vector<9x512xf32>
    %228 = tpu.matmul %174, %227, %cst_189 {dimension_numbers = #tpu.dot_dimension_numbers<[1], [0], [0], [1], [0, 0, 1, 1], [], []>} : vector<9x10xf32>, vector<10x512xf32>, vector<9x512xf32> -> vector<9x512xf32>
    %229 = arith.negf %228 : vector<9x512xf32>
    %230 = math.exp %229 : vector<9x512xf32>
    %cst_190 = arith.constant 1.000000e+00 : f32
    %231 = vector.broadcast %cst_190 : f32 to vector<9x512xf32>
    %232 = arith.addf %231, %230 : vector<9x512xf32>
    %233 = arith.divf %231, %232 : vector<9x512xf32>
    %c0_191 = arith.constant 0 : index
    %c128_192 = arith.constant 128 : index
    %234 = vector.load %arg6[%c0_191, %c128_192] : memref<8x768xf32, #tpu.memory_space<vmem>>, vector<4x512xf32>
    %235 = vector.extract_strided_slice %234 {offsets = [0, 0], sizes = [4, 256], strides = [1, 1]} : vector<4x512xf32> to vector<4x256xf32>
    %cst_193 = arith.constant dense<0.000000e+00> : vector<4xf32>
    %236 = vector.multi_reduction <add>, %235, %cst_193 [1] : vector<4x256xf32> to vector<4xf32>
    %237 = vector.shape_cast %236 : vector<4xf32> to vector<4x1xf32>
    %cst_194 = arith.constant 2.560000e+02 : f32
    %238 = vector.broadcast %cst_194 : f32 to vector<4x1xf32>
    %239 = arith.divf %237, %238 : vector<4x1xf32>
    %240 = vector.extract_strided_slice %234 {offsets = [0, 256], sizes = [4, 256], strides = [1, 1]} : vector<4x512xf32> to vector<4x256xf32>
    %cst_195 = arith.constant dense<0.000000e+00> : vector<4xf32>
    %241 = vector.multi_reduction <add>, %240, %cst_195 [1] : vector<4x256xf32> to vector<4xf32>
    %242 = vector.shape_cast %241 : vector<4xf32> to vector<4x1xf32>
    %cst_196 = arith.constant 2.560000e+02 : f32
    %243 = vector.broadcast %cst_196 : f32 to vector<4x1xf32>
    %244 = arith.divf %242, %243 : vector<4x1xf32>
    %245 = tpu.concatenate %239, %244 in 1 : vector<4x1xf32>, vector<4x1xf32> -> vector<4x2xf32>
    %cst_197 = arith.constant dense<0.000000e+00> : vector<4x2xf32>
    %246 = tpu.matmul %175, %245, %cst_197 {dimension_numbers = #tpu.dot_dimension_numbers<[1], [0], [0], [1], [0, 0, 1, 1], [], []>} : vector<4x4xf32>, vector<4x2xf32>, vector<4x2xf32> -> vector<4x2xf32>
    %247 = vector.broadcast %176 : vector<4x1xf32> to vector<4x2xf32>
    %248 = arith.addf %246, %247 : vector<4x2xf32>
    %cst_198 = arith.constant 0.000000e+00 : f32
    %249 = vector.broadcast %cst_198 : f32 to vector<4x2xf32>
    %250 = arith.cmpf oge, %248, %249 : vector<4x2xf32>
    %cst_199 = arith.constant 0.00999999977 : f32
    %251 = vector.broadcast %cst_199 : f32 to vector<4x2xf32>
    %252 = arith.mulf %251, %248 : vector<4x2xf32>
    %253 = arith.select %250, %248, %252 : vector<4x2xi1>, vector<4x2xf32>
    %cst_200 = arith.constant dense<0.000000e+00> : vector<4x2xf32>
    %254 = tpu.matmul %177, %253, %cst_200 {dimension_numbers = #tpu.dot_dimension_numbers<[1], [0], [0], [1], [0, 0, 1, 1], [], []>} : vector<4x4xf32>, vector<4x2xf32>, vector<4x2xf32> -> vector<4x2xf32>
    %255 = vector.broadcast %178 : vector<4x1xf32> to vector<4x2xf32>
    %256 = arith.addf %254, %255 : vector<4x2xf32>
    %c0_201 = arith.constant 0 : index
    %c0_202 = arith.constant 0 : index
    %257 = vector.load %arg7[%c0_201, %c0_202] : memref<72x512xf32, #tpu.memory_space<vmem>>, vector<8x512xf32>
    %258 = vector.extract_strided_slice %233 {offsets = [0, 0], sizes = [1, 512], strides = [1, 1]} : vector<9x512xf32> to vector<1x512xf32>
    %259 = vector.broadcast %258 : vector<1x512xf32> to vector<8x512xf32>
    %260 = arith.mulf %257, %259 : vector<8x512xf32>
    %c0_203 = arith.constant 0 : index
    %c0_204 = arith.constant 0 : index
    %261 = vector.load %arg7[%c0_203, %c0_204] : memref<72x512xf32, #tpu.memory_space<vmem>>, vector<8x512xf32>
    tpu.vector_store %arg7[%c0_203, %c0_204], %260 {strides = array<i32>} : memref<72x512xf32, #tpu.memory_space<vmem>>, vector<8x512xf32>,
    %c8_205 = arith.constant 8 : index
    %c0_206 = arith.constant 0 : index
    %262 = vector.load %arg7[%c8_205, %c0_206] : memref<72x512xf32, #tpu.memory_space<vmem>>, vector<8x512xf32>
    %263 = vector.extract_strided_slice %233 {offsets = [1, 0], sizes = [1, 512], strides = [1, 1]} : vector<9x512xf32> to vector<1x512xf32>
    %264 = vector.broadcast %263 : vector<1x512xf32> to vector<8x512xf32>
    %265 = arith.mulf %262, %264 : vector<8x512xf32>
    %c8_207 = arith.constant 8 : index
    %c0_208 = arith.constant 0 : index
    %266 = vector.load %arg7[%c8_207, %c0_208] : memref<72x512xf32, #tpu.memory_space<vmem>>, vector<8x512xf32>
    tpu.vector_store %arg7[%c8_207, %c0_208], %265 {strides = array<i32>} : memref<72x512xf32, #tpu.memory_space<vmem>>, vector<8x512xf32>,
    %c16_209 = arith.constant 16 : index
    %c0_210 = arith.constant 0 : index
    %267 = vector.load %arg7[%c16_209, %c0_210] : memref<72x512xf32, #tpu.memory_space<vmem>>, vector<8x512xf32>
    %268 = vector.extract_strided_slice %233 {offsets = [2, 0], sizes = [1, 512], strides = [1, 1]} : vector<9x512xf32> to vector<1x512xf32>
    %269 = vector.broadcast %268 : vector<1x512xf32> to vector<8x512xf32>
    %270 = arith.mulf %267, %269 : vector<8x512xf32>
    %c16_211 = arith.constant 16 : index
    %c0_212 = arith.constant 0 : index
    %271 = vector.load %arg7[%c16_211, %c0_212] : memref<72x512xf32, #tpu.memory_space<vmem>>, vector<8x512xf32>
    tpu.vector_store %arg7[%c16_211, %c0_212], %270 {strides = array<i32>} : memref<72x512xf32, #tpu.memory_space<vmem>>, vector<8x512xf32>,
    %c24_213 = arith.constant 24 : index
    %c0_214 = arith.constant 0 : index
    %272 = vector.load %arg7[%c24_213, %c0_214] : memref<72x512xf32, #tpu.memory_space<vmem>>, vector<8x512xf32>
    %273 = vector.extract_strided_slice %233 {offsets = [3, 0], sizes = [1, 512], strides = [1, 1]} : vector<9x512xf32> to vector<1x512xf32>
    %274 = vector.broadcast %273 : vector<1x512xf32> to vector<8x512xf32>
    %275 = arith.mulf %272, %274 : vector<8x512xf32>
    %c24_215 = arith.constant 24 : index
    %c0_216 = arith.constant 0 : index
    %276 = vector.load %arg7[%c24_215, %c0_216] : memref<72x512xf32, #tpu.memory_space<vmem>>, vector<8x512xf32>
    tpu.vector_store %arg7[%c24_215, %c0_216], %275 {strides = array<i32>} : memref<72x512xf32, #tpu.memory_space<vmem>>, vector<8x512xf32>,
    %c32_217 = arith.constant 32 : index
    %c0_218 = arith.constant 0 : index
    %277 = vector.load %arg7[%c32_217, %c0_218] : memref<72x512xf32, #tpu.memory_space<vmem>>, vector<8x512xf32>
    %278 = vector.extract_strided_slice %233 {offsets = [4, 0], sizes = [1, 512], strides = [1, 1]} : vector<9x512xf32> to vector<1x512xf32>
    %279 = vector.broadcast %278 : vector<1x512xf32> to vector<8x512xf32>
    %280 = arith.mulf %277, %279 : vector<8x512xf32>
    %c32_219 = arith.constant 32 : index
    %c0_220 = arith.constant 0 : index
    %281 = vector.load %arg7[%c32_219, %c0_220] : memref<72x512xf32, #tpu.memory_space<vmem>>, vector<8x512xf32>
    tpu.vector_store %arg7[%c32_219, %c0_220], %280 {strides = array<i32>} : memref<72x512xf32, #tpu.memory_space<vmem>>, vector<8x512xf32>,
    %c40_221 = arith.constant 40 : index
    %c0_222 = arith.constant 0 : index
    %282 = vector.load %arg7[%c40_221, %c0_222] : memref<72x512xf32, #tpu.memory_space<vmem>>, vector<8x512xf32>
    %283 = vector.extract_strided_slice %233 {offsets = [5, 0], sizes = [1, 512], strides = [1, 1]} : vector<9x512xf32> to vector<1x512xf32>
    %284 = vector.broadcast %283 : vector<1x512xf32> to vector<8x512xf32>
    %285 = arith.mulf %282, %284 : vector<8x512xf32>
    %c40_223 = arith.constant 40 : index
    %c0_224 = arith.constant 0 : index
    %286 = vector.load %arg7[%c40_223, %c0_224] : memref<72x512xf32, #tpu.memory_space<vmem>>, vector<8x512xf32>
    tpu.vector_store %arg7[%c40_223, %c0_224], %285 {strides = array<i32>} : memref<72x512xf32, #tpu.memory_space<vmem>>, vector<8x512xf32>,
    %c48_225 = arith.constant 48 : index
    %c0_226 = arith.constant 0 : index
    %287 = vector.load %arg7[%c48_225, %c0_226] : memref<72x512xf32, #tpu.memory_space<vmem>>, vector<8x512xf32>
    %288 = vector.extract_strided_slice %233 {offsets = [6, 0], sizes = [1, 512], strides = [1, 1]} : vector<9x512xf32> to vector<1x512xf32>
    %289 = vector.broadcast %288 : vector<1x512xf32> to vector<8x512xf32>
    %290 = arith.mulf %287, %289 : vector<8x512xf32>
    %c48_227 = arith.constant 48 : index
    %c0_228 = arith.constant 0 : index
    %291 = vector.load %arg7[%c48_227, %c0_228] : memref<72x512xf32, #tpu.memory_space<vmem>>, vector<8x512xf32>
    tpu.vector_store %arg7[%c48_227, %c0_228], %290 {strides = array<i32>} : memref<72x512xf32, #tpu.memory_space<vmem>>, vector<8x512xf32>,
    %c56_229 = arith.constant 56 : index
    %c0_230 = arith.constant 0 : index
    %292 = vector.load %arg7[%c56_229, %c0_230] : memref<72x512xf32, #tpu.memory_space<vmem>>, vector<8x512xf32>
    %293 = vector.extract_strided_slice %233 {offsets = [7, 0], sizes = [1, 512], strides = [1, 1]} : vector<9x512xf32> to vector<1x512xf32>
    %294 = vector.broadcast %293 : vector<1x512xf32> to vector<8x512xf32>
    %295 = arith.mulf %292, %294 : vector<8x512xf32>
    %c56_231 = arith.constant 56 : index
    %c0_232 = arith.constant 0 : index
    %296 = vector.load %arg7[%c56_231, %c0_232] : memref<72x512xf32, #tpu.memory_space<vmem>>, vector<8x512xf32>
    tpu.vector_store %arg7[%c56_231, %c0_232], %295 {strides = array<i32>} : memref<72x512xf32, #tpu.memory_space<vmem>>, vector<8x512xf32>,
    %c64_233 = arith.constant 64 : index
    %c0_234 = arith.constant 0 : index
    %297 = vector.load %arg7[%c64_233, %c0_234] : memref<72x512xf32, #tpu.memory_space<vmem>>, vector<8x512xf32>
    %298 = vector.extract_strided_slice %233 {offsets = [8, 0], sizes = [1, 512], strides = [1, 1]} : vector<9x512xf32> to vector<1x512xf32>
    %299 = vector.broadcast %298 : vector<1x512xf32> to vector<8x512xf32>
    %300 = arith.mulf %297, %299 : vector<8x512xf32>
    %c64_235 = arith.constant 64 : index
    %c0_236 = arith.constant 0 : index
    %301 = vector.load %arg7[%c64_235, %c0_236] : memref<72x512xf32, #tpu.memory_space<vmem>>, vector<8x512xf32>
    tpu.vector_store %arg7[%c64_235, %c0_236], %300 {strides = array<i32>} : memref<72x512xf32, #tpu.memory_space<vmem>>, vector<8x512xf32>,
    %c0_237 = arith.constant 0 : index
    %c0_238 = arith.constant 0 : index
    %302 = vector.load %arg7[%c0_237, %c0_238] : memref<72x512xf32, #tpu.memory_space<vmem>>, vector<72x512xf32>
    %cst_239 = arith.constant dense<0.000000e+00> : vector<4x512xf32>
    %303 = tpu.matmul %172, %302, %cst_239 {dimension_numbers = #tpu.dot_dimension_numbers<[1], [0], [0], [1], [0, 0, 1, 1], [], []>} : vector<4x72xf32>, vector<72x512xf32>, vector<4x512xf32> -> vector<4x512xf32>
    %c0_240 = arith.constant 0 : index
    %c0_241 = arith.constant 0 : index
    %c0_242 = arith.constant 0 : index
    %304 = vector.load %arg1[%c0_240, %c0_241, %c0_242] : memref<2x4x256xf32, #tpu.memory_space<vmem>>, vector<1x4x256xf32>
    %305 = vector.shape_cast %304 : vector<1x4x256xf32> to vector<4x256xf32>
    %306 = vector.extract_strided_slice %303 {offsets = [0, 0], sizes = [4, 256], strides = [1, 1]} : vector<4x512xf32> to vector<4x256xf32>
    %307 = arith.addf %305, %306 : vector<4x256xf32>
    %308 = vector.extract_strided_slice %256 {offsets = [0, 0], sizes = [4, 1], strides = [1, 1]} : vector<4x2xf32> to vector<4x1xf32>
    %309 = vector.broadcast %308 : vector<4x1xf32> to vector<4x256xf32>
    %310 = arith.addf %307, %309 : vector<4x256xf32>
    %c0_243 = arith.constant 0 : index
    %c0_244 = arith.constant 0 : index
    %c0_245 = arith.constant 0 : index
    %311 = vector.load %arg5[%c0_243, %c0_244, %c0_245] : memref<2x4x256xf32, #tpu.memory_space<vmem>>, vector<1x4x256xf32>
    %312 = vector.shape_cast %311 : vector<1x4x256xf32> to vector<4x256xf32>
    %313 = vector.shape_cast %310 : vector<4x256xf32> to vector<1x4x256xf32>
    tpu.vector_store %arg5[%c0_243, %c0_244, %c0_245], %313 {strides = array<i32>} : memref<2x4x256xf32, #tpu.memory_space<vmem>>, vector<1x4x256xf32>,
    %c1_246 = arith.constant 1 : index
    %c0_247 = arith.constant 0 : index
    %c0_248 = arith.constant 0 : index
    %314 = vector.load %arg1[%c1_246, %c0_247, %c0_248] : memref<2x4x256xf32, #tpu.memory_space<vmem>>, vector<1x4x256xf32>
    %315 = vector.shape_cast %314 : vector<1x4x256xf32> to vector<4x256xf32>
    %316 = vector.extract_strided_slice %303 {offsets = [0, 256], sizes = [4, 256], strides = [1, 1]} : vector<4x512xf32> to vector<4x256xf32>
    %317 = arith.addf %315, %316 : vector<4x256xf32>
    %318 = vector.extract_strided_slice %256 {offsets = [0, 1], sizes = [4, 1], strides = [1, 1]} : vector<4x2xf32> to vector<4x1xf32>
    %319 = vector.broadcast %318 : vector<4x1xf32> to vector<4x256xf32>
    %320 = arith.addf %317, %319 : vector<4x256xf32>
    %c1_249 = arith.constant 1 : index
    %c0_250 = arith.constant 0 : index
    %c0_251 = arith.constant 0 : index
    %321 = vector.load %arg5[%c1_249, %c0_250, %c0_251] : memref<2x4x256xf32, #tpu.memory_space<vmem>>, vector<1x4x256xf32>
    %322 = vector.shape_cast %321 : vector<1x4x256xf32> to vector<4x256xf32>
    %323 = vector.shape_cast %320 : vector<4x256xf32> to vector<1x4x256xf32>
    tpu.vector_store %arg5[%c1_249, %c0_250, %c0_251], %323 {strides = array<i32>} : memref<2x4x256xf32, #tpu.memory_space<vmem>>, vector<1x4x256xf32>,
    return
  }
  func.func @transform_0(%arg0: i32) -> (i32, i32, i32) {
    %c0_i32 = arith.constant 0 : i32
    %c0_i32_0 = arith.constant 0 : i32
    %c0_i32_1 = arith.constant 0 : i32
    return %arg0, %c0_i32, %c0_i32_0 : i32, i32, i32
  }
  func.func @transform_1(%arg0: i32) -> (i32, i32) {
    %c0_i32 = arith.constant 0 : i32
    %c0_i32_0 = arith.constant 0 : i32
    %c0_i32_1 = arith.constant 0 : i32
    return %c0_i32, %c0_i32_0 : i32, i32
  }
  func.func @transform_2(%arg0: i32) -> (i32, i32, i32) {
    %c0_i32 = arith.constant 0 : i32
    %c0_i32_0 = arith.constant 0 : i32
    %c0_i32_1 = arith.constant 0 : i32
    %c0_i32_2 = arith.constant 0 : i32
    return %c0_i32, %c0_i32_0, %c0_i32_1 : i32, i32, i32
  }
  func.func @transform_3(%arg0: i32) -> (i32, i32, i32) {
    %c0_i32 = arith.constant 0 : i32
    %c0_i32_0 = arith.constant 0 : i32
    %c0_i32_1 = arith.constant 0 : i32
    %c0_i32_2 = arith.constant 0 : i32
    return %c0_i32, %c0_i32_0, %c0_i32_1 : i32, i32, i32
  }
  func.func @transform_4(%arg0: i32) -> (i32, i32, i32) {
    %c0_i32 = arith.constant 0 : i32
    %c0_i32_0 = arith.constant 0 : i32
    %c0_i32_1 = arith.constant 0 : i32
    return %arg0, %c0_i32, %c0_i32_0 : i32, i32, i32
  }
}

</mosaic_0001>

<llo_original>
// kernel: tpu_custom_call.1
$region0: #{tpu_custom_call.1}
  #allocation0 [shape = 'u32[]', space=smem, size = 0x4, offset = 0x4, fixed_abs, tag = 'smem constant byte address 0x4 - core index']
  #allocation1 [shape = 'u32[144,128]{1,0:T(1,128)}', space=vmem, size = 0x12000, scoped, tag = 'internal scratch']
  #allocation2 [shape = 'f32[8,768]{1,0:T(8,128)}', space=vmem, size = 0x6000, scoped, tag = 'scratch operand']
  #allocation3 [shape = 'f32[72,512]{1,0:T(8,128)}', space=vmem, size = 0x24000, scoped, tag = 'scratch operand']
  %s0 = inlined_call_operand.hbm [shape: f32[2,4,256], index: 0, kind: input, shape index: {}]
  %s1 = inlined_call_operand.hbm [shape: f32[72,512], index: 1, kind: input, shape index: {}]
  %s2 = inlined_call_operand.hbm [shape: f32[2,16,72], index: 2, kind: input, shape index: {}]
  %s3 = inlined_call_operand.hbm [shape: f32[2,16,30], index: 3, kind: input, shape index: {}]
  %s4 = inlined_call_operand.hbm [shape: f32[2,4,256], index: 4, kind: output, shape index: {}]
  %s5 = sld [smem:[#allocation0]]
  $region42: #{tpu_custom_call.1} parent=0
    _
  %s7 = ssub.s32 1, %s5
  %s8 = scalar_select 0, %s7, %s5
  $region1: #{tpu_custom_call.1} parent=0
    #allocation4 [shape = 'u8[8192]{0}', space=vmem, size = 0x2000, scoped, tag = 'input window, operand 0, single buffered']
    #allocation5 [shape = 's32[1]{0}', space=sflag, size = 0x4, scoped, tag = 'scoped memory for tpu_custom_call.1']
    #allocation6 [shape = 's32[1]{0}', space=sflag, size = 0x4, scoped, tag = 'scoped memory for tpu_custom_call.1']
    #allocation7 [shape = 'u8[147456]{0}', space=vmem, size = 0x24000, scoped, tag = 'input window, operand 1, single buffered']
    #allocation8 [shape = 's32[1]{0}', space=sflag, size = 0x4, scoped, tag = 'scoped memory for tpu_custom_call.1']
    #allocation9 [shape = 'u8[16384]{0}', space=vmem, size = 0x4000, scoped, tag = 'input window, operand 2, single buffered']
    #allocation10 [shape = 'u8[16384]{0}', space=vmem, size = 0x4000, scoped, tag = 'input window, operand 3, single buffered']
    #allocation11 [shape = 's32[1]{0}', space=sflag, size = 0x4, scoped, tag = 'scoped memory for tpu_custom_call.1']
    #allocation12 [shape = 'u8[8192]{0}', space=vmem, size = 0x2000, scoped, tag = 'output window, operand 0, single buffered']
    %9 = vsyncpa [#allocation5], 0
    %10 = vsyncpa [#allocation8], 0
    %11 = vsyncpa [#allocation11], 0
    %12 = vsyncpa [#allocation6], 0
    // Predicated region
    $region2: #{tpu_custom_call.1} parent=1 // pred_check
      _
    $region3: #{tpu_custom_call.1} parent=1 // pred_check_branch
      %14 = sbr.rel (0) target = $region5
    $region4: #{tpu_custom_call.1} parent=1 // pred_region
      %s16 = ssub.s32 256, 256
      %17 = vsyncadd [#allocation5], %s16
      %s18 = sshll.u32 [#allocation4], 4
      %s19 = int_to_ptr.vmem [resolvable:$true] %s18
      %24 = dma.hbm_to_vmem [thread:$0]  %s0, 256, %s19, [#allocation5], 128, 128, 8
    $region5: #{tpu_custom_call.1} parent=1 // pred_fallthru
      _
    // Predicated region
    $region6: #{tpu_custom_call.1} parent=1 // pred_check
      _
    $region7: #{tpu_custom_call.1} parent=1 // pred_check_branch
      %26 = sbr.rel (0) target = $region9
    $region8: #{tpu_custom_call.1} parent=1 // pred_region
      %s28 = ssub.s32 4608, 4608
      %29 = vsyncadd [#allocation8], %s28
      %s30 = sshll.u32 [#allocation7], 4
      %s31 = int_to_ptr.vmem [resolvable:$true] %s30
      %36 = dma.hbm_to_vmem [thread:$0]  %s1, 4608, %s31, [#allocation8], 512, 512, 32
    $region9: #{tpu_custom_call.1} parent=1 // pred_fallthru
      _
    // Predicated region
    $region10: #{tpu_custom_call.1} parent=1 // pred_check
      _
    $region11: #{tpu_custom_call.1} parent=1 // pred_check_branch
      %38 = sbr.rel (0) target = $region13
    $region12: #{tpu_custom_call.1} parent=1 // pred_region
      %s40 = ssub.s32 512, 512
      %41 = vsyncadd [#allocation8], %s40
      %s42 = sshll.u32 [#allocation9], 4
      %s43 = int_to_ptr.vmem [resolvable:$true] %s42
      %48 = dma.hbm_to_vmem [thread:$0]  %s2, 512, %s43, [#allocation8], 128, 128, 8
    $region13: #{tpu_custom_call.1} parent=1 // pred_fallthru
      _
    // Predicated region
    $region14: #{tpu_custom_call.1} parent=1 // pred_check
      _
    $region15: #{tpu_custom_call.1} parent=1 // pred_check_branch
      %50 = sbr.rel (0) target = $region17
    $region16: #{tpu_custom_call.1} parent=1 // pred_region
      %s52 = ssub.s32 512, 512
      %53 = vsyncadd [#allocation11], %s52
      %s54 = sshll.u32 [#allocation10], 4
      %s55 = int_to_ptr.vmem [resolvable:$true] %s54
      %60 = dma.hbm_to_vmem [thread:$0]  %s3, 512, %s55, [#allocation11], 128, 128, 8
    $region17: #{tpu_custom_call.1} parent=1 // pred_fallthru
      _
    // Predicated region
    $region18: #{tpu_custom_call.1} parent=1 // pred_check
      _
    $region19: #{tpu_custom_call.1} parent=1 // pred_check_branch
      %62 = sbr.rel (0) target = $region21
    $region20: #{tpu_custom_call.1} parent=1 // pred_region
      %63 = dma.done [#allocation5], 256
    $region21: #{tpu_custom_call.1} parent=1 // pred_fallthru
      _
    // Predicated region
    $region22: #{tpu_custom_call.1} parent=1 // pred_check
      _
    $region23: #{tpu_custom_call.1} parent=1 // pred_check_branch
      %65 = sbr.rel (0) target = $region25
    $region24: #{tpu_custom_call.1} parent=1 // pred_region
      %66 = dma.done [#allocation8], 4608
    $region25: #{tpu_custom_call.1} parent=1 // pred_fallthru
      _
    // Predicated region
    $region26: #{tpu_custom_call.1} parent=1 // pred_check
      _
    $region27: #{tpu_custom_call.1} parent=1 // pred_check_branch
      %68 = sbr.rel (0) target = $region29
    $region28: #{tpu_custom_call.1} parent=1 // pred_region
      %69 = dma.done [#allocation8], 512
    $region29: #{tpu_custom_call.1} parent=1 // pred_fallthru
      _
    // Predicated region
    $region30: #{tpu_custom_call.1} parent=1 // pred_check
      _
    $region31: #{tpu_custom_call.1} parent=1 // pred_check_branch
      %71 = sbr.rel (0) target = $region33
    $region32: #{tpu_custom_call.1} parent=1 // pred_region
      %72 = dma.done [#allocation11], 512
    $region33: #{tpu_custom_call.1} parent=1 // pred_fallthru
      _
    %73 = vst [vmem:[#allocation2] sm:$0xff] 0.0
    %74 = vst [vmem:[#allocation2 + $0x8] sm:$0xff] 0.0
    %75 = vst [vmem:[#allocation2 + $0x10] sm:$0xff] 0.0
    %76 = vst [vmem:[#allocation2 + $0x18] sm:$0xff] 0.0
    %77 = vst [vmem:[#allocation2 + $0x20] sm:$0xff] 0.0
    %78 = vst [vmem:[#allocation2 + $0x28] sm:$0xff] 0.0
    %v79 = vlaneseq
    %vm80 = vcmp.ge.s32.totalorder %v79, 0
    %vm81 = vcmp.lt.s32.totalorder %v79, 512
    %vm82 = vmand %vm80, %vm81
    %s83 = scalar_lea.vmem [#allocation2], 12
    %84 = vst.msk [vmem:[%s83] ss:$8 sm:$0xf] %vm82, 1.0
    %85 = vst.msk [vmem:[%s83] ss:$8 sm:$0x0] %vm82, 1.0
    %v86 = vld [vmem:[#allocation4] sm:$0xff]
    %v88 = vcombine.high %v86, %v86
    %90 = vst [vmem:[#allocation2 + $0x8] sm:$0xf] %v86
    %91 = vst [vmem:[#allocation2 + $0x10] sm:$0xf] %v88
    %s92 = scalar_lea.vmem [#allocation4], 8
    %v93 = vld [vmem:[%s92] sm:$0xff]
    %v95 = vcombine.high %v93, %v93
    %97 = vst [vmem:[#allocation2 + $0x18] sm:$0xf] %v93
    %98 = vst [vmem:[#allocation2 + $0x20] sm:$0xf] %v95
    %v99 = vld [vmem:[#allocation9] sm:$0xff]
    %v100 = vld [vmem:[#allocation9 + $0x8] sm:$0xff]
    %v101 = vld [vmem:[#allocation10] sm:$0xff]
    %v102 = vld [vmem:[#allocation10 + $0x8] sm:$0xff]
    %v103 = vld [vmem:[#allocation2] sm:$0xff]
    %v104 = vld [vmem:[#allocation2 + $0x8] sm:$0xff]
    %v105 = vld [vmem:[#allocation2 + $0x10] sm:$0xff]
    %v106 = vld [vmem:[#allocation2 + $0x18] sm:$0xff]
    %v107 = vld [vmem:[#allocation2 + $0x20] sm:$0xff]
    %v108 = vld [vmem:[#allocation7] sm:$0xff]
    %v109 = vld [vmem:[#allocation7 + $0x8] sm:$0xff]
    %v110 = vld [vmem:[#allocation7 + $0x10] sm:$0xff]
    %v111 = vld [vmem:[#allocation7 + $0x18] sm:$0xff]
    %116 = vrot.lane.b32.xlu0 %v108, 111
    %v117 = vpop.permute.xlu0 %116
    %118 = vrot.lane.b32.xlu0 %v109, 111
    %v119 = vpop.permute.xlu0 %118
    %120 = vrot.lane.b32.xlu0 %v110, 111
    %v121 = vpop.permute.xlu0 %120
    %122 = vrot.lane.b32.xlu0 %v111, 111
    %v123 = vpop.permute.xlu0 %122
    %vm124 = vcmask 908288
    %v125 = vsel %vm124, %v117, %v119
    %v126 = vsel %vm124, %v119, %v121
    %v127 = vsel %vm124, %v121, %v123
    %v133 = vmul.f32 %v103, %v117
    %v134 = vmul.f32 %v104, %v125
    %v135 = vmul.f32 %v105, %v126
    %v136 = vmul.f32 %v106, %v127
    %v137 = vmul.f32 %v107, %v123
    %143 = vrot.lane.b32.xlu0 %v133, 17
    %v144 = vpop.permute.xlu0 %143
    %145 = vrot.lane.b32.xlu0 %v134, 17
    %v146 = vpop.permute.xlu0 %145
    %147 = vrot.lane.b32.xlu0 %v135, 17
    %v148 = vpop.permute.xlu0 %147
    %149 = vrot.lane.b32.xlu0 %v136, 17
    %v150 = vpop.permute.xlu0 %149
    %151 = vrot.lane.b32.xlu0 %v137, 17
    %v152 = vpop.permute.xlu0 %151
    %vm153 = vcmask 138240
    %v154 = vsel %vm153, %v144, %v146
    %v155 = vsel %vm153, %v146, %v148
    %v156 = vsel %vm153, %v148, %v150
    %v157 = vsel %vm153, %v150, %v152
    %162 = vst [vmem:[#allocation3] sm:$0xff] %v154
    %163 = vst [vmem:[#allocation3 + $0x8] sm:$0xff] %v155
    %164 = vst [vmem:[#allocation3 + $0x10] sm:$0xff] %v156
    %165 = vst [vmem:[#allocation3 + $0x18] sm:$0xff] %v157
    %v166 = vld [vmem:[#allocation2] sm:$0xff]
    %v167 = vld [vmem:[#allocation2 + $0x8] sm:$0xff]
    %v168 = vld [vmem:[#allocation2 + $0x10] sm:$0xff]
    %v169 = vld [vmem:[#allocation2 + $0x18] sm:$0xff]
    %v170 = vld [vmem:[#allocation2 + $0x20] sm:$0xff]
    %v171 = vld [vmem:[#allocation7 + $0x20] sm:$0xff]
    %v172 = vld [vmem:[#allocation7 + $0x28] sm:$0xff]
    %v173 = vld [vmem:[#allocation7 + $0x30] sm:$0xff]
    %v174 = vld [vmem:[#allocation7 + $0x38] sm:$0xff]
    %179 = vrot.lane.b32.xlu0 %v171, 112
    %v180 = vpop.permute.xlu0 %179
    %181 = vrot.lane.b32.xlu0 %v172, 112
    %v182 = vpop.permute.xlu0 %181
    %183 = vrot.lane.b32.xlu0 %v173, 112
    %v184 = vpop.permute.xlu0 %183
    %185 = vrot.lane.b32.xlu0 %v174, 112
    %v186 = vpop.permute.xlu0 %185
    %vm187 = vcmask 916480
    %v188 = vsel %vm187, %v180, %v182
    %v189 = vsel %vm187, %v182, %v184
    %v190 = vsel %vm187, %v184, %v186
    %v196 = vmul.f32 %v166, %v180
    %v197 = vmul.f32 %v167, %v188
    %v198 = vmul.f32 %v168, %v189
    %v199 = vmul.f32 %v169, %v190
    %v200 = vmul.f32 %v170, %v186
    %206 = vrot.lane.b32.xlu0 %v196, 16
    %v207 = vpop.permute.xlu0 %206
    %208 = vrot.lane.b32.xlu0 %v197, 16
    %v209 = vpop.permute.xlu0 %208
    %210 = vrot.lane.b32.xlu0 %v198, 16
    %v211 = vpop.permute.xlu0 %210
    %212 = vrot.lane.b32.xlu0 %v199, 16
    %v213 = vpop.permute.xlu0 %212
    %214 = vrot.lane.b32.xlu0 %v200, 16
    %v215 = vpop.permute.xlu0 %214
    %vm216 = vcmask 130048
    %v217 = vsel %vm216, %v207, %v209
    %v218 = vsel %vm216, %v209, %v211
    %v219 = vsel %vm216, %v211, %v213
    %v220 = vsel %vm216, %v213, %v215
    %225 = vst [vmem:[#allocation3 + $0x20] sm:$0xff] %v217
    %226 = vst [vmem:[#allocation3 + $0x28] sm:$0xff] %v218
    %227 = vst [vmem:[#allocation3 + $0x30] sm:$0xff] %v219
    %228 = vst [vmem:[#allocation3 + $0x38] sm:$0xff] %v220
    %v229 = vld [vmem:[#allocation2] sm:$0xff]
    %v230 = vld [vmem:[#allocation2 + $0x8] sm:$0xff]
    %v231 = vld [vmem:[#allocation2 + $0x10] sm:$0xff]
    %v232 = vld [vmem:[#allocation2 + $0x18] sm:$0xff]
    %v233 = vld [vmem:[#allocation2 + $0x20] sm:$0xff]
    %v234 = vld [vmem:[#allocation7 + $0x40] sm:$0xff]
    %v235 = vld [vmem:[#allocation7 + $0x48] sm:$0xff]
    %v236 = vld [vmem:[#allocation7 + $0x50] sm:$0xff]
    %v237 = vld [vmem:[#allocation7 + $0x58] sm:$0xff]
    %242 = vrot.lane.b32.xlu0 %v234, 113
    %v243 = vpop.permute.xlu0 %242
    %244 = vrot.lane.b32.xlu0 %v235, 113
    %v245 = vpop.permute.xlu0 %244
    %246 = vrot.lane.b32.xlu0 %v236, 113
    %v247 = vpop.permute.xlu0 %246
    %248 = vrot.lane.b32.xlu0 %v237, 113
    %v249 = vpop.permute.xlu0 %248
    %vm250 = vcmask 924672
    %v251 = vsel %vm250, %v243, %v245
    %v252 = vsel %vm250, %v245, %v247
    %v253 = vsel %vm250, %v247, %v249
    %v259 = vmul.f32 %v229, %v243
    %v260 = vmul.f32 %v230, %v251
    %v261 = vmul.f32 %v231, %v252
    %v262 = vmul.f32 %v232, %v253
    %v263 = vmul.f32 %v233, %v249
    %269 = vrot.lane.b32.xlu0 %v259, 15
    %v270 = vpop.permute.xlu0 %269
    %271 = vrot.lane.b32.xlu0 %v260, 15
    %v272 = vpop.permute.xlu0 %271
    %273 = vrot.lane.b32.xlu0 %v261, 15
    %v274 = vpop.permute.xlu0 %273
    %275 = vrot.lane.b32.xlu0 %v262, 15
    %v276 = vpop.permute.xlu0 %275
    %277 = vrot.lane.b32.xlu0 %v263, 15
    %v278 = vpop.permute.xlu0 %277
    %vm279 = vcmask 121856
    %v280 = vsel %vm279, %v270, %v272
    %v281 = vsel %vm279, %v272, %v274
    %v282 = vsel %vm279, %v274, %v276
    %v283 = vsel %vm279, %v276, %v278
    %288 = vst [vmem:[#allocation3 + $0x40] sm:$0xff] %v280
    %289 = vst [vmem:[#allocation3 + $0x48] sm:$0xff] %v281
    %290 = vst [vmem:[#allocation3 + $0x50] sm:$0xff] %v282
    %291 = vst [vmem:[#allocation3 + $0x58] sm:$0xff] %v283
    %v292 = vld [vmem:[#allocation2] sm:$0xff]
    %v293 = vld [vmem:[#allocation2 + $0x8] sm:$0xff]
    %v294 = vld [vmem:[#allocation2 + $0x10] sm:$0xff]
    %v295 = vld [vmem:[#allocation2 + $0x18] sm:$0xff]
    %v296 = vld [vmem:[#allocation2 + $0x20] sm:$0xff]
    %v297 = vld [vmem:[#allocation7 + $0x60] sm:$0xff]
    %v298 = vld [vmem:[#allocation7 + $0x68] sm:$0xff]
    %v299 = vld [vmem:[#allocation7 + $0x70] sm:$0xff]
    %v300 = vld [vmem:[#allocation7 + $0x78] sm:$0xff]
    %305 = vrot.lane.b32.xlu0 %v297, 127
    %v306 = vpop.permute.xlu0 %305
    %307 = vrot.lane.b32.xlu0 %v298, 127
    %v308 = vpop.permute.xlu0 %307
    %309 = vrot.lane.b32.xlu0 %v299, 127
    %v310 = vpop.permute.xlu0 %309
    %311 = vrot.lane.b32.xlu0 %v300, 127
    %v312 = vpop.permute.xlu0 %311
    %vm313 = vcmask 1039360
    %v314 = vsel %vm313, %v306, %v308
    %v315 = vsel %vm313, %v308, %v310
    %v316 = vsel %vm313, %v310, %v312
    %v322 = vmul.f32 %v292, %v306
    %v323 = vmul.f32 %v293, %v314
    %v324 = vmul.f32 %v294, %v315
    %v325 = vmul.f32 %v295, %v316
    %v326 = vmul.f32 %v296, %v312
    %332 = vrot.lane.b32.xlu0 %v322, 1
    %v333 = vpop.permute.xlu0 %332
    %334 = vrot.lane.b32.xlu0 %v323, 1
    %v335 = vpop.permute.xlu0 %334
    %336 = vrot.lane.b32.xlu0 %v324, 1
    %v337 = vpop.permute.xlu0 %336
    %338 = vrot.lane.b32.xlu0 %v325, 1
    %v339 = vpop.permute.xlu0 %338
    %340 = vrot.lane.b32.xlu0 %v326, 1
    %v341 = vpop.permute.xlu0 %340
    %vm342 = vcmask 7168
    %v343 = vsel %vm342, %v333, %v335
    %v344 = vsel %vm342, %v335, %v337
    %v345 = vsel %vm342, %v337, %v339
    %v346 = vsel %vm342, %v339, %v341
    %351 = vst [vmem:[#allocation3 + $0x60] sm:$0xff] %v343
    %352 = vst [vmem:[#allocation3 + $0x68] sm:$0xff] %v344
    %353 = vst [vmem:[#allocation3 + $0x70] sm:$0xff] %v345
    %354 = vst [vmem:[#allocation3 + $0x78] sm:$0xff] %v346
    %v355 = vld [vmem:[#allocation2 + $0x8] sm:$0xff]
    %v356 = vld [vmem:[#allocation2 + $0x10] sm:$0xff]
    %v357 = vld [vmem:[#allocation2 + $0x18] sm:$0xff]
    %v358 = vld [vmem:[#allocation2 + $0x20] sm:$0xff]
    %v359 = vld [vmem:[#allocation7 + $0x80] sm:$0xff]
    %v360 = vld [vmem:[#allocation7 + $0x88] sm:$0xff]
    %v361 = vld [vmem:[#allocation7 + $0x90] sm:$0xff]
    %v362 = vld [vmem:[#allocation7 + $0x98] sm:$0xff]
    %v363 = vmul.f32 %v355, %v359
    %v364 = vmul.f32 %v356, %v360
    %v365 = vmul.f32 %v357, %v361
    %v366 = vmul.f32 %v358, %v362
    %367 = vst [vmem:[#allocation3 + $0x80] sm:$0xff] %v363
    %368 = vst [vmem:[#allocation3 + $0x88] sm:$0xff] %v364
    %369 = vst [vmem:[#allocation3 + $0x90] sm:$0xff] %v365
    %370 = vst [vmem:[#allocation3 + $0x98] sm:$0xff] %v366
    %v371 = vld [vmem:[#allocation2 + $0x8] sm:$0xff]
    %v372 = vld [vmem:[#allocation2 + $0x10] sm:$0xff]
    %v373 = vld [vmem:[#allocation2 + $0x18] sm:$0xff]
    %v374 = vld [vmem:[#allocation2 + $0x20] sm:$0xff]
    %v375 = vld [vmem:[#allocation2 + $0x28] sm:$0xff]
    %v376 = vld [vmem:[#allocation7 + $0xa0] sm:$0xff]
    %v377 = vld [vmem:[#allocation7 + $0xa8] sm:$0xff]
    %v378 = vld [vmem:[#allocation7 + $0xb0] sm:$0xff]
    %v379 = vld [vmem:[#allocation7 + $0xb8] sm:$0xff]
    %384 = vrot.lane.b32.xlu0 %v376, 1
    %v385 = vpop.permute.xlu0 %384
    %386 = vrot.lane.b32.xlu0 %v377, 1
    %v387 = vpop.permute.xlu0 %386
    %388 = vrot.lane.b32.xlu0 %v378, 1
    %v389 = vpop.permute.xlu0 %388
    %390 = vrot.lane.b32.xlu0 %v379, 1
    %v391 = vpop.permute.xlu0 %390
    %v392 = vsel %vm342, %v385, %v387
    %v393 = vsel %vm342, %v387, %v389
    %v394 = vsel %vm342, %v389, %v391
    %v400 = vmul.f32 %v371, %v385
    %v401 = vmul.f32 %v372, %v392
    %v402 = vmul.f32 %v373, %v393
    %v403 = vmul.f32 %v374, %v394
    %v404 = vmul.f32 %v375, %v391
    %410 = vrot.lane.b32.xlu0 %v400, 127
    %v411 = vpop.permute.xlu0 %410
    %412 = vrot.lane.b32.xlu0 %v401, 127
    %v413 = vpop.permute.xlu0 %412
    %414 = vrot.lane.b32.xlu0 %v402, 127
    %v415 = vpop.permute.xlu0 %414
    %416 = vrot.lane.b32.xlu0 %v403, 127
    %v417 = vpop.permute.xlu0 %416
    %418 = vrot.lane.b32.xlu0 %v404, 127
    %v419 = vpop.permute.xlu0 %418
    %v420 = vsel %vm313, %v411, %v413
    %v421 = vsel %vm313, %v413, %v415
    %v422 = vsel %vm313, %v415, %v417
    %v423 = vsel %vm313, %v417, %v419
    %428 = vst [vmem:[#allocation3 + $0xa0] sm:$0xff] %v420
    %429 = vst [vmem:[#allocation3 + $0xa8] sm:$0xff] %v421
    %430 = vst [vmem:[#allocation3 + $0xb0] sm:$0xff] %v422
    %431 = vst [vmem:[#allocation3 + $0xb8] sm:$0xff] %v423
    %v432 = vld [vmem:[#allocation2 + $0x8] sm:$0xff]
    %v433 = vld [vmem:[#allocation2 + $0x10] sm:$0xff]
    %v434 = vld [vmem:[#allocation2 + $0x18] sm:$0xff]
    %v435 = vld [vmem:[#allocation2 + $0x20] sm:$0xff]
    %v436 = vld [vmem:[#allocation2 + $0x28] sm:$0xff]
    %v437 = vld [vmem:[#allocation7 + $0xc0] sm:$0xff]
    %v438 = vld [vmem:[#allocation7 + $0xc8] sm:$0xff]
    %v439 = vld [vmem:[#allocation7 + $0xd0] sm:$0xff]
    %v440 = vld [vmem:[#allocation7 + $0xd8] sm:$0xff]
    %445 = vrot.lane.b32.xlu0 %v437, 15
    %v446 = vpop.permute.xlu0 %445
    %447 = vrot.lane.b32.xlu0 %v438, 15
    %v448 = vpop.permute.xlu0 %447
    %449 = vrot.lane.b32.xlu0 %v439, 15
    %v450 = vpop.permute.xlu0 %449
    %451 = vrot.lane.b32.xlu0 %v440, 15
    %v452 = vpop.permute.xlu0 %451
    %v453 = vsel %vm279, %v446, %v448
    %v454 = vsel %vm279, %v448, %v450
    %v455 = vsel %vm279, %v450, %v452
    %v461 = vmul.f32 %v432, %v446
    %v462 = vmul.f32 %v433, %v453
    %v463 = vmul.f32 %v434, %v454
    %v464 = vmul.f32 %v435, %v455
    %v465 = vmul.f32 %v436, %v452
    %471 = vrot.lane.b32.xlu0 %v461, 113
    %v472 = vpop.permute.xlu0 %471
    %473 = vrot.lane.b32.xlu0 %v462, 113
    %v474 = vpop.permute.xlu0 %473
    %475 = vrot.lane.b32.xlu0 %v463, 113
    %v476 = vpop.permute.xlu0 %475
    %477 = vrot.lane.b32.xlu0 %v464, 113
    %v478 = vpop.permute.xlu0 %477
    %479 = vrot.lane.b32.xlu0 %v465, 113
    %v480 = vpop.permute.xlu0 %479
    %v481 = vsel %vm250, %v472, %v474
    %v482 = vsel %vm250, %v474, %v476
    %v483 = vsel %vm250, %v476, %v478
    %v484 = vsel %vm250, %v478, %v480
    %489 = vst [vmem:[#allocation3 + $0xc0] sm:$0xff] %v481
    %490 = vst [vmem:[#allocation3 + $0xc8] sm:$0xff] %v482
    %491 = vst [vmem:[#allocation3 + $0xd0] sm:$0xff] %v483
    %492 = vst [vmem:[#allocation3 + $0xd8] sm:$0xff] %v484
    %v493 = vld [vmem:[#allocation2 + $0x8] sm:$0xff]
    %v494 = vld [vmem:[#allocation2 + $0x10] sm:$0xff]
    %v495 = vld [vmem:[#allocation2 + $0x18] sm:$0xff]
    %v496 = vld [vmem:[#allocation2 + $0x20] sm:$0xff]
    %v497 = vld [vmem:[#allocation2 + $0x28] sm:$0xff]
    %v498 = vld [vmem:[#allocation7 + $0xe0] sm:$0xff]
    %v499 = vld [vmem:[#allocation7 + $0xe8] sm:$0xff]
    %v500 = vld [vmem:[#allocation7 + $0xf0] sm:$0xff]
    %v501 = vld [vmem:[#allocation7 + $0xf8] sm:$0xff]
    %506 = vrot.lane.b32.xlu0 %v498, 16
    %v507 = vpop.permute.xlu0 %506
    %508 = vrot.lane.b32.xlu0 %v499, 16
    %v509 = vpop.permute.xlu0 %508
    %510 = vrot.lane.b32.xlu0 %v500, 16
    %v511 = vpop.permute.xlu0 %510
    %512 = vrot.lane.b32.xlu0 %v501, 16
    %v513 = vpop.permute.xlu0 %512
    %v514 = vsel %vm216, %v507, %v509
    %v515 = vsel %vm216, %v509, %v511
    %v516 = vsel %vm216, %v511, %v513
    %v522 = vmul.f32 %v493, %v507
    %v523 = vmul.f32 %v494, %v514
    %v524 = vmul.f32 %v495, %v515
    %v525 = vmul.f32 %v496, %v516
    %v526 = vmul.f32 %v497, %v513
    %532 = vrot.lane.b32.xlu0 %v522, 112
    %v533 = vpop.permute.xlu0 %532
    %534 = vrot.lane.b32.xlu0 %v523, 112
    %v535 = vpop.permute.xlu0 %534
    %536 = vrot.lane.b32.xlu0 %v524, 112
    %v537 = vpop.permute.xlu0 %536
    %538 = vrot.lane.b32.xlu0 %v525, 112
    %v539 = vpop.permute.xlu0 %538
    %540 = vrot.lane.b32.xlu0 %v526, 112
    %v541 = vpop.permute.xlu0 %540
    %v542 = vsel %vm187, %v533, %v535
    %v543 = vsel %vm187, %v535, %v537
    %v544 = vsel %vm187, %v537, %v539
    %v545 = vsel %vm187, %v539, %v541
    %550 = vst [vmem:[#allocation3 + $0xe0] sm:$0xff] %v542
    %551 = vst [vmem:[#allocation3 + $0xe8] sm:$0xff] %v543
    %552 = vst [vmem:[#allocation3 + $0xf0] sm:$0xff] %v544
    %553 = vst [vmem:[#allocation3 + $0xf8] sm:$0xff] %v545
    %v554 = vld [vmem:[#allocation2 + $0x8] sm:$0xff]
    %v555 = vld [vmem:[#allocation2 + $0x10] sm:$0xff]
    %v556 = vld [vmem:[#allocation2 + $0x18] sm:$0xff]
    %v557 = vld [vmem:[#allocation2 + $0x20] sm:$0xff]
    %v558 = vld [vmem:[#allocation2 + $0x28] sm:$0xff]
    %v559 = vld [vmem:[#allocation7 + $0x100] sm:$0xff]
    %v560 = vld [vmem:[#allocation7 + $0x108] sm:$0xff]
    %v561 = vld [vmem:[#allocation7 + $0x110] sm:$0xff]
    %v562 = vld [vmem:[#allocation7 + $0x118] sm:$0xff]
    %567 = vrot.lane.b32.xlu0 %v559, 17
    %v568 = vpop.permute.xlu0 %567
    %569 = vrot.lane.b32.xlu0 %v560, 17
    %v570 = vpop.permute.xlu0 %569
    %571 = vrot.lane.b32.xlu0 %v561, 17
    %v572 = vpop.permute.xlu0 %571
    %573 = vrot.lane.b32.xlu0 %v562, 17
    %v574 = vpop.permute.xlu0 %573
    %v575 = vsel %vm153, %v568, %v570
    %v576 = vsel %vm153, %v570, %v572
    %v577 = vsel %vm153, %v572, %v574
    %v583 = vmul.f32 %v554, %v568
    %v584 = vmul.f32 %v555, %v575
    %v585 = vmul.f32 %v556, %v576
    %v586 = vmul.f32 %v557, %v577
    %v587 = vmul.f32 %v558, %v574
    %593 = vrot.lane.b32.xlu0 %v583, 111
    %v594 = vpop.permute.xlu0 %593
    %595 = vrot.lane.b32.xlu0 %v584, 111
    %v596 = vpop.permute.xlu0 %595
    %597 = vrot.lane.b32.xlu0 %v585, 111
    %v598 = vpop.permute.xlu0 %597
    %599 = vrot.lane.b32.xlu0 %v586, 111
    %v600 = vpop.permute.xlu0 %599
    %601 = vrot.lane.b32.xlu0 %v587, 111
    %v602 = vpop.permute.xlu0 %601
    %v603 = vsel %vm124, %v594, %v596
    %v604 = vsel %vm124, %v596, %v598
    %v605 = vsel %vm124, %v598, %v600
    %v606 = vsel %vm124, %v600, %v602
    %611 = vst [vmem:[#allocation3 + $0x100] sm:$0xff] %v603
    %612 = vst [vmem:[#allocation3 + $0x108] sm:$0xff] %v604
    %613 = vst [vmem:[#allocation3 + $0x110] sm:$0xff] %v605
    %614 = vst [vmem:[#allocation3 + $0x118] sm:$0xff] %v606
    %v615 = vld [vmem:[#allocation3] sm:$0xff]
    %v616 = vld [vmem:[#allocation3 + $0x8] sm:$0xff]
    %v617 = vld [vmem:[#allocation3 + $0x10] sm:$0xff]
    %v618 = vld [vmem:[#allocation3 + $0x18] sm:$0xff]
    %v619 = vld [vmem:[#allocation3 + $0x20] sm:$0xff]
    %v620 = vld [vmem:[#allocation3 + $0x28] sm:$0xff]
    %v621 = vld [vmem:[#allocation3 + $0x30] sm:$0xff]
    %v622 = vld [vmem:[#allocation3 + $0x38] sm:$0xff]
    %v623 = vld [vmem:[#allocation3 + $0x40] sm:$0xff]
    %v624 = vld [vmem:[#allocation3 + $0x48] sm:$0xff]
    %v625 = vld [vmem:[#allocation3 + $0x50] sm:$0xff]
    %v626 = vld [vmem:[#allocation3 + $0x58] sm:$0xff]
    %v627 = vld [vmem:[#allocation3 + $0x60] sm:$0xff]
    %v628 = vld [vmem:[#allocation3 + $0x68] sm:$0xff]
    %v629 = vld [vmem:[#allocation3 + $0x70] sm:$0xff]
    %v630 = vld [vmem:[#allocation3 + $0x78] sm:$0xff]
    %v631 = vld [vmem:[#allocation3 + $0x80] sm:$0xff]
    %v632 = vld [vmem:[#allocation3 + $0x88] sm:$0xff]
    %v633 = vld [vmem:[#allocation3 + $0x90] sm:$0xff]
    %v634 = vld [vmem:[#allocation3 + $0x98] sm:$0xff]
    %v635 = vld [vmem:[#allocation3 + $0xa0] sm:$0xff]
    %v636 = vld [vmem:[#allocation3 + $0xa8] sm:$0xff]
    %v637 = vld [vmem:[#allocation3 + $0xb0] sm:$0xff]
    %v638 = vld [vmem:[#allocation3 + $0xb8] sm:$0xff]
    %v639 = vld [vmem:[#allocation3 + $0xc0] sm:$0xff]
    %v640 = vld [vmem:[#allocation3 + $0xc8] sm:$0xff]
    %v641 = vld [vmem:[#allocation3 + $0xd0] sm:$0xff]
    %v642 = vld [vmem:[#allocation3 + $0xd8] sm:$0xff]
    %v643 = vld [vmem:[#allocation3 + $0xe0] sm:$0xff]
    %v644 = vld [vmem:[#allocation3 + $0xe8] sm:$0xff]
    %v645 = vld [vmem:[#allocation3 + $0xf0] sm:$0xff]
    %v646 = vld [vmem:[#allocation3 + $0xf8] sm:$0xff]
    %v647 = vld [vmem:[#allocation3 + $0x100] sm:$0xff]
    %v648 = vld [vmem:[#allocation3 + $0x108] sm:$0xff]
    %v649 = vld [vmem:[#allocation3 + $0x110] sm:$0xff]
    %v650 = vld [vmem:[#allocation3 + $0x118] sm:$0xff]
    %vm651 = vcmask 588800
    %v653 = vsel %vm651, %v99, 0
    %v656 = vsel %vm651, %v100, 0
    %658 = vmatprep.subr.mxu0 %v616
    %659 = vmatpush1.msra.mxu0 %v615
    %660 = vmatprep.subr.mxu0 %v620
    %661 = vmatpush1.msra.mxu0 %v619
    %662 = vmatprep.subr.mxu0 %v624
    %663 = vmatpush1.msra.mxu0 %v623
    %664 = vmatprep.subr.mxu0 %v628
    %665 = vmatpush1.msra.mxu0 %v627
    %666 = vmatprep.subr.mxu0 %v632
    %667 = vmatpush1.msra.mxu0 %v631
    %668 = vmatprep.subr.mxu0 %v636
    %669 = vmatpush1.msra.mxu0 %v635
    %670 = vmatprep.subr.mxu0 %v640
    %671 = vmatpush1.msra.mxu0 %v639
    %672 = vmatprep.subr.mxu0 %v644
    %673 = vmatpush1.msra.mxu0 %v643
    %674 = vmatprep.subr.mxu0 %v648
    %675 = vmatpush1.msra.mxu0 %v647
    %676 = vmatprep.subr.mxu0 0.0
    %677 = vmatpush1.msra.mxu0 0.0
    %678 = vmatprep.subr.mxu0 0.0
    %679 = vmatpush1.msra.mxu0 0.0
    %680 = vmatprep.subr.mxu0 0.0
    %681 = vmatpush1.msra.mxu0 0.0
    %682 = vmatprep.subr.mxu0 0.0
    %683 = vmatpush1.msra.mxu0 0.0
    %684 = vmatprep.subr.mxu0 0.0
    %685 = vmatpush1.msra.mxu0 0.0
    %686 = vmatprep.subr.mxu0 0.0
    %687 = vmatpush1.msra.mxu0 0.0
    %688 = vmatprep.subr.mxu0 0.0
    %689 = vmatpush1.msra.mxu0 0.0
    %690 = vmatprep.subr.mxu0 0.0
    %691 = vmatpush1.msra.mxu0 0.0
    %692 = vmatprep.subr.mxu0 0.0
    %693 = vmatpush1.msra.mxu0 0.0
    %694 = vmatprep.subr.mxu0 0.0
    %695 = vmatpush1.msra.mxu0 0.0
    %696 = vmatprep.subr.mxu0 0.0
    %697 = vmatpush1.msra.mxu0 0.0
    %698 = vmatprep.subr.mxu0 0.0
    %699 = vmatpush1.msra.mxu0 0.0
    %700 = vmatprep.subr.mxu0 0.0
    %701 = vmatpush1.msra.mxu0 0.0
    %702 = vmatprep.subr.mxu0 0.0
    %703 = vmatpush1.msra.mxu0 0.0
    %704 = vmatprep.subr.mxu0 0.0
    %705 = vmatpush1.msra.mxu0 0.0
    %706 = vmatprep.subr.mxu0 0.0
    %707 = vmatpush1.msra.mxu0 0.0
    %708 = vmatprep.subr.mxu0 0.0
    %709 = vmatpush1.msra.mxu0 0.0
    %710 = vmatprep.subr.mxu0 0.0
    %711 = vmatpush1.msra.mxu0 0.0
    %712 = vmatprep.subr.mxu0 0.0
    %713 = vmatpush1.msra.mxu0 0.0
    %714 = vmatprep.subr.mxu0 0.0
    %715 = vmatpush1.msra.mxu0 0.0
    %716 = vmatprep.subr.mxu0 0.0
    %717 = vmatpush1.msra.mxu0 0.0
    %718 = vmatprep.subr.mxu0 0.0
    %719 = vmatpush1.msra.mxu0 0.0
    %720 = vmatprep.subr.mxu0 0.0
    %721 = vmatpush1.msra.mxu0 0.0
    %722 = vmatprep.mubr.f32.mxu0 0.0
    %723 = vmatmul.mubr.f32.gmra.mrb[0].mxu0 %v653
    %v724 = vpop.f32.mrb[0].mxu0
    %v725 = vadd.f32 0.0, %v724
    %v726 = vpop.f32.mrb[0].mxu0
    %v727 = vadd.f32 0.0, %v726
    %728 = vmatprep.mubr.f32.mxu0 0.0
    %729 = vmatmul.mubr.f32.gmra.mrb[0].mxu0 %v656
    %v730 = vpop.f32.mrb[0].mxu0
    %v731 = vadd.f32 0.0, %v730
    %v732 = vpop.f32.mrb[0].mxu0
    %v733 = vadd.f32 0.0, %v732
    %734 = vdwg.mxu0
    %735 = vmatprep.subr.mxu0 %v618
    %736 = vmatpush1.msra.mxu0 %v617
    %737 = vmatprep.subr.mxu0 %v622
    %738 = vmatpush1.msra.mxu0 %v621
    %739 = vmatprep.subr.mxu0 %v626
    %740 = vmatpush1.msra.mxu0 %v625
    %741 = vmatprep.subr.mxu0 %v630
    %742 = vmatpush1.msra.mxu0 %v629
    %743 = vmatprep.subr.mxu0 %v634
    %744 = vmatpush1.msra.mxu0 %v633
    %745 = vmatprep.subr.mxu0 %v638
    %746 = vmatpush1.msra.mxu0 %v637
    %747 = vmatprep.subr.mxu0 %v642
    %748 = vmatpush1.msra.mxu0 %v641
    %749 = vmatprep.subr.mxu0 %v646
    %750 = vmatpush1.msra.mxu0 %v645
    %751 = vmatprep.subr.mxu0 %v650
    %752 = vmatpush1.msra.mxu0 %v649
    %753 = vmatprep.subr.mxu0 0.0
    %754 = vmatpush1.msra.mxu0 0.0
    %755 = vmatprep.subr.mxu0 0.0
    %756 = vmatpush1.msra.mxu0 0.0
    %757 = vmatprep.subr.mxu0 0.0
    %758 = vmatpush1.msra.mxu0 0.0
    %759 = vmatprep.subr.mxu0 0.0
    %760 = vmatpush1.msra.mxu0 0.0
    %761 = vmatprep.subr.mxu0 0.0
    %762 = vmatpush1.msra.mxu0 0.0
    %763 = vmatprep.subr.mxu0 0.0
    %764 = vmatpush1.msra.mxu0 0.0
    %765 = vmatprep.subr.mxu0 0.0
    %766 = vmatpush1.msra.mxu0 0.0
    %767 = vmatprep.subr.mxu0 0.0
    %768 = vmatpush1.msra.mxu0 0.0
    %769 = vmatprep.subr.mxu0 0.0
    %770 = vmatpush1.msra.mxu0 0.0
    %771 = vmatprep.subr.mxu0 0.0
    %772 = vmatpush1.msra.mxu0 0.0
    %773 = vmatprep.subr.mxu0 0.0
    %774 = vmatpush1.msra.mxu0 0.0
    %775 = vmatprep.subr.mxu0 0.0
    %776 = vmatpush1.msra.mxu0 0.0
    %777 = vmatprep.subr.mxu0 0.0
    %778 = vmatpush1.msra.mxu0 0.0
    %779 = vmatprep.subr.mxu0 0.0
    %780 = vmatpush1.msra.mxu0 0.0
    %781 = vmatprep.subr.mxu0 0.0
    %782 = vmatpush1.msra.mxu0 0.0
    %783 = vmatprep.subr.mxu0 0.0
    %784 = vmatpush1.msra.mxu0 0.0
    %785 = vmatprep.subr.mxu0 0.0
    %786 = vmatpush1.msra.mxu0 0.0
    %787 = vmatprep.subr.mxu0 0.0
    %788 = vmatpush1.msra.mxu0 0.0
    %789 = vmatprep.subr.mxu0 0.0
    %790 = vmatpush1.msra.mxu0 0.0
    %791 = vmatprep.subr.mxu0 0.0
    %792 = vmatpush1.msra.mxu0 0.0
    %793 = vmatprep.subr.mxu0 0.0
    %794 = vmatpush1.msra.mxu0 0.0
    %795 = vmatprep.subr.mxu0 0.0
    %796 = vmatpush1.msra.mxu0 0.0
    %797 = vmatprep.subr.mxu0 0.0
    %798 = vmatpush1.msra.mxu0 0.0
    %799 = vmatprep.mubr.f32.mxu0 0.0
    %800 = vmatmul.mubr.f32.gmra.mrb[0].mxu0 %v653
    %v801 = vpop.f32.mrb[0].mxu0
    %v802 = vadd.f32 0.0, %v801
    %v803 = vpop.f32.mrb[0].mxu0
    %v804 = vadd.f32 0.0, %v803
    %805 = vmatprep.mubr.f32.mxu0 0.0
    %806 = vmatmul.mubr.f32.gmra.mrb[0].mxu0 %v656
    %v807 = vpop.f32.mrb[0].mxu0
    %v808 = vadd.f32 0.0, %v807
    %v809 = vpop.f32.mrb[0].mxu0
    %v810 = vadd.f32 0.0, %v809
    %811 = vdwg.mxu0
    %vm812 = vcmp.ge.f32.partialorder %v725, 0.0
    %vm813 = vcmp.ge.f32.partialorder %v727, 0.0
    %vm814 = vcmp.ge.f32.partialorder %v802, 0.0
    %vm815 = vcmp.ge.f32.partialorder %v804, 0.0
    %vm816 = vcmp.ge.f32.partialorder %v731, 0.0
    %vm817 = vcmp.ge.f32.partialorder %v733, 0.0
    %vm818 = vcmp.ge.f32.partialorder %v808, 0.0
    %vm819 = vcmp.ge.f32.partialorder %v810, 0.0
    %v820 = vmul.f32 %v725, 0.01
    %v821 = vmul.f32 %v727, 0.01
    %v822 = vmul.f32 %v802, 0.01
    %v823 = vmul.f32 %v804, 0.01
    %v824 = vmul.f32 %v731, 0.01
    %v825 = vmul.f32 %v733, 0.01
    %v826 = vmul.f32 %v808, 0.01
    %v827 = vmul.f32 %v810, 0.01
    %v828 = vsel %vm812, %v725, %v820
    %v829 = vsel %vm813, %v727, %v821
    %v830 = vsel %vm814, %v802, %v822
    %v831 = vsel %vm815, %v804, %v823
    %v832 = vsel %vm816, %v731, %v824
    %v833 = vsel %vm817, %v733, %v825
    %v834 = vsel %vm818, %v808, %v826
    %v835 = vsel %vm819, %v810, %v827
    %vm836 = vcmask 80896
    %v838 = vsel %vm836, %v101, 0
    %v841 = vsel %vm836, %v102, 0
    %vm843 = vcmask 1041408
    %v845 = vsel %vm843, %v832, 0
    %v848 = vsel %vm843, %v833, 0
    %v851 = vsel %vm843, %v834, 0
    %v854 = vsel %vm843, %v835, 0
    %856 = vmatprep.subr.mxu0 %v829
    %857 = vmatpush1.msra.mxu0 %v828
    %858 = vmatprep.subr.mxu0 %v848
    %859 = vmatpush1.msra.mxu0 %v845
    %860 = vmatprep.subr.mxu0 0.0
    %861 = vmatpush1.msra.mxu0 0.0
    %862 = vmatprep.subr.mxu0 0.0
    %863 = vmatpush1.msra.mxu0 0.0
    %864 = vmatprep.subr.mxu0 0.0
    %865 = vmatpush1.msra.mxu0 0.0
    %866 = vmatprep.subr.mxu0 0.0
    %867 = vmatpush1.msra.mxu0 0.0
    %868 = vmatprep.subr.mxu0 0.0
    %869 = vmatpush1.msra.mxu0 0.0
    %870 = vmatprep.subr.mxu0 0.0
    %871 = vmatpush1.msra.mxu0 0.0
    %872 = vmatprep.subr.mxu0 0.0
    %873 = vmatpush1.msra.mxu0 0.0
    %874 = vmatprep.subr.mxu0 0.0
    %875 = vmatpush1.msra.mxu0 0.0
    %876 = vmatprep.subr.mxu0 0.0
    %877 = vmatpush1.msra.mxu0 0.0
    %878 = vmatprep.subr.mxu0 0.0
    %879 = vmatpush1.msra.mxu0 0.0
    %880 = vmatprep.subr.mxu0 0.0
    %881 = vmatpush1.msra.mxu0 0.0
    %882 = vmatprep.subr.mxu0 0.0
    %883 = vmatpush1.msra.mxu0 0.0
    %884 = vmatprep.subr.mxu0 0.0
    %885 = vmatpush1.msra.mxu0 0.0
    %886 = vmatprep.subr.mxu0 0.0
    %887 = vmatpush1.msra.mxu0 0.0
    %888 = vmatprep.subr.mxu0 0.0
    %889 = vmatpush1.msra.mxu0 0.0
    %890 = vmatprep.subr.mxu0 0.0
    %891 = vmatpush1.msra.mxu0 0.0
    %892 = vmatprep.subr.mxu0 0.0
    %893 = vmatpush1.msra.mxu0 0.0
    %894 = vmatprep.subr.mxu0 0.0
    %895 = vmatpush1.msra.mxu0 0.0
    %896 = vmatprep.subr.mxu0 0.0
    %897 = vmatpush1.msra.mxu0 0.0
    %898 = vmatprep.subr.mxu0 0.0
    %899 = vmatpush1.msra.mxu0 0.0
    %900 = vmatprep.subr.mxu0 0.0
    %901 = vmatpush1.msra.mxu0 0.0
    %902 = vmatprep.subr.mxu0 0.0
    %903 = vmatpush1.msra.mxu0 0.0
    %904 = vmatprep.subr.mxu0 0.0
    %905 = vmatpush1.msra.mxu0 0.0
    %906 = vmatprep.subr.mxu0 0.0
    %907 = vmatpush1.msra.mxu0 0.0
    %908 = vmatprep.subr.mxu0 0.0
    %909 = vmatpush1.msra.mxu0 0.0
    %910 = vmatprep.subr.mxu0 0.0
    %911 = vmatpush1.msra.mxu0 0.0
    %912 = vmatprep.subr.mxu0 0.0
    %913 = vmatpush1.msra.mxu0 0.0
    %914 = vmatprep.subr.mxu0 0.0
    %915 = vmatpush1.msra.mxu0 0.0
    %916 = vmatprep.subr.mxu0 0.0
    %917 = vmatpush1.msra.mxu0 0.0
    %918 = vmatprep.subr.mxu0 0.0
    %919 = vmatpush1.msra.mxu0 0.0
    %920 = vmatprep.mubr.f32.mxu0 0.0
    %921 = vmatmul.mubr.f32.gmra.mrb[0].mxu0 %v838
    %v922 = vpop.f32.mrb[0].mxu0
    %v923 = vadd.f32 0.0, %v922
    %v924 = vpop.f32.mrb[0].mxu0
    %v925 = vadd.f32 0.0, %v924
    %926 = vmatprep.mubr.f32.mxu0 0.0
    %927 = vmatmul.mubr.f32.gmra.mrb[0].mxu0 %v841
    %v928 = vpop.f32.mrb[0].mxu0
    %v929 = vadd.f32 0.0, %v928
    %v930 = vpop.f32.mrb[0].mxu0
    %v931 = vadd.f32 0.0, %v930
    %932 = vdwg.mxu0
    %933 = vmatprep.subr.mxu0 %v831
    %934 = vmatpush1.msra.mxu0 %v830
    %935 = vmatprep.subr.mxu0 %v854
    %936 = vmatpush1.msra.mxu0 %v851
    %937 = vmatprep.subr.mxu0 0.0
    %938 = vmatpush1.msra.mxu0 0.0
    %939 = vmatprep.subr.mxu0 0.0
    %940 = vmatpush1.msra.mxu0 0.0
    %941 = vmatprep.subr.mxu0 0.0
    %942 = vmatpush1.msra.mxu0 0.0
    %943 = vmatprep.subr.mxu0 0.0
    %944 = vmatpush1.msra.mxu0 0.0
    %945 = vmatprep.subr.mxu0 0.0
    %946 = vmatpush1.msra.mxu0 0.0
    %947 = vmatprep.subr.mxu0 0.0
    %948 = vmatpush1.msra.mxu0 0.0
    %949 = vmatprep.subr.mxu0 0.0
    %950 = vmatpush1.msra.mxu0 0.0
    %951 = vmatprep.subr.mxu0 0.0
    %952 = vmatpush1.msra.mxu0 0.0
    %953 = vmatprep.subr.mxu0 0.0
    %954 = vmatpush1.msra.mxu0 0.0
    %955 = vmatprep.subr.mxu0 0.0
    %956 = vmatpush1.msra.mxu0 0.0
    %957 = vmatprep.subr.mxu0 0.0
    %958 = vmatpush1.msra.mxu0 0.0
    %959 = vmatprep.subr.mxu0 0.0
    %960 = vmatpush1.msra.mxu0 0.0
    %961 = vmatprep.subr.mxu0 0.0
    %962 = vmatpush1.msra.mxu0 0.0
    %963 = vmatprep.subr.mxu0 0.0
    %964 = vmatpush1.msra.mxu0 0.0
    %965 = vmatprep.subr.mxu0 0.0
    %966 = vmatpush1.msra.mxu0 0.0
    %967 = vmatprep.subr.mxu0 0.0
    %968 = vmatpush1.msra.mxu0 0.0
    %969 = vmatprep.subr.mxu0 0.0
    %970 = vmatpush1.msra.mxu0 0.0
    %971 = vmatprep.subr.mxu0 0.0
    %972 = vmatpush1.msra.mxu0 0.0
    %973 = vmatprep.subr.mxu0 0.0
    %974 = vmatpush1.msra.mxu0 0.0
    %975 = vmatprep.subr.mxu0 0.0
    %976 = vmatpush1.msra.mxu0 0.0
    %977 = vmatprep.subr.mxu0 0.0
    %978 = vmatpush1.msra.mxu0 0.0
    %979 = vmatprep.subr.mxu0 0.0
    %980 = vmatpush1.msra.mxu0 0.0
    %981 = vmatprep.subr.mxu0 0.0
    %982 = vmatpush1.msra.mxu0 0.0
    %983 = vmatprep.subr.mxu0 0.0
    %984 = vmatpush1.msra.mxu0 0.0
    %985 = vmatprep.subr.mxu0 0.0
    %986 = vmatpush1.msra.mxu0 0.0
    %987 = vmatprep.subr.mxu0 0.0
    %988 = vmatpush1.msra.mxu0 0.0
    %989 = vmatprep.subr.mxu0 0.0
    %990 = vmatpush1.msra.mxu0 0.0
    %991 = vmatprep.subr.mxu0 0.0
    %992 = vmatpush1.msra.mxu0 0.0
    %993 = vmatprep.subr.mxu0 0.0
    %994 = vmatpush1.msra.mxu0 0.0
    %995 = vmatprep.subr.mxu0 0.0
    %996 = vmatpush1.msra.mxu0 0.0
    %997 = vmatprep.mubr.f32.mxu0 0.0
    %998 = vmatmul.mubr.f32.gmra.mrb[0].mxu0 %v838
    %v999 = vpop.f32.mrb[0].mxu0
    %v1000 = vadd.f32 0.0, %v999
    %v1001 = vpop.f32.mrb[0].mxu0
    %v1002 = vadd.f32 0.0, %v1001
    %1003 = vmatprep.mubr.f32.mxu0 0.0
    %1004 = vmatmul.mubr.f32.gmra.mrb[0].mxu0 %v841
    %v1005 = vpop.f32.mrb[0].mxu0
    %v1006 = vadd.f32 0.0, %v1005
    %v1007 = vpop.f32.mrb[0].mxu0
    %v1008 = vadd.f32 0.0, %v1007
    %1009 = vdwg.mxu0
    %vm1010 = vcmp.ge.f32.partialorder %v923, 0.0
    %vm1011 = vcmp.ge.f32.partialorder %v925, 0.0
    %vm1012 = vcmp.ge.f32.partialorder %v1000, 0.0
    %vm1013 = vcmp.ge.f32.partialorder %v1002, 0.0
    %vm1014 = vcmp.ge.f32.partialorder %v929, 0.0
    %vm1015 = vcmp.ge.f32.partialorder %v931, 0.0
    %vm1016 = vcmp.ge.f32.partialorder %v1006, 0.0
    %vm1017 = vcmp.ge.f32.partialorder %v1008, 0.0
    %v1018 = vmul.f32 %v923, 0.01
    %v1019 = vmul.f32 %v925, 0.01
    %v1020 = vmul.f32 %v1000, 0.01
    %v1021 = vmul.f32 %v1002, 0.01
    %v1022 = vmul.f32 %v929, 0.01
    %v1023 = vmul.f32 %v931, 0.01
    %v1024 = vmul.f32 %v1006, 0.01
    %v1025 = vmul.f32 %v1008, 0.01
    %v1026 = vsel %vm1010, %v923, %v1018
    %v1027 = vsel %vm1011, %v925, %v1019
    %v1028 = vsel %vm1012, %v1000, %v1020
    %v1029 = vsel %vm1013, %v1002, %v1021
    %v1030 = vsel %vm1014, %v929, %v1022
    %v1031 = vsel %vm1015, %v931, %v1023
    %v1032 = vsel %vm1016, %v1006, %v1024
    %v1033 = vsel %vm1017, %v1008, %v1025
    %1034 = vrot.lane.b32.xlu0 %v101, 118
    %v1035 = vpop.permute.xlu0 %1034
    %1036 = vrot.lane.b32.xlu0 %v102, 118
    %v1037 = vpop.permute.xlu0 %1036
    %v1038 = vsel %vm836, %v1035, 0
    %v1040 = vsel %vm836, %v1037, 0
    %v1043 = vsel %vm843, %v1030, 0
    %v1046 = vsel %vm843, %v1031, 0
    %v1049 = vsel %vm843, %v1032, 0
    %v1052 = vsel %vm843, %v1033, 0
    %1054 = vmatprep.subr.mxu0 %v1027
    %1055 = vmatpush1.msra.mxu0 %v1026
    %1056 = vmatprep.subr.mxu0 %v1046
    %1057 = vmatpush1.msra.mxu0 %v1043
    %1058 = vmatprep.subr.mxu0 0.0
    %1059 = vmatpush1.msra.mxu0 0.0
    %1060 = vmatprep.subr.mxu0 0.0
    %1061 = vmatpush1.msra.mxu0 0.0
    %1062 = vmatprep.subr.mxu0 0.0
    %1063 = vmatpush1.msra.mxu0 0.0
    %1064 = vmatprep.subr.mxu0 0.0
    %1065 = vmatpush1.msra.mxu0 0.0
    %1066 = vmatprep.subr.mxu0 0.0
    %1067 = vmatpush1.msra.mxu0 0.0
    %1068 = vmatprep.subr.mxu0 0.0
    %1069 = vmatpush1.msra.mxu0 0.0
    %1070 = vmatprep.subr.mxu0 0.0
    %1071 = vmatpush1.msra.mxu0 0.0
    %1072 = vmatprep.subr.mxu0 0.0
    %1073 = vmatpush1.msra.mxu0 0.0
    %1074 = vmatprep.subr.mxu0 0.0
    %1075 = vmatpush1.msra.mxu0 0.0
    %1076 = vmatprep.subr.mxu0 0.0
    %1077 = vmatpush1.msra.mxu0 0.0
    %1078 = vmatprep.subr.mxu0 0.0
    %1079 = vmatpush1.msra.mxu0 0.0
    %1080 = vmatprep.subr.mxu0 0.0
    %1081 = vmatpush1.msra.mxu0 0.0
    %1082 = vmatprep.subr.mxu0 0.0
    %1083 = vmatpush1.msra.mxu0 0.0
    %1084 = vmatprep.subr.mxu0 0.0
    %1085 = vmatpush1.msra.mxu0 0.0
    %1086 = vmatprep.subr.mxu0 0.0
    %1087 = vmatpush1.msra.mxu0 0.0
    %1088 = vmatprep.subr.mxu0 0.0
    %1089 = vmatpush1.msra.mxu0 0.0
    %1090 = vmatprep.subr.mxu0 0.0
    %1091 = vmatpush1.msra.mxu0 0.0
    %1092 = vmatprep.subr.mxu0 0.0
    %1093 = vmatpush1.msra.mxu0 0.0
    %1094 = vmatprep.subr.mxu0 0.0
    %1095 = vmatpush1.msra.mxu0 0.0
    %1096 = vmatprep.subr.mxu0 0.0
    %1097 = vmatpush1.msra.mxu0 0.0
    %1098 = vmatprep.subr.mxu0 0.0
    %1099 = vmatpush1.msra.mxu0 0.0
    %1100 = vmatprep.subr.mxu0 0.0
    %1101 = vmatpush1.msra.mxu0 0.0
    %1102 = vmatprep.subr.mxu0 0.0
    %1103 = vmatpush1.msra.mxu0 0.0
    %1104 = vmatprep.subr.mxu0 0.0
    %1105 = vmatpush1.msra.mxu0 0.0
    %1106 = vmatprep.subr.mxu0 0.0
    %1107 = vmatpush1.msra.mxu0 0.0
    %1108 = vmatprep.subr.mxu0 0.0
    %1109 = vmatpush1.msra.mxu0 0.0
    %1110 = vmatprep.subr.mxu0 0.0
    %1111 = vmatpush1.msra.mxu0 0.0
    %1112 = vmatprep.subr.mxu0 0.0
    %1113 = vmatpush1.msra.mxu0 0.0
    %1114 = vmatprep.subr.mxu0 0.0
    %1115 = vmatpush1.msra.mxu0 0.0
    %1116 = vmatprep.subr.mxu0 0.0
    %1117 = vmatpush1.msra.mxu0 0.0
    %1118 = vmatprep.mubr.f32.mxu0 0.0
    %1119 = vmatmul.mubr.f32.gmra.mrb[0].mxu0 %v1038
    %v1120 = vpop.f32.mrb[0].mxu0
    %v1121 = vadd.f32 0.0, %v1120
    %v1122 = vpop.f32.mrb[0].mxu0
    %v1123 = vadd.f32 0.0, %v1122
    %1124 = vmatprep.mubr.f32.mxu0 0.0
    %1125 = vmatmul.mubr.f32.gmra.mrb[0].mxu0 %v1040
    %v1126 = vpop.f32.mrb[0].mxu0
    %v1127 = vadd.f32 0.0, %v1126
    %v1128 = vpop.f32.mrb[0].mxu0
    %v1129 = vadd.f32 0.0, %v1128
    %1130 = vdwg.mxu0
    %1131 = vmatprep.subr.mxu0 %v1029
    %1132 = vmatpush1.msra.mxu0 %v1028
    %1133 = vmatprep.subr.mxu0 %v1052
    %1134 = vmatpush1.msra.mxu0 %v1049
    %1135 = vmatprep.subr.mxu0 0.0
    %1136 = vmatpush1.msra.mxu0 0.0
    %1137 = vmatprep.subr.mxu0 0.0
    %1138 = vmatpush1.msra.mxu0 0.0
    %1139 = vmatprep.subr.mxu0 0.0
    %1140 = vmatpush1.msra.mxu0 0.0
    %1141 = vmatprep.subr.mxu0 0.0
    %1142 = vmatpush1.msra.mxu0 0.0
    %1143 = vmatprep.subr.mxu0 0.0
    %1144 = vmatpush1.msra.mxu0 0.0
    %1145 = vmatprep.subr.mxu0 0.0
    %1146 = vmatpush1.msra.mxu0 0.0
    %1147 = vmatprep.subr.mxu0 0.0
    %1148 = vmatpush1.msra.mxu0 0.0
    %1149 = vmatprep.subr.mxu0 0.0
    %1150 = vmatpush1.msra.mxu0 0.0
    %1151 = vmatprep.subr.mxu0 0.0
    %1152 = vmatpush1.msra.mxu0 0.0
    %1153 = vmatprep.subr.mxu0 0.0
    %1154 = vmatpush1.msra.mxu0 0.0
    %1155 = vmatprep.subr.mxu0 0.0
    %1156 = vmatpush1.msra.mxu0 0.0
    %1157 = vmatprep.subr.mxu0 0.0
    %1158 = vmatpush1.msra.mxu0 0.0
    %1159 = vmatprep.subr.mxu0 0.0
    %1160 = vmatpush1.msra.mxu0 0.0
    %1161 = vmatprep.subr.mxu0 0.0
    %1162 = vmatpush1.msra.mxu0 0.0
    %1163 = vmatprep.subr.mxu0 0.0
    %1164 = vmatpush1.msra.mxu0 0.0
    %1165 = vmatprep.subr.mxu0 0.0
    %1166 = vmatpush1.msra.mxu0 0.0
    %1167 = vmatprep.subr.mxu0 0.0
    %1168 = vmatpush1.msra.mxu0 0.0
    %1169 = vmatprep.subr.mxu0 0.0
    %1170 = vmatpush1.msra.mxu0 0.0
    %1171 = vmatprep.subr.mxu0 0.0
    %1172 = vmatpush1.msra.mxu0 0.0
    %1173 = vmatprep.subr.mxu0 0.0
    %1174 = vmatpush1.msra.mxu0 0.0
    %1175 = vmatprep.subr.mxu0 0.0
    %1176 = vmatpush1.msra.mxu0 0.0
    %1177 = vmatprep.subr.mxu0 0.0
    %1178 = vmatpush1.msra.mxu0 0.0
    %1179 = vmatprep.subr.mxu0 0.0
    %1180 = vmatpush1.msra.mxu0 0.0
    %1181 = vmatprep.subr.mxu0 0.0
    %1182 = vmatpush1.msra.mxu0 0.0
    %1183 = vmatprep.subr.mxu0 0.0
    %1184 = vmatpush1.msra.mxu0 0.0
    %1185 = vmatprep.subr.mxu0 0.0
    %1186 = vmatpush1.msra.mxu0 0.0
    %1187 = vmatprep.subr.mxu0 0.0
    %1188 = vmatpush1.msra.mxu0 0.0
    %1189 = vmatprep.subr.mxu0 0.0
    %1190 = vmatpush1.msra.mxu0 0.0
    %1191 = vmatprep.subr.mxu0 0.0
    %1192 = vmatpush1.msra.mxu0 0.0
    %1193 = vmatprep.subr.mxu0 0.0
    %1194 = vmatpush1.msra.mxu0 0.0
    %1195 = vmatprep.mubr.f32.mxu0 0.0
    %1196 = vmatmul.mubr.f32.gmra.mrb[0].mxu0 %v1038
    %v1197 = vpop.f32.mrb[0].mxu0
    %v1198 = vadd.f32 0.0, %v1197
    %v1199 = vpop.f32.mrb[0].mxu0
    %v1200 = vadd.f32 0.0, %v1199
    %1201 = vmatprep.mubr.f32.mxu0 0.0
    %1202 = vmatmul.mubr.f32.gmra.mrb[0].mxu0 %v1040
    %v1203 = vpop.f32.mrb[0].mxu0
    %v1204 = vadd.f32 0.0, %v1203
    %v1205 = vpop.f32.mrb[0].mxu0
    %v1206 = vadd.f32 0.0, %v1205
    %1207 = vdwg.mxu0
    %v1208 = vxor.u32 %v1121, 2147483648
    %v1209 = vxor.u32 %v1123, 2147483648
    %v1210 = vxor.u32 %v1198, 2147483648
    %v1211 = vxor.u32 %v1200, 2147483648
    %v1212 = vxor.u32 %v1127, 2147483648
    %v1213 = vxor.u32 %v1129, 2147483648
    %v1214 = vxor.u32 %v1204, 2147483648
    %v1215 = vxor.u32 %v1206, 2147483648
    %v1216 = vmul.f32 %v1208, 1.442695
    %v1217 = vpow.pop %v1216
    %v1218 = vmul.f32 %v1209, 1.442695
    %v1219 = vpow.pop %v1218
    %v1220 = vmul.f32 %v1210, 1.442695
    %v1221 = vpow.pop %v1220
    %v1222 = vmul.f32 %v1211, 1.442695
    %v1223 = vpow.pop %v1222
    %v1224 = vmul.f32 %v1212, 1.442695
    %v1225 = vpow.pop %v1224
    %v1226 = vmul.f32 %v1213, 1.442695
    %v1227 = vpow.pop %v1226
    %v1228 = vmul.f32 %v1214, 1.442695
    %v1229 = vpow.pop %v1228
    %v1230 = vmul.f32 %v1215, 1.442695
    %v1231 = vpow.pop %v1230
    %v1232 = vadd.f32 %v1217, 1.0
    %v1233 = vadd.f32 %v1219, 1.0
    %v1234 = vadd.f32 %v1221, 1.0
    %v1235 = vadd.f32 %v1223, 1.0
    %v1236 = vadd.f32 %v1225, 1.0
    %v1237 = vadd.f32 %v1227, 1.0
    %v1238 = vadd.f32 %v1229, 1.0
    %v1239 = vadd.f32 %v1231, 1.0
    %v1240 = vrcp.pop %v1232
    %v1241 = vmul.f32 1.0, %v1240
    %v1242 = vrcp.pop %v1233
    %v1243 = vmul.f32 1.0, %v1242
    %v1244 = vrcp.pop %v1234
    %v1245 = vmul.f32 1.0, %v1244
    %v1246 = vrcp.pop %v1235
    %v1247 = vmul.f32 1.0, %v1246
    %v1248 = vrcp.pop %v1236
    %v1249 = vmul.f32 1.0, %v1248
    %v1250 = vrcp.pop %v1237
    %v1251 = vmul.f32 1.0, %v1250
    %v1252 = vrcp.pop %v1238
    %v1253 = vmul.f32 1.0, %v1252
    %v1254 = vrcp.pop %v1239
    %v1255 = vmul.f32 1.0, %v1254
    %v1256 = vld [vmem:[#allocation2 + $0x8] sm:$0xf]
    %v1257 = vld [vmem:[#allocation2 + $0x10] sm:$0xf]
    %v1258 = vld [vmem:[#allocation2 + $0x18] sm:$0xf]
    %v1259 = vld [vmem:[#allocation2 + $0x20] sm:$0xf]
    %vm1260 = vcmask 1043456
    %v1261 = vsel %vm1260, %v1256, 0.0
    %v1262 = vsel %vm1260, %v1257, 0.0
    %v1263 = vadd.f32 %v1261, %v1262
    %1264 = vadd.xlane.f32.xlu0 %v1263
    %v1265 = vpop.xlane.xlu0 %1264
    %v1266 = vrcp.pop 256.0
    %v1267 = vmul.f32 %v1265, %v1266
    %v1268 = vsel %vm1260, %v1258, 0.0
    %v1269 = vsel %vm1260, %v1259, 0.0
    %v1270 = vadd.f32 %v1268, %v1269
    %1271 = vadd.xlane.f32.xlu0 %v1270
    %v1272 = vpop.xlane.xlu0 %1271
    %v1273 = vmul.f32 %v1272, %v1266
    %v1274 = vsel %vm342, %v1267, %v1273
    %1275 = vset.pattern.permute.xlu0 24
    %1276 = vperm.xlu0 %1275, %v101
    %v1277 = vpop.permute.xlu0 %1276
    %1279 = vrot.lane.b32.xlu0 %v101, 108
    %v1280 = vpop.permute.xlu0 %1279
    %vm1281 = vcmask 31744
    %v1282 = vsel %vm1281, %v1280, 0
    %v1285 = vsel %vm1260, %v1274, 0
    %1287 = vmatprep.subr.mxu0 0.0
    %1288 = vmatpush1.msra.mxu0 %v1285
    %1289 = vmatprep.subr.mxu0 0.0
    %1290 = vmatpush1.msra.mxu0 0.0
    %1291 = vmatprep.subr.mxu0 0.0
    %1292 = vmatpush1.msra.mxu0 0.0
    %1293 = vmatprep.subr.mxu0 0.0
    %1294 = vmatpush1.msra.mxu0 0.0
    %1295 = vmatprep.subr.mxu0 0.0
    %1296 = vmatpush1.msra.mxu0 0.0
    %1297 = vmatprep.subr.mxu0 0.0
    %1298 = vmatpush1.msra.mxu0 0.0
    %1299 = vmatprep.subr.mxu0 0.0
    %1300 = vmatpush1.msra.mxu0 0.0
    %1301 = vmatprep.subr.mxu0 0.0
    %1302 = vmatpush1.msra.mxu0 0.0
    %1303 = vmatprep.subr.mxu0 0.0
    %1304 = vmatpush1.msra.mxu0 0.0
    %1305 = vmatprep.subr.mxu0 0.0
    %1306 = vmatpush1.msra.mxu0 0.0
    %1307 = vmatprep.subr.mxu0 0.0
    %1308 = vmatpush1.msra.mxu0 0.0
    %1309 = vmatprep.subr.mxu0 0.0
    %1310 = vmatpush1.msra.mxu0 0.0
    %1311 = vmatprep.subr.mxu0 0.0
    %1312 = vmatpush1.msra.mxu0 0.0
    %1313 = vmatprep.subr.mxu0 0.0
    %1314 = vmatpush1.msra.mxu0 0.0
    %1315 = vmatprep.subr.mxu0 0.0
    %1316 = vmatpush1.msra.mxu0 0.0
    %1317 = vmatprep.subr.mxu0 0.0
    %1318 = vmatpush1.msra.mxu0 0.0
    %1319 = vmatprep.subr.mxu0 0.0
    %1320 = vmatpush1.msra.mxu0 0.0
    %1321 = vmatprep.subr.mxu0 0.0
    %1322 = vmatpush1.msra.mxu0 0.0
    %1323 = vmatprep.subr.mxu0 0.0
    %1324 = vmatpush1.msra.mxu0 0.0
    %1325 = vmatprep.subr.mxu0 0.0
    %1326 = vmatpush1.msra.mxu0 0.0
    %1327 = vmatprep.subr.mxu0 0.0
    %1328 = vmatpush1.msra.mxu0 0.0
    %1329 = vmatprep.subr.mxu0 0.0
    %1330 = vmatpush1.msra.mxu0 0.0
    %1331 = vmatprep.subr.mxu0 0.0
    %1332 = vmatpush1.msra.mxu0 0.0
    %1333 = vmatprep.subr.mxu0 0.0
    %1334 = vmatpush1.msra.mxu0 0.0
    %1335 = vmatprep.subr.mxu0 0.0
    %1336 = vmatpush1.msra.mxu0 0.0
    %1337 = vmatprep.subr.mxu0 0.0
    %1338 = vmatpush1.msra.mxu0 0.0
    %1339 = vmatprep.subr.mxu0 0.0
    %1340 = vmatpush1.msra.mxu0 0.0
    %1341 = vmatprep.subr.mxu0 0.0
    %1342 = vmatpush1.msra.mxu0 0.0
    %1343 = vmatprep.subr.mxu0 0.0
    %1344 = vmatpush1.msra.mxu0 0.0
    %1345 = vmatprep.subr.mxu0 0.0
    %1346 = vmatpush1.msra.mxu0 0.0
    %1347 = vmatprep.subr.mxu0 0.0
    %1348 = vmatpush1.msra.mxu0 0.0
    %1349 = vmatprep.subr.mxu0 0.0
    %1350 = vmatpush1.msra.mxu0 0.0
    %1351 = vmatprep.mubr.f32.mxu0 0.0
    %1352 = vmatmul.mubr.f32.gmra.mrb[0].mxu0 %v1282
    %v1353 = vpop.f32.mrb[0].mxu0
    %v1354 = vadd.f32 %v1277, %v1353
    %v1355 = vpop.f32.mrb[0].mxu0
    %1356 = vdwg.mxu0
    %vm1357 = vcmp.ge.f32.partialorder %v1354, 0.0
    %v1358 = vmul.f32 %v1354, 0.01
    %v1359 = vsel %vm1357, %v1354, %v1358
    %1360 = vset.pattern.permute.xlu0 29
    %1361 = vperm.xlu0 %1360, %v101
    %v1362 = vpop.permute.xlu0 %1361
    %1364 = vrot.lane.b32.xlu0 %v101, 103
    %v1365 = vpop.permute.xlu0 %1364
    %v1366 = vsel %vm1281, %v1365, 0
    %v1369 = vsel %vm1260, %v1359, 0
    %1371 = vmatprep.subr.mxu0 0.0
    %1372 = vmatpush1.msra.mxu0 %v1369
    %1373 = vmatprep.subr.mxu0 0.0
    %1374 = vmatpush1.msra.mxu0 0.0
    %1375 = vmatprep.subr.mxu0 0.0
    %1376 = vmatpush1.msra.mxu0 0.0
    %1377 = vmatprep.subr.mxu0 0.0
    %1378 = vmatpush1.msra.mxu0 0.0
    %1379 = vmatprep.subr.mxu0 0.0
    %1380 = vmatpush1.msra.mxu0 0.0
    %1381 = vmatprep.subr.mxu0 0.0
    %1382 = vmatpush1.msra.mxu0 0.0
    %1383 = vmatprep.subr.mxu0 0.0
    %1384 = vmatpush1.msra.mxu0 0.0
    %1385 = vmatprep.subr.mxu0 0.0
    %1386 = vmatpush1.msra.mxu0 0.0
    %1387 = vmatprep.subr.mxu0 0.0
    %1388 = vmatpush1.msra.mxu0 0.0
    %1389 = vmatprep.subr.mxu0 0.0
    %1390 = vmatpush1.msra.mxu0 0.0
    %1391 = vmatprep.subr.mxu0 0.0
    %1392 = vmatpush1.msra.mxu0 0.0
    %1393 = vmatprep.subr.mxu0 0.0
    %1394 = vmatpush1.msra.mxu0 0.0
    %1395 = vmatprep.subr.mxu0 0.0
    %1396 = vmatpush1.msra.mxu0 0.0
    %1397 = vmatprep.subr.mxu0 0.0
    %1398 = vmatpush1.msra.mxu0 0.0
    %1399 = vmatprep.subr.mxu0 0.0
    %1400 = vmatpush1.msra.mxu0 0.0
    %1401 = vmatprep.subr.mxu0 0.0
    %1402 = vmatpush1.msra.mxu0 0.0
    %1403 = vmatprep.subr.mxu0 0.0
    %1404 = vmatpush1.msra.mxu0 0.0
    %1405 = vmatprep.subr.mxu0 0.0
    %1406 = vmatpush1.msra.mxu0 0.0
    %1407 = vmatprep.subr.mxu0 0.0
    %1408 = vmatpush1.msra.mxu0 0.0
    %1409 = vmatprep.subr.mxu0 0.0
    %1410 = vmatpush1.msra.mxu0 0.0
    %1411 = vmatprep.subr.mxu0 0.0
    %1412 = vmatpush1.msra.mxu0 0.0
    %1413 = vmatprep.subr.mxu0 0.0
    %1414 = vmatpush1.msra.mxu0 0.0
    %1415 = vmatprep.subr.mxu0 0.0
    %1416 = vmatpush1.msra.mxu0 0.0
    %1417 = vmatprep.subr.mxu0 0.0
    %1418 = vmatpush1.msra.mxu0 0.0
    %1419 = vmatprep.subr.mxu0 0.0
    %1420 = vmatpush1.msra.mxu0 0.0
    %1421 = vmatprep.subr.mxu0 0.0
    %1422 = vmatpush1.msra.mxu0 0.0
    %1423 = vmatprep.subr.mxu0 0.0
    %1424 = vmatpush1.msra.mxu0 0.0
    %1425 = vmatprep.subr.mxu0 0.0
    %1426 = vmatpush1.msra.mxu0 0.0
    %1427 = vmatprep.subr.mxu0 0.0
    %1428 = vmatpush1.msra.mxu0 0.0
    %1429 = vmatprep.subr.mxu0 0.0
    %1430 = vmatpush1.msra.mxu0 0.0
    %1431 = vmatprep.subr.mxu0 0.0
    %1432 = vmatpush1.msra.mxu0 0.0
    %1433 = vmatprep.subr.mxu0 0.0
    %1434 = vmatpush1.msra.mxu0 0.0
    %1435 = vmatprep.mubr.f32.mxu0 0.0
    %1436 = vmatmul.mubr.f32.gmra.mrb[0].mxu0 %v1366
    %v1437 = vpop.f32.mrb[0].mxu0
    %v1438 = vadd.f32 %v1362, %v1437
    %v1439 = vpop.f32.mrb[0].mxu0
    %1440 = vdwg.mxu0
    %v1441 = vld [vmem:[#allocation3] sm:$0xff]
    %v1442 = vld [vmem:[#allocation3 + $0x8] sm:$0xff]
    %v1443 = vld [vmem:[#allocation3 + $0x10] sm:$0xff]
    %v1444 = vld [vmem:[#allocation3 + $0x18] sm:$0xff]
    %v1445 = vlaneseq
    %v1446 = vshrl.u32 %v1445, 7
    %v1447 = vsub.s32 0, %v1446
    %v1448 = vrot.slane %v1241, %v1447
    %v1449 = vlaneseq
    %v1450 = vshrl.u32 %v1449, 7
    %v1451 = vsub.s32 0, %v1450
    %v1452 = vrot.slane %v1243, %v1451
    %v1453 = vlaneseq
    %v1454 = vshrl.u32 %v1453, 7
    %v1455 = vsub.s32 0, %v1454
    %v1456 = vrot.slane %v1245, %v1455
    %v1457 = vlaneseq
    %v1458 = vshrl.u32 %v1457, 7
    %v1459 = vsub.s32 0, %v1458
    %v1460 = vrot.slane %v1247, %v1459
    %v1461 = vmul.f32 %v1441, %v1448
    %v1462 = vmul.f32 %v1442, %v1452
    %v1463 = vmul.f32 %v1443, %v1456
    %v1464 = vmul.f32 %v1444, %v1460
    %1465 = vst [vmem:[#allocation3] sm:$0xff] %v1461
    %1466 = vst [vmem:[#allocation3 + $0x8] sm:$0xff] %v1462
    %1467 = vst [vmem:[#allocation3 + $0x10] sm:$0xff] %v1463
    %1468 = vst [vmem:[#allocation3 + $0x18] sm:$0xff] %v1464
    %v1469 = vld [vmem:[#allocation3 + $0x20] sm:$0xff]
    %v1470 = vld [vmem:[#allocation3 + $0x28] sm:$0xff]
    %v1471 = vld [vmem:[#allocation3 + $0x30] sm:$0xff]
    %v1472 = vld [vmem:[#allocation3 + $0x38] sm:$0xff]
    %v1473 = vlaneseq
    %v1474 = vshrl.u32 %v1473, 7
    %v1475 = vsub.s32 1, %v1474
    %v1476 = vrot.slane %v1241, %v1475
    %v1477 = vlaneseq
    %v1478 = vshrl.u32 %v1477, 7
    %v1479 = vsub.s32 1, %v1478
    %v1480 = vrot.slane %v1243, %v1479
    %v1481 = vlaneseq
    %v1482 = vshrl.u32 %v1481, 7
    %v1483 = vsub.s32 1, %v1482
    %v1484 = vrot.slane %v1245, %v1483
    %v1485 = vlaneseq
    %v1486 = vshrl.u32 %v1485, 7
    %v1487 = vsub.s32 1, %v1486
    %v1488 = vrot.slane %v1247, %v1487
    %v1489 = vmul.f32 %v1469, %v1476
    %v1490 = vmul.f32 %v1470, %v1480
    %v1491 = vmul.f32 %v1471, %v1484
    %v1492 = vmul.f32 %v1472, %v1488
    %1493 = vst [vmem:[#allocation3 + $0x20] sm:$0xff] %v1489
    %1494 = vst [vmem:[#allocation3 + $0x28] sm:$0xff] %v1490
    %1495 = vst [vmem:[#allocation3 + $0x30] sm:$0xff] %v1491
    %1496 = vst [vmem:[#allocation3 + $0x38] sm:$0xff] %v1492
    %v1497 = vld [vmem:[#allocation3 + $0x40] sm:$0xff]
    %v1498 = vld [vmem:[#allocation3 + $0x48] sm:$0xff]
    %v1499 = vld [vmem:[#allocation3 + $0x50] sm:$0xff]
    %v1500 = vld [vmem:[#allocation3 + $0x58] sm:$0xff]
    %v1501 = vlaneseq
    %v1502 = vshrl.u32 %v1501, 7
    %v1503 = vsub.s32 2, %v1502
    %v1504 = vrot.slane %v1241, %v1503
    %v1505 = vlaneseq
    %v1506 = vshrl.u32 %v1505, 7
    %v1507 = vsub.s32 2, %v1506
    %v1508 = vrot.slane %v1243, %v1507
    %v1509 = vlaneseq
    %v1510 = vshrl.u32 %v1509, 7
    %v1511 = vsub.s32 2, %v1510
    %v1512 = vrot.slane %v1245, %v1511
    %v1513 = vlaneseq
    %v1514 = vshrl.u32 %v1513, 7
    %v1515 = vsub.s32 2, %v1514
    %v1516 = vrot.slane %v1247, %v1515
    %v1517 = vmul.f32 %v1497, %v1504
    %v1518 = vmul.f32 %v1498, %v1508
    %v1519 = vmul.f32 %v1499, %v1512
    %v1520 = vmul.f32 %v1500, %v1516
    %1521 = vst [vmem:[#allocation3 + $0x40] sm:$0xff] %v1517
    %1522 = vst [vmem:[#allocation3 + $0x48] sm:$0xff] %v1518
    %1523 = vst [vmem:[#allocation3 + $0x50] sm:$0xff] %v1519
    %1524 = vst [vmem:[#allocation3 + $0x58] sm:$0xff] %v1520
    %v1525 = vld [vmem:[#allocation3 + $0x60] sm:$0xff]
    %v1526 = vld [vmem:[#allocation3 + $0x68] sm:$0xff]
    %v1527 = vld [vmem:[#allocation3 + $0x70] sm:$0xff]
    %v1528 = vld [vmem:[#allocation3 + $0x78] sm:$0xff]
    %v1529 = vlaneseq
    %v1530 = vshrl.u32 %v1529, 7
    %v1531 = vsub.s32 3, %v1530
    %v1532 = vrot.slane %v1241, %v1531
    %v1533 = vlaneseq
    %v1534 = vshrl.u32 %v1533, 7
    %v1535 = vsub.s32 3, %v1534
    %v1536 = vrot.slane %v1243, %v1535
    %v1537 = vlaneseq
    %v1538 = vshrl.u32 %v1537, 7
    %v1539 = vsub.s32 3, %v1538
    %v1540 = vrot.slane %v1245, %v1539
    %v1541 = vlaneseq
    %v1542 = vshrl.u32 %v1541, 7
    %v1543 = vsub.s32 3, %v1542
    %v1544 = vrot.slane %v1247, %v1543
    %v1545 = vmul.f32 %v1525, %v1532
    %v1546 = vmul.f32 %v1526, %v1536
    %v1547 = vmul.f32 %v1527, %v1540
    %v1548 = vmul.f32 %v1528, %v1544
    %1549 = vst [vmem:[#allocation3 + $0x60] sm:$0xff] %v1545
    %1550 = vst [vmem:[#allocation3 + $0x68] sm:$0xff] %v1546
    %1551 = vst [vmem:[#allocation3 + $0x70] sm:$0xff] %v1547
    %1552 = vst [vmem:[#allocation3 + $0x78] sm:$0xff] %v1548
    %v1553 = vld [vmem:[#allocation3 + $0x80] sm:$0xff]
    %v1554 = vld [vmem:[#allocation3 + $0x88] sm:$0xff]
    %v1555 = vld [vmem:[#allocation3 + $0x90] sm:$0xff]
    %v1556 = vld [vmem:[#allocation3 + $0x98] sm:$0xff]
    %v1557 = vlaneseq
    %v1558 = vshrl.u32 %v1557, 7
    %v1559 = vsub.s32 4, %v1558
    %v1560 = vrot.slane %v1241, %v1559
    %v1561 = vlaneseq
    %v1562 = vshrl.u32 %v1561, 7
    %v1563 = vsub.s32 4, %v1562
    %v1564 = vrot.slane %v1243, %v1563
    %v1565 = vlaneseq
    %v1566 = vshrl.u32 %v1565, 7
    %v1567 = vsub.s32 4, %v1566
    %v1568 = vrot.slane %v1245, %v1567
    %v1569 = vlaneseq
    %v1570 = vshrl.u32 %v1569, 7
    %v1571 = vsub.s32 4, %v1570
    %v1572 = vrot.slane %v1247, %v1571
    %v1573 = vmul.f32 %v1553, %v1560
    %v1574 = vmul.f32 %v1554, %v1564
    %v1575 = vmul.f32 %v1555, %v1568
    %v1576 = vmul.f32 %v1556, %v1572
    %1577 = vst [vmem:[#allocation3 + $0x80] sm:$0xff] %v1573
    %1578 = vst [vmem:[#allocation3 + $0x88] sm:$0xff] %v1574
    %1579 = vst [vmem:[#allocation3 + $0x90] sm:$0xff] %v1575
    %1580 = vst [vmem:[#allocation3 + $0x98] sm:$0xff] %v1576
    %v1581 = vld [vmem:[#allocation3 + $0xa0] sm:$0xff]
    %v1582 = vld [vmem:[#allocation3 + $0xa8] sm:$0xff]
    %v1583 = vld [vmem:[#allocation3 + $0xb0] sm:$0xff]
    %v1584 = vld [vmem:[#allocation3 + $0xb8] sm:$0xff]
    %v1585 = vlaneseq
    %v1586 = vshrl.u32 %v1585, 7
    %v1587 = vsub.s32 5, %v1586
    %v1588 = vrot.slane %v1241, %v1587
    %v1589 = vlaneseq
    %v1590 = vshrl.u32 %v1589, 7
    %v1591 = vsub.s32 5, %v1590
    %v1592 = vrot.slane %v1243, %v1591
    %v1593 = vlaneseq
    %v1594 = vshrl.u32 %v1593, 7
    %v1595 = vsub.s32 5, %v1594
    %v1596 = vrot.slane %v1245, %v1595
    %v1597 = vlaneseq
    %v1598 = vshrl.u32 %v1597, 7
    %v1599 = vsub.s32 5, %v1598
    %v1600 = vrot.slane %v1247, %v1599
    %v1601 = vmul.f32 %v1581, %v1588
    %v1602 = vmul.f32 %v1582, %v1592
    %v1603 = vmul.f32 %v1583, %v1596
    %v1604 = vmul.f32 %v1584, %v1600
    %1605 = vst [vmem:[#allocation3 + $0xa0] sm:$0xff] %v1601
    %1606 = vst [vmem:[#allocation3 + $0xa8] sm:$0xff] %v1602
    %1607 = vst [vmem:[#allocation3 + $0xb0] sm:$0xff] %v1603
    %1608 = vst [vmem:[#allocation3 + $0xb8] sm:$0xff] %v1604
    %v1609 = vld [vmem:[#allocation3 + $0xc0] sm:$0xff]
    %v1610 = vld [vmem:[#allocation3 + $0xc8] sm:$0xff]
    %v1611 = vld [vmem:[#allocation3 + $0xd0] sm:$0xff]
    %v1612 = vld [vmem:[#allocation3 + $0xd8] sm:$0xff]
    %v1613 = vlaneseq
    %v1614 = vshrl.u32 %v1613, 7
    %v1615 = vsub.s32 6, %v1614
    %v1616 = vrot.slane %v1241, %v1615
    %v1617 = vlaneseq
    %v1618 = vshrl.u32 %v1617, 7
    %v1619 = vsub.s32 6, %v1618
    %v1620 = vrot.slane %v1243, %v1619
    %v1621 = vlaneseq
    %v1622 = vshrl.u32 %v1621, 7
    %v1623 = vsub.s32 6, %v1622
    %v1624 = vrot.slane %v1245, %v1623
    %v1625 = vlaneseq
    %v1626 = vshrl.u32 %v1625, 7
    %v1627 = vsub.s32 6, %v1626
    %v1628 = vrot.slane %v1247, %v1627
    %v1629 = vmul.f32 %v1609, %v1616
    %v1630 = vmul.f32 %v1610, %v1620
    %v1631 = vmul.f32 %v1611, %v1624
    %v1632 = vmul.f32 %v1612, %v1628
    %1633 = vst [vmem:[#allocation3 + $0xc0] sm:$0xff] %v1629
    %1634 = vst [vmem:[#allocation3 + $0xc8] sm:$0xff] %v1630
    %1635 = vst [vmem:[#allocation3 + $0xd0] sm:$0xff] %v1631
    %1636 = vst [vmem:[#allocation3 + $0xd8] sm:$0xff] %v1632
    %v1637 = vld [vmem:[#allocation3 + $0xe0] sm:$0xff]
    %v1638 = vld [vmem:[#allocation3 + $0xe8] sm:$0xff]
    %v1639 = vld [vmem:[#allocation3 + $0xf0] sm:$0xff]
    %v1640 = vld [vmem:[#allocation3 + $0xf8] sm:$0xff]
    %v1641 = vlaneseq
    %v1642 = vshrl.u32 %v1641, 7
    %v1643 = vsub.s32 7, %v1642
    %v1644 = vrot.slane %v1241, %v1643
    %v1645 = vlaneseq
    %v1646 = vshrl.u32 %v1645, 7
    %v1647 = vsub.s32 7, %v1646
    %v1648 = vrot.slane %v1243, %v1647
    %v1649 = vlaneseq
    %v1650 = vshrl.u32 %v1649, 7
    %v1651 = vsub.s32 7, %v1650
    %v1652 = vrot.slane %v1245, %v1651
    %v1653 = vlaneseq
    %v1654 = vshrl.u32 %v1653, 7
    %v1655 = vsub.s32 7, %v1654
    %v1656 = vrot.slane %v1247, %v1655
    %v1657 = vmul.f32 %v1637, %v1644
    %v1658 = vmul.f32 %v1638, %v1648
    %v1659 = vmul.f32 %v1639, %v1652
    %v1660 = vmul.f32 %v1640, %v1656
    %1661 = vst [vmem:[#allocation3 + $0xe0] sm:$0xff] %v1657
    %1662 = vst [vmem:[#allocation3 + $0xe8] sm:$0xff] %v1658
    %1663 = vst [vmem:[#allocation3 + $0xf0] sm:$0xff] %v1659
    %1664 = vst [vmem:[#allocation3 + $0xf8] sm:$0xff] %v1660
    %v1665 = vld [vmem:[#allocation3 + $0x100] sm:$0xff]
    %v1666 = vld [vmem:[#allocation3 + $0x108] sm:$0xff]
    %v1667 = vld [vmem:[#allocation3 + $0x110] sm:$0xff]
    %v1668 = vld [vmem:[#allocation3 + $0x118] sm:$0xff]
    %v1669 = vlaneseq
    %v1670 = vshrl.u32 %v1669, 7
    %v1671 = vsub.s32 0, %v1670
    %v1672 = vrot.slane %v1249, %v1671
    %v1673 = vlaneseq
    %v1674 = vshrl.u32 %v1673, 7
    %v1675 = vsub.s32 0, %v1674
    %v1676 = vrot.slane %v1251, %v1675
    %v1677 = vlaneseq
    %v1678 = vshrl.u32 %v1677, 7
    %v1679 = vsub.s32 0, %v1678
    %v1680 = vrot.slane %v1253, %v1679
    %v1681 = vlaneseq
    %v1682 = vshrl.u32 %v1681, 7
    %v1683 = vsub.s32 0, %v1682
    %v1684 = vrot.slane %v1255, %v1683
    %v1685 = vmul.f32 %v1665, %v1672
    %v1686 = vmul.f32 %v1666, %v1676
    %v1687 = vmul.f32 %v1667, %v1680
    %v1688 = vmul.f32 %v1668, %v1684
    %1689 = vst [vmem:[#allocation3 + $0x100] sm:$0xff] %v1685
    %1690 = vst [vmem:[#allocation3 + $0x108] sm:$0xff] %v1686
    %1691 = vst [vmem:[#allocation3 + $0x110] sm:$0xff] %v1687
    %1692 = vst [vmem:[#allocation3 + $0x118] sm:$0xff] %v1688
    %v1693 = vld [vmem:[#allocation3] sm:$0xff]
    %v1694 = vld [vmem:[#allocation3 + $0x8] sm:$0xff]
    %v1695 = vld [vmem:[#allocation3 + $0x10] sm:$0xff]
    %v1696 = vld [vmem:[#allocation3 + $0x18] sm:$0xff]
    %v1697 = vld [vmem:[#allocation3 + $0x20] sm:$0xff]
    %v1698 = vld [vmem:[#allocation3 + $0x28] sm:$0xff]
    %v1699 = vld [vmem:[#allocation3 + $0x30] sm:$0xff]
    %v1700 = vld [vmem:[#allocation3 + $0x38] sm:$0xff]
    %v1701 = vld [vmem:[#allocation3 + $0x40] sm:$0xff]
    %v1702 = vld [vmem:[#allocation3 + $0x48] sm:$0xff]
    %v1703 = vld [vmem:[#allocation3 + $0x50] sm:$0xff]
    %v1704 = vld [vmem:[#allocation3 + $0x58] sm:$0xff]
    %v1705 = vld [vmem:[#allocation3 + $0x60] sm:$0xff]
    %v1706 = vld [vmem:[#allocation3 + $0x68] sm:$0xff]
    %v1707 = vld [vmem:[#allocation3 + $0x70] sm:$0xff]
    %v1708 = vld [vmem:[#allocation3 + $0x78] sm:$0xff]
    %v1709 = vld [vmem:[#allocation3 + $0x80] sm:$0xff]
    %v1710 = vld [vmem:[#allocation3 + $0x88] sm:$0xff]
    %v1711 = vld [vmem:[#allocation3 + $0x90] sm:$0xff]
    %v1712 = vld [vmem:[#allocation3 + $0x98] sm:$0xff]
    %v1713 = vld [vmem:[#allocation3 + $0xa0] sm:$0xff]
    %v1714 = vld [vmem:[#allocation3 + $0xa8] sm:$0xff]
    %v1715 = vld [vmem:[#allocation3 + $0xb0] sm:$0xff]
    %v1716 = vld [vmem:[#allocation3 + $0xb8] sm:$0xff]
    %v1717 = vld [vmem:[#allocation3 + $0xc0] sm:$0xff]
    %v1718 = vld [vmem:[#allocation3 + $0xc8] sm:$0xff]
    %v1719 = vld [vmem:[#allocation3 + $0xd0] sm:$0xff]
    %v1720 = vld [vmem:[#allocation3 + $0xd8] sm:$0xff]
    %v1721 = vld [vmem:[#allocation3 + $0xe0] sm:$0xff]
    %v1722 = vld [vmem:[#allocation3 + $0xe8] sm:$0xff]
    %v1723 = vld [vmem:[#allocation3 + $0xf0] sm:$0xff]
    %v1724 = vld [vmem:[#allocation3 + $0xf8] sm:$0xff]
    %v1725 = vld [vmem:[#allocation3 + $0x100] sm:$0xff]
    %v1726 = vld [vmem:[#allocation3 + $0x108] sm:$0xff]
    %v1727 = vld [vmem:[#allocation3 + $0x110] sm:$0xff]
    %v1728 = vld [vmem:[#allocation3 + $0x118] sm:$0xff]
    %v1729 = vrot.slane %v100, 2
    %v1730 = vsel %vm651, %v1729, 0
    %1732 = vmatprep.subr.mxu0 %v1694
    %1733 = vmatpush1.msra.mxu0 %v1693
    %1734 = vmatprep.subr.mxu0 %v1698
    %1735 = vmatpush1.msra.mxu0 %v1697
    %1736 = vmatprep.subr.mxu0 %v1702
    %1737 = vmatpush1.msra.mxu0 %v1701
    %1738 = vmatprep.subr.mxu0 %v1706
    %1739 = vmatpush1.msra.mxu0 %v1705
    %1740 = vmatprep.subr.mxu0 %v1710
    %1741 = vmatpush1.msra.mxu0 %v1709
    %1742 = vmatprep.subr.mxu0 %v1714
    %1743 = vmatpush1.msra.mxu0 %v1713
    %1744 = vmatprep.subr.mxu0 %v1718
    %1745 = vmatpush1.msra.mxu0 %v1717
    %1746 = vmatprep.subr.mxu0 %v1722
    %1747 = vmatpush1.msra.mxu0 %v1721
    %1748 = vmatprep.subr.mxu0 %v1726
    %1749 = vmatpush1.msra.mxu0 %v1725
    %1750 = vmatprep.subr.mxu0 0.0
    %1751 = vmatpush1.msra.mxu0 0.0
    %1752 = vmatprep.subr.mxu0 0.0
    %1753 = vmatpush1.msra.mxu0 0.0
    %1754 = vmatprep.subr.mxu0 0.0
    %1755 = vmatpush1.msra.mxu0 0.0
    %1756 = vmatprep.subr.mxu0 0.0
    %1757 = vmatpush1.msra.mxu0 0.0
    %1758 = vmatprep.subr.mxu0 0.0
    %1759 = vmatpush1.msra.mxu0 0.0
    %1760 = vmatprep.subr.mxu0 0.0
    %1761 = vmatpush1.msra.mxu0 0.0
    %1762 = vmatprep.subr.mxu0 0.0
    %1763 = vmatpush1.msra.mxu0 0.0
    %1764 = vmatprep.subr.mxu0 0.0
    %1765 = vmatpush1.msra.mxu0 0.0
    %1766 = vmatprep.subr.mxu0 0.0
    %1767 = vmatpush1.msra.mxu0 0.0
    %1768 = vmatprep.subr.mxu0 0.0
    %1769 = vmatpush1.msra.mxu0 0.0
    %1770 = vmatprep.subr.mxu0 0.0
    %1771 = vmatpush1.msra.mxu0 0.0
    %1772 = vmatprep.subr.mxu0 0.0
    %1773 = vmatpush1.msra.mxu0 0.0
    %1774 = vmatprep.subr.mxu0 0.0
    %1775 = vmatpush1.msra.mxu0 0.0
    %1776 = vmatprep.subr.mxu0 0.0
    %1777 = vmatpush1.msra.mxu0 0.0
    %1778 = vmatprep.subr.mxu0 0.0
    %1779 = vmatpush1.msra.mxu0 0.0
    %1780 = vmatprep.subr.mxu0 0.0
    %1781 = vmatpush1.msra.mxu0 0.0
    %1782 = vmatprep.subr.mxu0 0.0
    %1783 = vmatpush1.msra.mxu0 0.0
    %1784 = vmatprep.subr.mxu0 0.0
    %1785 = vmatpush1.msra.mxu0 0.0
    %1786 = vmatprep.subr.mxu0 0.0
    %1787 = vmatpush1.msra.mxu0 0.0
    %1788 = vmatprep.subr.mxu0 0.0
    %1789 = vmatpush1.msra.mxu0 0.0
    %1790 = vmatprep.subr.mxu0 0.0
    %1791 = vmatpush1.msra.mxu0 0.0
    %1792 = vmatprep.subr.mxu0 0.0
    %1793 = vmatpush1.msra.mxu0 0.0
    %1794 = vmatprep.subr.mxu0 0.0
    %1795 = vmatpush1.msra.mxu0 0.0
    %1796 = vmatprep.mubr.f32.mxu0 0.0
    %1797 = vmatmul.mubr.f32.gmra.mrb[0].mxu0 %v1730
    %v1798 = vpop.f32.mrb[0].mxu0
    %v1799 = vadd.f32 0.0, %v1798
    %v1800 = vpop.f32.mrb[0].mxu0
    %v1801 = vadd.f32 0.0, %v1800
    %1802 = vdwg.mxu0
    %1803 = vmatprep.subr.mxu0 %v1696
    %1804 = vmatpush1.msra.mxu0 %v1695
    %1805 = vmatprep.subr.mxu0 %v1700
    %1806 = vmatpush1.msra.mxu0 %v1699
    %1807 = vmatprep.subr.mxu0 %v1704
    %1808 = vmatpush1.msra.mxu0 %v1703
    %1809 = vmatprep.subr.mxu0 %v1708
    %1810 = vmatpush1.msra.mxu0 %v1707
    %1811 = vmatprep.subr.mxu0 %v1712
    %1812 = vmatpush1.msra.mxu0 %v1711
    %1813 = vmatprep.subr.mxu0 %v1716
    %1814 = vmatpush1.msra.mxu0 %v1715
    %1815 = vmatprep.subr.mxu0 %v1720
    %1816 = vmatpush1.msra.mxu0 %v1719
    %1817 = vmatprep.subr.mxu0 %v1724
    %1818 = vmatpush1.msra.mxu0 %v1723
    %1819 = vmatprep.subr.mxu0 %v1728
    %1820 = vmatpush1.msra.mxu0 %v1727
    %1821 = vmatprep.subr.mxu0 0.0
    %1822 = vmatpush1.msra.mxu0 0.0
    %1823 = vmatprep.subr.mxu0 0.0
    %1824 = vmatpush1.msra.mxu0 0.0
    %1825 = vmatprep.subr.mxu0 0.0
    %1826 = vmatpush1.msra.mxu0 0.0
    %1827 = vmatprep.subr.mxu0 0.0
    %1828 = vmatpush1.msra.mxu0 0.0
    %1829 = vmatprep.subr.mxu0 0.0
    %1830 = vmatpush1.msra.mxu0 0.0
    %1831 = vmatprep.subr.mxu0 0.0
    %1832 = vmatpush1.msra.mxu0 0.0
    %1833 = vmatprep.subr.mxu0 0.0
    %1834 = vmatpush1.msra.mxu0 0.0
    %1835 = vmatprep.subr.mxu0 0.0
    %1836 = vmatpush1.msra.mxu0 0.0
    %1837 = vmatprep.subr.mxu0 0.0
    %1838 = vmatpush1.msra.mxu0 0.0
    %1839 = vmatprep.subr.mxu0 0.0
    %1840 = vmatpush1.msra.mxu0 0.0
    %1841 = vmatprep.subr.mxu0 0.0
    %1842 = vmatpush1.msra.mxu0 0.0
    %1843 = vmatprep.subr.mxu0 0.0
    %1844 = vmatpush1.msra.mxu0 0.0
    %1845 = vmatprep.subr.mxu0 0.0
    %1846 = vmatpush1.msra.mxu0 0.0
    %1847 = vmatprep.subr.mxu0 0.0
    %1848 = vmatpush1.msra.mxu0 0.0
    %1849 = vmatprep.subr.mxu0 0.0
    %1850 = vmatpush1.msra.mxu0 0.0
    %1851 = vmatprep.subr.mxu0 0.0
    %1852 = vmatpush1.msra.mxu0 0.0
    %1853 = vmatprep.subr.mxu0 0.0
    %1854 = vmatpush1.msra.mxu0 0.0
    %1855 = vmatprep.subr.mxu0 0.0
    %1856 = vmatpush1.msra.mxu0 0.0
    %1857 = vmatprep.subr.mxu0 0.0
    %1858 = vmatpush1.msra.mxu0 0.0
    %1859 = vmatprep.subr.mxu0 0.0
    %1860 = vmatpush1.msra.mxu0 0.0
    %1861 = vmatprep.subr.mxu0 0.0
    %1862 = vmatpush1.msra.mxu0 0.0
    %1863 = vmatprep.subr.mxu0 0.0
    %1864 = vmatpush1.msra.mxu0 0.0
    %1865 = vmatprep.subr.mxu0 0.0
    %1866 = vmatpush1.msra.mxu0 0.0
    %1867 = vmatprep.mubr.f32.mxu0 0.0
    %1868 = vmatmul.mubr.f32.gmra.mrb[0].mxu0 %v1730
    %v1869 = vpop.f32.mrb[0].mxu0
    %v1870 = vadd.f32 0.0, %v1869
    %v1871 = vpop.f32.mrb[0].mxu0
    %v1872 = vadd.f32 0.0, %v1871
    %1873 = vdwg.mxu0
    %1875 = vset.pattern.permute.xlu0 0
    %1876 = vperm.xlu0 %1875, %v1438
    %v1877 = vpop.permute.xlu0 %1876
    %v1879 = vadd.f32 %v1799, %v1877
    %v1880 = vadd.f32 %v1801, %v1877
    %vm1881 = vcmp.ge.f32.partialorder %v1879, 0.0
    %vm1882 = vcmp.ge.f32.partialorder %v1880, 0.0
    %v1883 = vmul.f32 %v1879, 0.01
    %v1884 = vmul.f32 %v1880, 0.01
    %v1885 = vsel %vm1881, %v1879, %v1883
    %v1886 = vsel %vm1882, %v1880, %v1884
    %1887 = vst [vmem:[#allocation2 + $0x8] sm:$0xf] %v1885
    %1888 = vst [vmem:[#allocation2 + $0x10] sm:$0xf] %v1886
    %1889 = vset.pattern.permute.xlu0 1
    %1890 = vperm.xlu0 %1889, %v1438
    %v1891 = vpop.permute.xlu0 %1890
    %v1893 = vadd.f32 %v1870, %v1891
    %v1894 = vadd.f32 %v1872, %v1891
    %vm1895 = vcmp.ge.f32.partialorder %v1893, 0.0
    %vm1896 = vcmp.ge.f32.partialorder %v1894, 0.0
    %v1897 = vmul.f32 %v1893, 0.01
    %v1898 = vmul.f32 %v1894, 0.01
    %v1899 = vsel %vm1895, %v1893, %v1897
    %v1900 = vsel %vm1896, %v1894, %v1898
    %1901 = vst [vmem:[#allocation2 + $0x18] sm:$0xf] %v1899
    %1902 = vst [vmem:[#allocation2 + $0x20] sm:$0xf] %v1900
    %s1903 = scalar_lea.vmem [#allocation9], 16
    %v1904 = vld [vmem:[%s1903] sm:$0xff]
    %v1905 = vld [vmem:[%s1903 + $0x8] sm:$0xff]
    %s1906 = scalar_lea.vmem [#allocation10], 16
    %v1907 = vld [vmem:[%s1906] sm:$0xff]
    %v1908 = vld [vmem:[%s1906 + $0x8] sm:$0xff]
    %v1909 = vld [vmem:[#allocation2] sm:$0xff]
    %v1910 = vld [vmem:[#allocation2 + $0x8] sm:$0xff]
    %v1911 = vld [vmem:[#allocation2 + $0x10] sm:$0xff]
    %v1912 = vld [vmem:[#allocation2 + $0x18] sm:$0xff]
    %v1913 = vld [vmem:[#allocation2 + $0x20] sm:$0xff]
    %v1914 = vld [vmem:[#allocation7] sm:$0xff]
    %v1915 = vld [vmem:[#allocation7 + $0x8] sm:$0xff]
    %v1916 = vld [vmem:[#allocation7 + $0x10] sm:$0xff]
    %v1917 = vld [vmem:[#allocation7 + $0x18] sm:$0xff]
    %1922 = vrot.lane.b32.xlu0 %v1914, 111
    %v1923 = vpop.permute.xlu0 %1922
    %1924 = vrot.lane.b32.xlu0 %v1915, 111
    %v1925 = vpop.permute.xlu0 %1924
    %1926 = vrot.lane.b32.xlu0 %v1916, 111
    %v1927 = vpop.permute.xlu0 %1926
    %1928 = vrot.lane.b32.xlu0 %v1917, 111
    %v1929 = vpop.permute.xlu0 %1928
    %v1930 = vsel %vm124, %v1923, %v1925
    %v1931 = vsel %vm124, %v1925, %v1927
    %v1932 = vsel %vm124, %v1927, %v1929
    %v1938 = vmul.f32 %v1909, %v1923
    %v1939 = vmul.f32 %v1910, %v1930
    %v1940 = vmul.f32 %v1911, %v1931
    %v1941 = vmul.f32 %v1912, %v1932
    %v1942 = vmul.f32 %v1913, %v1929
    %1948 = vrot.lane.b32.xlu0 %v1938, 17
    %v1949 = vpop.permute.xlu0 %1948
    %1950 = vrot.lane.b32.xlu0 %v1939, 17
    %v1951 = vpop.permute.xlu0 %1950
    %1952 = vrot.lane.b32.xlu0 %v1940, 17
    %v1953 = vpop.permute.xlu0 %1952
    %1954 = vrot.lane.b32.xlu0 %v1941, 17
    %v1955 = vpop.permute.xlu0 %1954
    %1956 = vrot.lane.b32.xlu0 %v1942, 17
    %v1957 = vpop.permute.xlu0 %1956
    %v1958 = vsel %vm153, %v1949, %v1951
    %v1959 = vsel %vm153, %v1951, %v1953
    %v1960 = vsel %vm153, %v1953, %v1955
    %v1961 = vsel %vm153, %v1955, %v1957
    %1966 = vst [vmem:[#allocation3] sm:$0xff] %v1958
    %1967 = vst [vmem:[#allocation3 + $0x8] sm:$0xff] %v1959
    %1968 = vst [vmem:[#allocation3 + $0x10] sm:$0xff] %v1960
    %1969 = vst [vmem:[#allocation3 + $0x18] sm:$0xff] %v1961
    %v1970 = vld [vmem:[#allocation2] sm:$0xff]
    %v1971 = vld [vmem:[#allocation2 + $0x8] sm:$0xff]
    %v1972 = vld [vmem:[#allocation2 + $0x10] sm:$0xff]
    %v1973 = vld [vmem:[#allocation2 + $0x18] sm:$0xff]
    %v1974 = vld [vmem:[#allocation2 + $0x20] sm:$0xff]
    %v1975 = vld [vmem:[#allocation7 + $0x20] sm:$0xff]
    %v1976 = vld [vmem:[#allocation7 + $0x28] sm:$0xff]
    %v1977 = vld [vmem:[#allocation7 + $0x30] sm:$0xff]
    %v1978 = vld [vmem:[#allocation7 + $0x38] sm:$0xff]
    %1983 = vrot.lane.b32.xlu0 %v1975, 112
    %v1984 = vpop.permute.xlu0 %1983
    %1985 = vrot.lane.b32.xlu0 %v1976, 112
    %v1986 = vpop.permute.xlu0 %1985
    %1987 = vrot.lane.b32.xlu0 %v1977, 112
    %v1988 = vpop.permute.xlu0 %1987
    %1989 = vrot.lane.b32.xlu0 %v1978, 112
    %v1990 = vpop.permute.xlu0 %1989
    %v1991 = vsel %vm187, %v1984, %v1986
    %v1992 = vsel %vm187, %v1986, %v1988
    %v1993 = vsel %vm187, %v1988, %v1990
    %v1999 = vmul.f32 %v1970, %v1984
    %v2000 = vmul.f32 %v1971, %v1991
    %v2001 = vmul.f32 %v1972, %v1992
    %v2002 = vmul.f32 %v1973, %v1993
    %v2003 = vmul.f32 %v1974, %v1990
    %2009 = vrot.lane.b32.xlu0 %v1999, 16
    %v2010 = vpop.permute.xlu0 %2009
    %2011 = vrot.lane.b32.xlu0 %v2000, 16
    %v2012 = vpop.permute.xlu0 %2011
    %2013 = vrot.lane.b32.xlu0 %v2001, 16
    %v2014 = vpop.permute.xlu0 %2013
    %2015 = vrot.lane.b32.xlu0 %v2002, 16
    %v2016 = vpop.permute.xlu0 %2015
    %2017 = vrot.lane.b32.xlu0 %v2003, 16
    %v2018 = vpop.permute.xlu0 %2017
    %v2019 = vsel %vm216, %v2010, %v2012
    %v2020 = vsel %vm216, %v2012, %v2014
    %v2021 = vsel %vm216, %v2014, %v2016
    %v2022 = vsel %vm216, %v2016, %v2018
    %2027 = vst [vmem:[#allocation3 + $0x20] sm:$0xff] %v2019
    %2028 = vst [vmem:[#allocation3 + $0x28] sm:$0xff] %v2020
    %2029 = vst [vmem:[#allocation3 + $0x30] sm:$0xff] %v2021
    %2030 = vst [vmem:[#allocation3 + $0x38] sm:$0xff] %v2022
    %v2031 = vld [vmem:[#allocation2] sm:$0xff]
    %v2032 = vld [vmem:[#allocation2 + $0x8] sm:$0xff]
    %v2033 = vld [vmem:[#allocation2 + $0x10] sm:$0xff]
    %v2034 = vld [vmem:[#allocation2 + $0x18] sm:$0xff]
    %v2035 = vld [vmem:[#allocation2 + $0x20] sm:$0xff]
    %v2036 = vld [vmem:[#allocation7 + $0x40] sm:$0xff]
    %v2037 = vld [vmem:[#allocation7 + $0x48] sm:$0xff]
    %v2038 = vld [vmem:[#allocation7 + $0x50] sm:$0xff]
    %v2039 = vld [vmem:[#allocation7 + $0x58] sm:$0xff]
    %2044 = vrot.lane.b32.xlu0 %v2036, 113
    %v2045 = vpop.permute.xlu0 %2044
    %2046 = vrot.lane.b32.xlu0 %v2037, 113
    %v2047 = vpop.permute.xlu0 %2046
    %2048 = vrot.lane.b32.xlu0 %v2038, 113
    %v2049 = vpop.permute.xlu0 %2048
    %2050 = vrot.lane.b32.xlu0 %v2039, 113
    %v2051 = vpop.permute.xlu0 %2050
    %v2052 = vsel %vm250, %v2045, %v2047
    %v2053 = vsel %vm250, %v2047, %v2049
    %v2054 = vsel %vm250, %v2049, %v2051
    %v2060 = vmul.f32 %v2031, %v2045
    %v2061 = vmul.f32 %v2032, %v2052
    %v2062 = vmul.f32 %v2033, %v2053
    %v2063 = vmul.f32 %v2034, %v2054
    %v2064 = vmul.f32 %v2035, %v2051
    %2070 = vrot.lane.b32.xlu0 %v2060, 15
    %v2071 = vpop.permute.xlu0 %2070
    %2072 = vrot.lane.b32.xlu0 %v2061, 15
    %v2073 = vpop.permute.xlu0 %2072
    %2074 = vrot.lane.b32.xlu0 %v2062, 15
    %v2075 = vpop.permute.xlu0 %2074
    %2076 = vrot.lane.b32.xlu0 %v2063, 15
    %v2077 = vpop.permute.xlu0 %2076
    %2078 = vrot.lane.b32.xlu0 %v2064, 15
    %v2079 = vpop.permute.xlu0 %2078
    %v2080 = vsel %vm279, %v2071, %v2073
    %v2081 = vsel %vm279, %v2073, %v2075
    %v2082 = vsel %vm279, %v2075, %v2077
    %v2083 = vsel %vm279, %v2077, %v2079
    %2088 = vst [vmem:[#allocation3 + $0x40] sm:$0xff] %v2080
    %2089 = vst [vmem:[#allocation3 + $0x48] sm:$0xff] %v2081
    %2090 = vst [vmem:[#allocation3 + $0x50] sm:$0xff] %v2082
    %2091 = vst [vmem:[#allocation3 + $0x58] sm:$0xff] %v2083
    %v2092 = vld [vmem:[#allocation2] sm:$0xff]
    %v2093 = vld [vmem:[#allocation2 + $0x8] sm:$0xff]
    %v2094 = vld [vmem:[#allocation2 + $0x10] sm:$0xff]
    %v2095 = vld [vmem:[#allocation2 + $0x18] sm:$0xff]
    %v2096 = vld [vmem:[#allocation2 + $0x20] sm:$0xff]
    %v2097 = vld [vmem:[#allocation7 + $0x60] sm:$0xff]
    %v2098 = vld [vmem:[#allocation7 + $0x68] sm:$0xff]
    %v2099 = vld [vmem:[#allocation7 + $0x70] sm:$0xff]
    %v2100 = vld [vmem:[#allocation7 + $0x78] sm:$0xff]
    %2105 = vrot.lane.b32.xlu0 %v2097, 127
    %v2106 = vpop.permute.xlu0 %2105
    %2107 = vrot.lane.b32.xlu0 %v2098, 127
    %v2108 = vpop.permute.xlu0 %2107
    %2109 = vrot.lane.b32.xlu0 %v2099, 127
    %v2110 = vpop.permute.xlu0 %2109
    %2111 = vrot.lane.b32.xlu0 %v2100, 127
    %v2112 = vpop.permute.xlu0 %2111
    %v2113 = vsel %vm313, %v2106, %v2108
    %v2114 = vsel %vm313, %v2108, %v2110
    %v2115 = vsel %vm313, %v2110, %v2112
    %v2121 = vmul.f32 %v2092, %v2106
    %v2122 = vmul.f32 %v2093, %v2113
    %v2123 = vmul.f32 %v2094, %v2114
    %v2124 = vmul.f32 %v2095, %v2115
    %v2125 = vmul.f32 %v2096, %v2112
    %2131 = vrot.lane.b32.xlu0 %v2121, 1
    %v2132 = vpop.permute.xlu0 %2131
    %2133 = vrot.lane.b32.xlu0 %v2122, 1
    %v2134 = vpop.permute.xlu0 %2133
    %2135 = vrot.lane.b32.xlu0 %v2123, 1
    %v2136 = vpop.permute.xlu0 %2135
    %2137 = vrot.lane.b32.xlu0 %v2124, 1
    %v2138 = vpop.permute.xlu0 %2137
    %2139 = vrot.lane.b32.xlu0 %v2125, 1
    %v2140 = vpop.permute.xlu0 %2139
    %v2141 = vsel %vm342, %v2132, %v2134
    %v2142 = vsel %vm342, %v2134, %v2136
    %v2143 = vsel %vm342, %v2136, %v2138
    %v2144 = vsel %vm342, %v2138, %v2140
    %2149 = vst [vmem:[#allocation3 + $0x60] sm:$0xff] %v2141
    %2150 = vst [vmem:[#allocation3 + $0x68] sm:$0xff] %v2142
    %2151 = vst [vmem:[#allocation3 + $0x70] sm:$0xff] %v2143
    %2152 = vst [vmem:[#allocation3 + $0x78] sm:$0xff] %v2144
    %v2153 = vld [vmem:[#allocation2 + $0x8] sm:$0xff]
    %v2154 = vld [vmem:[#allocation2 + $0x10] sm:$0xff]
    %v2155 = vld [vmem:[#allocation2 + $0x18] sm:$0xff]
    %v2156 = vld [vmem:[#allocation2 + $0x20] sm:$0xff]
    %v2157 = vld [vmem:[#allocation7 + $0x80] sm:$0xff]
    %v2158 = vld [vmem:[#allocation7 + $0x88] sm:$0xff]
    %v2159 = vld [vmem:[#allocation7 + $0x90] sm:$0xff]
    %v2160 = vld [vmem:[#allocation7 + $0x98] sm:$0xff]
    %v2161 = vmul.f32 %v2153, %v2157
    %v2162 = vmul.f32 %v2154, %v2158
    %v2163 = vmul.f32 %v2155, %v2159
    %v2164 = vmul.f32 %v2156, %v2160
    %2165 = vst [vmem:[#allocation3 + $0x80] sm:$0xff] %v2161
    %2166 = vst [vmem:[#allocation3 + $0x88] sm:$0xff] %v2162
    %2167 = vst [vmem:[#allocation3 + $0x90] sm:$0xff] %v2163
    %2168 = vst [vmem:[#allocation3 + $0x98] sm:$0xff] %v2164
    %v2169 = vld [vmem:[#allocation2 + $0x8] sm:$0xff]
    %v2170 = vld [vmem:[#allocation2 + $0x10] sm:$0xff]
    %v2171 = vld [vmem:[#allocation2 + $0x18] sm:$0xff]
    %v2172 = vld [vmem:[#allocation2 + $0x20] sm:$0xff]
    %v2173 = vld [vmem:[#allocation2 + $0x28] sm:$0xff]
    %v2174 = vld [vmem:[#allocation7 + $0xa0] sm:$0xff]
    %v2175 = vld [vmem:[#allocation7 + $0xa8] sm:$0xff]
    %v2176 = vld [vmem:[#allocation7 + $0xb0] sm:$0xff]
    %v2177 = vld [vmem:[#allocation7 + $0xb8] sm:$0xff]
    %2182 = vrot.lane.b32.xlu0 %v2174, 1
    %v2183 = vpop.permute.xlu0 %2182
    %2184 = vrot.lane.b32.xlu0 %v2175, 1
    %v2185 = vpop.permute.xlu0 %2184
    %2186 = vrot.lane.b32.xlu0 %v2176, 1
    %v2187 = vpop.permute.xlu0 %2186
    %2188 = vrot.lane.b32.xlu0 %v2177, 1
    %v2189 = vpop.permute.xlu0 %2188
    %v2190 = vsel %vm342, %v2183, %v2185
    %v2191 = vsel %vm342, %v2185, %v2187
    %v2192 = vsel %vm342, %v2187, %v2189
    %v2198 = vmul.f32 %v2169, %v2183
    %v2199 = vmul.f32 %v2170, %v2190
    %v2200 = vmul.f32 %v2171, %v2191
    %v2201 = vmul.f32 %v2172, %v2192
    %v2202 = vmul.f32 %v2173, %v2189
    %2208 = vrot.lane.b32.xlu0 %v2198, 127
    %v2209 = vpop.permute.xlu0 %2208
    %2210 = vrot.lane.b32.xlu0 %v2199, 127
    %v2211 = vpop.permute.xlu0 %2210
    %2212 = vrot.lane.b32.xlu0 %v2200, 127
    %v2213 = vpop.permute.xlu0 %2212
    %2214 = vrot.lane.b32.xlu0 %v2201, 127
    %v2215 = vpop.permute.xlu0 %2214
    %2216 = vrot.lane.b32.xlu0 %v2202, 127
    %v2217 = vpop.permute.xlu0 %2216
    %v2218 = vsel %vm313, %v2209, %v2211
    %v2219 = vsel %vm313, %v2211, %v2213
    %v2220 = vsel %vm313, %v2213, %v2215
    %v2221 = vsel %vm313, %v2215, %v2217
    %2226 = vst [vmem:[#allocation3 + $0xa0] sm:$0xff] %v2218
    %2227 = vst [vmem:[#allocation3 + $0xa8] sm:$0xff] %v2219
    %2228 = vst [vmem:[#allocation3 + $0xb0] sm:$0xff] %v2220
    %2229 = vst [vmem:[#allocation3 + $0xb8] sm:$0xff] %v2221
    %v2230 = vld [vmem:[#allocation2 + $0x8] sm:$0xff]
    %v2231 = vld [vmem:[#allocation2 + $0x10] sm:$0xff]
    %v2232 = vld [vmem:[#allocation2 + $0x18] sm:$0xff]
    %v2233 = vld [vmem:[#allocation2 + $0x20] sm:$0xff]
    %v2234 = vld [vmem:[#allocation2 + $0x28] sm:$0xff]
    %v2235 = vld [vmem:[#allocation7 + $0xc0] sm:$0xff]
    %v2236 = vld [vmem:[#allocation7 + $0xc8] sm:$0xff]
    %v2237 = vld [vmem:[#allocation7 + $0xd0] sm:$0xff]
    %v2238 = vld [vmem:[#allocation7 + $0xd8] sm:$0xff]
    %2243 = vrot.lane.b32.xlu0 %v2235, 15
    %v2244 = vpop.permute.xlu0 %2243
    %2245 = vrot.lane.b32.xlu0 %v2236, 15
    %v2246 = vpop.permute.xlu0 %2245
    %2247 = vrot.lane.b32.xlu0 %v2237, 15
    %v2248 = vpop.permute.xlu0 %2247
    %2249 = vrot.lane.b32.xlu0 %v2238, 15
    %v2250 = vpop.permute.xlu0 %2249
    %v2251 = vsel %vm279, %v2244, %v2246
    %v2252 = vsel %vm279, %v2246, %v2248
    %v2253 = vsel %vm279, %v2248, %v2250
    %v2259 = vmul.f32 %v2230, %v2244
    %v2260 = vmul.f32 %v2231, %v2251
    %v2261 = vmul.f32 %v2232, %v2252
    %v2262 = vmul.f32 %v2233, %v2253
    %v2263 = vmul.f32 %v2234, %v2250
    %2269 = vrot.lane.b32.xlu0 %v2259, 113
    %v2270 = vpop.permute.xlu0 %2269
    %2271 = vrot.lane.b32.xlu0 %v2260, 113
    %v2272 = vpop.permute.xlu0 %2271
    %2273 = vrot.lane.b32.xlu0 %v2261, 113
    %v2274 = vpop.permute.xlu0 %2273
    %2275 = vrot.lane.b32.xlu0 %v2262, 113
    %v2276 = vpop.permute.xlu0 %2275
    %2277 = vrot.lane.b32.xlu0 %v2263, 113
    %v2278 = vpop.permute.xlu0 %2277
    %v2279 = vsel %vm250, %v2270, %v2272
    %v2280 = vsel %vm250, %v2272, %v2274
    %v2281 = vsel %vm250, %v2274, %v2276
    %v2282 = vsel %vm250, %v2276, %v2278
    %2287 = vst [vmem:[#allocation3 + $0xc0] sm:$0xff] %v2279
    %2288 = vst [vmem:[#allocation3 + $0xc8] sm:$0xff] %v2280
    %2289 = vst [vmem:[#allocation3 + $0xd0] sm:$0xff] %v2281
    %2290 = vst [vmem:[#allocation3 + $0xd8] sm:$0xff] %v2282
    %v2291 = vld [vmem:[#allocation2 + $0x8] sm:$0xff]
    %v2292 = vld [vmem:[#allocation2 + $0x10] sm:$0xff]
    %v2293 = vld [vmem:[#allocation2 + $0x18] sm:$0xff]
    %v2294 = vld [vmem:[#allocation2 + $0x20] sm:$0xff]
    %v2295 = vld [vmem:[#allocation2 + $0x28] sm:$0xff]
    %v2296 = vld [vmem:[#allocation7 + $0xe0] sm:$0xff]
    %v2297 = vld [vmem:[#allocation7 + $0xe8] sm:$0xff]
    %v2298 = vld [vmem:[#allocation7 + $0xf0] sm:$0xff]
    %v2299 = vld [vmem:[#allocation7 + $0xf8] sm:$0xff]
    %2304 = vrot.lane.b32.xlu0 %v2296, 16
    %v2305 = vpop.permute.xlu0 %2304
    %2306 = vrot.lane.b32.xlu0 %v2297, 16
    %v2307 = vpop.permute.xlu0 %2306
    %2308 = vrot.lane.b32.xlu0 %v2298, 16
    %v2309 = vpop.permute.xlu0 %2308
    %2310 = vrot.lane.b32.xlu0 %v2299, 16
    %v2311 = vpop.permute.xlu0 %2310
    %v2312 = vsel %vm216, %v2305, %v2307
    %v2313 = vsel %vm216, %v2307, %v2309
    %v2314 = vsel %vm216, %v2309, %v2311
    %v2320 = vmul.f32 %v2291, %v2305
    %v2321 = vmul.f32 %v2292, %v2312
    %v2322 = vmul.f32 %v2293, %v2313
    %v2323 = vmul.f32 %v2294, %v2314
    %v2324 = vmul.f32 %v2295, %v2311
    %2330 = vrot.lane.b32.xlu0 %v2320, 112
    %v2331 = vpop.permute.xlu0 %2330
    %2332 = vrot.lane.b32.xlu0 %v2321, 112
    %v2333 = vpop.permute.xlu0 %2332
    %2334 = vrot.lane.b32.xlu0 %v2322, 112
    %v2335 = vpop.permute.xlu0 %2334
    %2336 = vrot.lane.b32.xlu0 %v2323, 112
    %v2337 = vpop.permute.xlu0 %2336
    %2338 = vrot.lane.b32.xlu0 %v2324, 112
    %v2339 = vpop.permute.xlu0 %2338
    %v2340 = vsel %vm187, %v2331, %v2333
    %v2341 = vsel %vm187, %v2333, %v2335
    %v2342 = vsel %vm187, %v2335, %v2337
    %v2343 = vsel %vm187, %v2337, %v2339
    %2348 = vst [vmem:[#allocation3 + $0xe0] sm:$0xff] %v2340
    %2349 = vst [vmem:[#allocation3 + $0xe8] sm:$0xff] %v2341
    %2350 = vst [vmem:[#allocation3 + $0xf0] sm:$0xff] %v2342
    %2351 = vst [vmem:[#allocation3 + $0xf8] sm:$0xff] %v2343
    %v2352 = vld [vmem:[#allocation2 + $0x8] sm:$0xff]
    %v2353 = vld [vmem:[#allocation2 + $0x10] sm:$0xff]
    %v2354 = vld [vmem:[#allocation2 + $0x18] sm:$0xff]
    %v2355 = vld [vmem:[#allocation2 + $0x20] sm:$0xff]
    %v2356 = vld [vmem:[#allocation2 + $0x28] sm:$0xff]
    %v2357 = vld [vmem:[#allocation7 + $0x100] sm:$0xff]
    %v2358 = vld [vmem:[#allocation7 + $0x108] sm:$0xff]
    %v2359 = vld [vmem:[#allocation7 + $0x110] sm:$0xff]
    %v2360 = vld [vmem:[#allocation7 + $0x118] sm:$0xff]
    %2365 = vrot.lane.b32.xlu0 %v2357, 17
    %v2366 = vpop.permute.xlu0 %2365
    %2367 = vrot.lane.b32.xlu0 %v2358, 17
    %v2368 = vpop.permute.xlu0 %2367
    %2369 = vrot.lane.b32.xlu0 %v2359, 17
    %v2370 = vpop.permute.xlu0 %2369
    %2371 = vrot.lane.b32.xlu0 %v2360, 17
    %v2372 = vpop.permute.xlu0 %2371
    %v2373 = vsel %vm153, %v2366, %v2368
    %v2374 = vsel %vm153, %v2368, %v2370
    %v2375 = vsel %vm153, %v2370, %v2372
    %v2381 = vmul.f32 %v2352, %v2366
    %v2382 = vmul.f32 %v2353, %v2373
    %v2383 = vmul.f32 %v2354, %v2374
    %v2384 = vmul.f32 %v2355, %v2375
    %v2385 = vmul.f32 %v2356, %v2372
    %2391 = vrot.lane.b32.xlu0 %v2381, 111
    %v2392 = vpop.permute.xlu0 %2391
    %2393 = vrot.lane.b32.xlu0 %v2382, 111
    %v2394 = vpop.permute.xlu0 %2393
    %2395 = vrot.lane.b32.xlu0 %v2383, 111
    %v2396 = vpop.permute.xlu0 %2395
    %2397 = vrot.lane.b32.xlu0 %v2384, 111
    %v2398 = vpop.permute.xlu0 %2397
    %2399 = vrot.lane.b32.xlu0 %v2385, 111
    %v2400 = vpop.permute.xlu0 %2399
    %v2401 = vsel %vm124, %v2392, %v2394
    %v2402 = vsel %vm124, %v2394, %v2396
    %v2403 = vsel %vm124, %v2396, %v2398
    %v2404 = vsel %vm124, %v2398, %v2400
    %2409 = vst [vmem:[#allocation3 + $0x100] sm:$0xff] %v2401
    %2410 = vst [vmem:[#allocation3 + $0x108] sm:$0xff] %v2402
    %2411 = vst [vmem:[#allocation3 + $0x110] sm:$0xff] %v2403
    %2412 = vst [vmem:[#allocation3 + $0x118] sm:$0xff] %v2404
    %v2413 = vld [vmem:[#allocation3] sm:$0xff]
    %v2414 = vld [vmem:[#allocation3 + $0x8] sm:$0xff]
    %v2415 = vld [vmem:[#allocation3 + $0x10] sm:$0xff]
    %v2416 = vld [vmem:[#allocation3 + $0x18] sm:$0xff]
    %v2417 = vld [vmem:[#allocation3 + $0x20] sm:$0xff]
    %v2418 = vld [vmem:[#allocation3 + $0x28] sm:$0xff]
    %v2419 = vld [vmem:[#allocation3 + $0x30] sm:$0xff]
    %v2420 = vld [vmem:[#allocation3 + $0x38] sm:$0xff]
    %v2421 = vld [vmem:[#allocation3 + $0x40] sm:$0xff]
    %v2422 = vld [vmem:[#allocation3 + $0x48] sm:$0xff]
    %v2423 = vld [vmem:[#allocation3 + $0x50] sm:$0xff]
    %v2424 = vld [vmem:[#allocation3 + $0x58] sm:$0xff]
    %v2425 = vld [vmem:[#allocation3 + $0x60] sm:$0xff]
    %v2426 = vld [vmem:[#allocation3 + $0x68] sm:$0xff]
    %v2427 = vld [vmem:[#allocation3 + $0x70] sm:$0xff]
    %v2428 = vld [vmem:[#allocation3 + $0x78] sm:$0xff]
    %v2429 = vld [vmem:[#allocation3 + $0x80] sm:$0xff]
    %v2430 = vld [vmem:[#allocation3 + $0x88] sm:$0xff]
    %v2431 = vld [vmem:[#allocation3 + $0x90] sm:$0xff]
    %v2432 = vld [vmem:[#allocation3 + $0x98] sm:$0xff]
    %v2433 = vld [vmem:[#allocation3 + $0xa0] sm:$0xff]
    %v2434 = vld [vmem:[#allocation3 + $0xa8] sm:$0xff]
    %v2435 = vld [vmem:[#allocation3 + $0xb0] sm:$0xff]
    %v2436 = vld [vmem:[#allocation3 + $0xb8] sm:$0xff]
    %v2437 = vld [vmem:[#allocation3 + $0xc0] sm:$0xff]
    %v2438 = vld [vmem:[#allocation3 + $0xc8] sm:$0xff]
    %v2439 = vld [vmem:[#allocation3 + $0xd0] sm:$0xff]
    %v2440 = vld [vmem:[#allocation3 + $0xd8] sm:$0xff]
    %v2441 = vld [vmem:[#allocation3 + $0xe0] sm:$0xff]
    %v2442 = vld [vmem:[#allocation3 + $0xe8] sm:$0xff]
    %v2443 = vld [vmem:[#allocation3 + $0xf0] sm:$0xff]
    %v2444 = vld [vmem:[#allocation3 + $0xf8] sm:$0xff]
    %v2445 = vld [vmem:[#allocation3 + $0x100] sm:$0xff]
    %v2446 = vld [vmem:[#allocation3 + $0x108] sm:$0xff]
    %v2447 = vld [vmem:[#allocation3 + $0x110] sm:$0xff]
    %v2448 = vld [vmem:[#allocation3 + $0x118] sm:$0xff]
    %v2450 = vsel %vm651, %v1904, 0
    %v2453 = vsel %vm651, %v1905, 0
    %2455 = vmatprep.subr.mxu0 %v2414
    %2456 = vmatpush1.msra.mxu0 %v2413
    %2457 = vmatprep.subr.mxu0 %v2418
    %2458 = vmatpush1.msra.mxu0 %v2417
    %2459 = vmatprep.subr.mxu0 %v2422
    %2460 = vmatpush1.msra.mxu0 %v2421
    %2461 = vmatprep.subr.mxu0 %v2426
    %2462 = vmatpush1.msra.mxu0 %v2425
    %2463 = vmatprep.subr.mxu0 %v2430
    %2464 = vmatpush1.msra.mxu0 %v2429
    %2465 = vmatprep.subr.mxu0 %v2434
    %2466 = vmatpush1.msra.mxu0 %v2433
    %2467 = vmatprep.subr.mxu0 %v2438
    %2468 = vmatpush1.msra.mxu0 %v2437
    %2469 = vmatprep.subr.mxu0 %v2442
    %2470 = vmatpush1.msra.mxu0 %v2441
    %2471 = vmatprep.subr.mxu0 %v2446
    %2472 = vmatpush1.msra.mxu0 %v2445
    %2473 = vmatprep.subr.mxu0 0.0
    %2474 = vmatpush1.msra.mxu0 0.0
    %2475 = vmatprep.subr.mxu0 0.0
    %2476 = vmatpush1.msra.mxu0 0.0
    %2477 = vmatprep.subr.mxu0 0.0
    %2478 = vmatpush1.msra.mxu0 0.0
    %2479 = vmatprep.subr.mxu0 0.0
    %2480 = vmatpush1.msra.mxu0 0.0
    %2481 = vmatprep.subr.mxu0 0.0
    %2482 = vmatpush1.msra.mxu0 0.0
    %2483 = vmatprep.subr.mxu0 0.0
    %2484 = vmatpush1.msra.mxu0 0.0
    %2485 = vmatprep.subr.mxu0 0.0
    %2486 = vmatpush1.msra.mxu0 0.0
    %2487 = vmatprep.subr.mxu0 0.0
    %2488 = vmatpush1.msra.mxu0 0.0
    %2489 = vmatprep.subr.mxu0 0.0
    %2490 = vmatpush1.msra.mxu0 0.0
    %2491 = vmatprep.subr.mxu0 0.0
    %2492 = vmatpush1.msra.mxu0 0.0
    %2493 = vmatprep.subr.mxu0 0.0
    %2494 = vmatpush1.msra.mxu0 0.0
    %2495 = vmatprep.subr.mxu0 0.0
    %2496 = vmatpush1.msra.mxu0 0.0
    %2497 = vmatprep.subr.mxu0 0.0
    %2498 = vmatpush1.msra.mxu0 0.0
    %2499 = vmatprep.subr.mxu0 0.0
    %2500 = vmatpush1.msra.mxu0 0.0
    %2501 = vmatprep.subr.mxu0 0.0
    %2502 = vmatpush1.msra.mxu0 0.0
    %2503 = vmatprep.subr.mxu0 0.0
    %2504 = vmatpush1.msra.mxu0 0.0
    %2505 = vmatprep.subr.mxu0 0.0
    %2506 = vmatpush1.msra.mxu0 0.0
    %2507 = vmatprep.subr.mxu0 0.0
    %2508 = vmatpush1.msra.mxu0 0.0
    %2509 = vmatprep.subr.mxu0 0.0
    %2510 = vmatpush1.msra.mxu0 0.0
    %2511 = vmatprep.subr.mxu0 0.0
    %2512 = vmatpush1.msra.mxu0 0.0
    %2513 = vmatprep.subr.mxu0 0.0
    %2514 = vmatpush1.msra.mxu0 0.0
    %2515 = vmatprep.subr.mxu0 0.0
    %2516 = vmatpush1.msra.mxu0 0.0
    %2517 = vmatprep.subr.mxu0 0.0
    %2518 = vmatpush1.msra.mxu0 0.0
    %2519 = vmatprep.mubr.f32.mxu0 0.0
    %2520 = vmatmul.mubr.f32.gmra.mrb[0].mxu0 %v2450
    %v2521 = vpop.f32.mrb[0].mxu0
    %v2522 = vadd.f32 0.0, %v2521
    %v2523 = vpop.f32.mrb[0].mxu0
    %v2524 = vadd.f32 0.0, %v2523
    %2525 = vmatprep.mubr.f32.mxu0 0.0
    %2526 = vmatmul.mubr.f32.gmra.mrb[0].mxu0 %v2453
    %v2527 = vpop.f32.mrb[0].mxu0
    %v2528 = vadd.f32 0.0, %v2527
    %v2529 = vpop.f32.mrb[0].mxu0
    %v2530 = vadd.f32 0.0, %v2529
    %2531 = vdwg.mxu0
    %2532 = vmatprep.subr.mxu0 %v2416
    %2533 = vmatpush1.msra.mxu0 %v2415
    %2534 = vmatprep.subr.mxu0 %v2420
    %2535 = vmatpush1.msra.mxu0 %v2419
    %2536 = vmatprep.subr.mxu0 %v2424
    %2537 = vmatpush1.msra.mxu0 %v2423
    %2538 = vmatprep.subr.mxu0 %v2428
    %2539 = vmatpush1.msra.mxu0 %v2427
    %2540 = vmatprep.subr.mxu0 %v2432
    %2541 = vmatpush1.msra.mxu0 %v2431
    %2542 = vmatprep.subr.mxu0 %v2436
    %2543 = vmatpush1.msra.mxu0 %v2435
    %2544 = vmatprep.subr.mxu0 %v2440
    %2545 = vmatpush1.msra.mxu0 %v2439
    %2546 = vmatprep.subr.mxu0 %v2444
    %2547 = vmatpush1.msra.mxu0 %v2443
    %2548 = vmatprep.subr.mxu0 %v2448
    %2549 = vmatpush1.msra.mxu0 %v2447
    %2550 = vmatprep.subr.mxu0 0.0
    %2551 = vmatpush1.msra.mxu0 0.0
    %2552 = vmatprep.subr.mxu0 0.0
    %2553 = vmatpush1.msra.mxu0 0.0
    %2554 = vmatprep.subr.mxu0 0.0
    %2555 = vmatpush1.msra.mxu0 0.0
    %2556 = vmatprep.subr.mxu0 0.0
    %2557 = vmatpush1.msra.mxu0 0.0
    %2558 = vmatprep.subr.mxu0 0.0
    %2559 = vmatpush1.msra.mxu0 0.0
    %2560 = vmatprep.subr.mxu0 0.0
    %2561 = vmatpush1.msra.mxu0 0.0
    %2562 = vmatprep.subr.mxu0 0.0
    %2563 = vmatpush1.msra.mxu0 0.0
    %2564 = vmatprep.subr.mxu0 0.0
    %2565 = vmatpush1.msra.mxu0 0.0
    %2566 = vmatprep.subr.mxu0 0.0
    %2567 = vmatpush1.msra.mxu0 0.0
    %2568 = vmatprep.subr.mxu0 0.0
    %2569 = vmatpush1.msra.mxu0 0.0
    %2570 = vmatprep.subr.mxu0 0.0
    %2571 = vmatpush1.msra.mxu0 0.0
    %2572 = vmatprep.subr.mxu0 0.0
    %2573 = vmatpush1.msra.mxu0 0.0
    %2574 = vmatprep.subr.mxu0 0.0
    %2575 = vmatpush1.msra.mxu0 0.0
    %2576 = vmatprep.subr.mxu0 0.0
    %2577 = vmatpush1.msra.mxu0 0.0
    %2578 = vmatprep.subr.mxu0 0.0
    %2579 = vmatpush1.msra.mxu0 0.0
    %2580 = vmatprep.subr.mxu0 0.0
    %2581 = vmatpush1.msra.mxu0 0.0
    %2582 = vmatprep.subr.mxu0 0.0
    %2583 = vmatpush1.msra.mxu0 0.0
    %2584 = vmatprep.subr.mxu0 0.0
    %2585 = vmatpush1.msra.mxu0 0.0
    %2586 = vmatprep.subr.mxu0 0.0
    %2587 = vmatpush1.msra.mxu0 0.0
    %2588 = vmatprep.subr.mxu0 0.0
    %2589 = vmatpush1.msra.mxu0 0.0
    %2590 = vmatprep.subr.mxu0 0.0
    %2591 = vmatpush1.msra.mxu0 0.0
    %2592 = vmatprep.subr.mxu0 0.0
    %2593 = vmatpush1.msra.mxu0 0.0
    %2594 = vmatprep.subr.mxu0 0.0
    %2595 = vmatpush1.msra.mxu0 0.0
    %2596 = vmatprep.mubr.f32.mxu0 0.0
    %2597 = vmatmul.mubr.f32.gmra.mrb[0].mxu0 %v2450
    %v2598 = vpop.f32.mrb[0].mxu0
    %v2599 = vadd.f32 0.0, %v2598
    %v2600 = vpop.f32.mrb[0].mxu0
    %v2601 = vadd.f32 0.0, %v2600
    %2602 = vmatprep.mubr.f32.mxu0 0.0
    %2603 = vmatmul.mubr.f32.gmra.mrb[0].mxu0 %v2453
    %v2604 = vpop.f32.mrb[0].mxu0
    %v2605 = vadd.f32 0.0, %v2604
    %v2606 = vpop.f32.mrb[0].mxu0
    %v2607 = vadd.f32 0.0, %v2606
    %2608 = vdwg.mxu0
    %vm2609 = vcmp.ge.f32.partialorder %v2522, 0.0
    %vm2610 = vcmp.ge.f32.partialorder %v2524, 0.0
    %vm2611 = vcmp.ge.f32.partialorder %v2599, 0.0
    %vm2612 = vcmp.ge.f32.partialorder %v2601, 0.0
    %vm2613 = vcmp.ge.f32.partialorder %v2528, 0.0
    %vm2614 = vcmp.ge.f32.partialorder %v2530, 0.0
    %vm2615 = vcmp.ge.f32.partialorder %v2605, 0.0
    %vm2616 = vcmp.ge.f32.partialorder %v2607, 0.0
    %v2617 = vmul.f32 %v2522, 0.01
    %v2618 = vmul.f32 %v2524, 0.01
    %v2619 = vmul.f32 %v2599, 0.01
    %v2620 = vmul.f32 %v2601, 0.01
    %v2621 = vmul.f32 %v2528, 0.01
    %v2622 = vmul.f32 %v2530, 0.01
    %v2623 = vmul.f32 %v2605, 0.01
    %v2624 = vmul.f32 %v2607, 0.01
    %v2625 = vsel %vm2609, %v2522, %v2617
    %v2626 = vsel %vm2610, %v2524, %v2618
    %v2627 = vsel %vm2611, %v2599, %v2619
    %v2628 = vsel %vm2612, %v2601, %v2620
    %v2629 = vsel %vm2613, %v2528, %v2621
    %v2630 = vsel %vm2614, %v2530, %v2622
    %v2631 = vsel %vm2615, %v2605, %v2623
    %v2632 = vsel %vm2616, %v2607, %v2624
    %v2634 = vsel %vm836, %v1907, 0
    %v2637 = vsel %vm836, %v1908, 0
    %v2640 = vsel %vm843, %v2629, 0
    %v2643 = vsel %vm843, %v2630, 0
    %v2646 = vsel %vm843, %v2631, 0
    %v2649 = vsel %vm843, %v2632, 0
    %2651 = vmatprep.subr.mxu0 %v2626
    %2652 = vmatpush1.msra.mxu0 %v2625
    %2653 = vmatprep.subr.mxu0 %v2643
    %2654 = vmatpush1.msra.mxu0 %v2640
    %2655 = vmatprep.subr.mxu0 0.0
    %2656 = vmatpush1.msra.mxu0 0.0
    %2657 = vmatprep.subr.mxu0 0.0
    %2658 = vmatpush1.msra.mxu0 0.0
    %2659 = vmatprep.subr.mxu0 0.0
    %2660 = vmatpush1.msra.mxu0 0.0
    %2661 = vmatprep.subr.mxu0 0.0
    %2662 = vmatpush1.msra.mxu0 0.0
    %2663 = vmatprep.subr.mxu0 0.0
    %2664 = vmatpush1.msra.mxu0 0.0
    %2665 = vmatprep.subr.mxu0 0.0
    %2666 = vmatpush1.msra.mxu0 0.0
    %2667 = vmatprep.subr.mxu0 0.0
    %2668 = vmatpush1.msra.mxu0 0.0
    %2669 = vmatprep.subr.mxu0 0.0
    %2670 = vmatpush1.msra.mxu0 0.0
    %2671 = vmatprep.subr.mxu0 0.0
    %2672 = vmatpush1.msra.mxu0 0.0
    %2673 = vmatprep.subr.mxu0 0.0
    %2674 = vmatpush1.msra.mxu0 0.0
    %2675 = vmatprep.subr.mxu0 0.0
    %2676 = vmatpush1.msra.mxu0 0.0
    %2677 = vmatprep.subr.mxu0 0.0
    %2678 = vmatpush1.msra.mxu0 0.0
    %2679 = vmatprep.subr.mxu0 0.0
    %2680 = vmatpush1.msra.mxu0 0.0
    %2681 = vmatprep.subr.mxu0 0.0
    %2682 = vmatpush1.msra.mxu0 0.0
    %2683 = vmatprep.subr.mxu0 0.0
    %2684 = vmatpush1.msra.mxu0 0.0
    %2685 = vmatprep.subr.mxu0 0.0
    %2686 = vmatpush1.msra.mxu0 0.0
    %2687 = vmatprep.subr.mxu0 0.0
    %2688 = vmatpush1.msra.mxu0 0.0
    %2689 = vmatprep.subr.mxu0 0.0
    %2690 = vmatpush1.msra.mxu0 0.0
    %2691 = vmatprep.subr.mxu0 0.0
    %2692 = vmatpush1.msra.mxu0 0.0
    %2693 = vmatprep.subr.mxu0 0.0
    %2694 = vmatpush1.msra.mxu0 0.0
    %2695 = vmatprep.subr.mxu0 0.0
    %2696 = vmatpush1.msra.mxu0 0.0
    %2697 = vmatprep.subr.mxu0 0.0
    %2698 = vmatpush1.msra.mxu0 0.0
    %2699 = vmatprep.subr.mxu0 0.0
    %2700 = vmatpush1.msra.mxu0 0.0
    %2701 = vmatprep.subr.mxu0 0.0
    %2702 = vmatpush1.msra.mxu0 0.0
    %2703 = vmatprep.subr.mxu0 0.0
    %2704 = vmatpush1.msra.mxu0 0.0
    %2705 = vmatprep.subr.mxu0 0.0
    %2706 = vmatpush1.msra.mxu0 0.0
    %2707 = vmatprep.subr.mxu0 0.0
    %2708 = vmatpush1.msra.mxu0 0.0
    %2709 = vmatprep.subr.mxu0 0.0
    %2710 = vmatpush1.msra.mxu0 0.0
    %2711 = vmatprep.subr.mxu0 0.0
    %2712 = vmatpush1.msra.mxu0 0.0
    %2713 = vmatprep.subr.mxu0 0.0
    %2714 = vmatpush1.msra.mxu0 0.0
    %2715 = vmatprep.mubr.f32.mxu0 0.0
    %2716 = vmatmul.mubr.f32.gmra.mrb[0].mxu0 %v2634
    %v2717 = vpop.f32.mrb[0].mxu0
    %v2718 = vadd.f32 0.0, %v2717
    %v2719 = vpop.f32.mrb[0].mxu0
    %v2720 = vadd.f32 0.0, %v2719
    %2721 = vmatprep.mubr.f32.mxu0 0.0
    %2722 = vmatmul.mubr.f32.gmra.mrb[0].mxu0 %v2637
    %v2723 = vpop.f32.mrb[0].mxu0
    %v2724 = vadd.f32 0.0, %v2723
    %v2725 = vpop.f32.mrb[0].mxu0
    %v2726 = vadd.f32 0.0, %v2725
    %2727 = vdwg.mxu0
    %2728 = vmatprep.subr.mxu0 %v2628
    %2729 = vmatpush1.msra.mxu0 %v2627
    %2730 = vmatprep.subr.mxu0 %v2649
    %2731 = vmatpush1.msra.mxu0 %v2646
    %2732 = vmatprep.subr.mxu0 0.0
    %2733 = vmatpush1.msra.mxu0 0.0
    %2734 = vmatprep.subr.mxu0 0.0
    %2735 = vmatpush1.msra.mxu0 0.0
    %2736 = vmatprep.subr.mxu0 0.0
    %2737 = vmatpush1.msra.mxu0 0.0
    %2738 = vmatprep.subr.mxu0 0.0
    %2739 = vmatpush1.msra.mxu0 0.0
    %2740 = vmatprep.subr.mxu0 0.0
    %2741 = vmatpush1.msra.mxu0 0.0
    %2742 = vmatprep.subr.mxu0 0.0
    %2743 = vmatpush1.msra.mxu0 0.0
    %2744 = vmatprep.subr.mxu0 0.0
    %2745 = vmatpush1.msra.mxu0 0.0
    %2746 = vmatprep.subr.mxu0 0.0
    %2747 = vmatpush1.msra.mxu0 0.0
    %2748 = vmatprep.subr.mxu0 0.0
    %2749 = vmatpush1.msra.mxu0 0.0
    %2750 = vmatprep.subr.mxu0 0.0
    %2751 = vmatpush1.msra.mxu0 0.0
    %2752 = vmatprep.subr.mxu0 0.0
    %2753 = vmatpush1.msra.mxu0 0.0
    %2754 = vmatprep.subr.mxu0 0.0
    %2755 = vmatpush1.msra.mxu0 0.0
    %2756 = vmatprep.subr.mxu0 0.0
    %2757 = vmatpush1.msra.mxu0 0.0
    %2758 = vmatprep.subr.mxu0 0.0
    %2759 = vmatpush1.msra.mxu0 0.0
    %2760 = vmatprep.subr.mxu0 0.0
    %2761 = vmatpush1.msra.mxu0 0.0
    %2762 = vmatprep.subr.mxu0 0.0
    %2763 = vmatpush1.msra.mxu0 0.0
    %2764 = vmatprep.subr.mxu0 0.0
    %2765 = vmatpush1.msra.mxu0 0.0
    %2766 = vmatprep.subr.mxu0 0.0
    %2767 = vmatpush1.msra.mxu0 0.0
    %2768 = vmatprep.subr.mxu0 0.0
    %2769 = vmatpush1.msra.mxu0 0.0
    %2770 = vmatprep.subr.mxu0 0.0
    %2771 = vmatpush1.msra.mxu0 0.0
    %2772 = vmatprep.subr.mxu0 0.0
    %2773 = vmatpush1.msra.mxu0 0.0
    %2774 = vmatprep.subr.mxu0 0.0
    %2775 = vmatpush1.msra.mxu0 0.0
    %2776 = vmatprep.subr.mxu0 0.0
    %2777 = vmatpush1.msra.mxu0 0.0
    %2778 = vmatprep.subr.mxu0 0.0
    %2779 = vmatpush1.msra.mxu0 0.0
    %2780 = vmatprep.subr.mxu0 0.0
    %2781 = vmatpush1.msra.mxu0 0.0
    %2782 = vmatprep.subr.mxu0 0.0
    %2783 = vmatpush1.msra.mxu0 0.0
    %2784 = vmatprep.subr.mxu0 0.0
    %2785 = vmatpush1.msra.mxu0 0.0
    %2786 = vmatprep.subr.mxu0 0.0
    %2787 = vmatpush1.msra.mxu0 0.0
    %2788 = vmatprep.subr.mxu0 0.0
    %2789 = vmatpush1.msra.mxu0 0.0
    %2790 = vmatprep.subr.mxu0 0.0
    %2791 = vmatpush1.msra.mxu0 0.0
    %2792 = vmatprep.mubr.f32.mxu0 0.0
    %2793 = vmatmul.mubr.f32.gmra.mrb[0].mxu0 %v2634
    %v2794 = vpop.f32.mrb[0].mxu0
    %v2795 = vadd.f32 0.0, %v2794
    %v2796 = vpop.f32.mrb[0].mxu0
    %v2797 = vadd.f32 0.0, %v2796
    %2798 = vmatprep.mubr.f32.mxu0 0.0
    %2799 = vmatmul.mubr.f32.gmra.mrb[0].mxu0 %v2637
    %v2800 = vpop.f32.mrb[0].mxu0
    %v2801 = vadd.f32 0.0, %v2800
    %v2802 = vpop.f32.mrb[0].mxu0
    %v2803 = vadd.f32 0.0, %v2802
    %2804 = vdwg.mxu0
    %vm2805 = vcmp.ge.f32.partialorder %v2718, 0.0
    %vm2806 = vcmp.ge.f32.partialorder %v2720, 0.0
    %vm2807 = vcmp.ge.f32.partialorder %v2795, 0.0
    %vm2808 = vcmp.ge.f32.partialorder %v2797, 0.0
    %vm2809 = vcmp.ge.f32.partialorder %v2724, 0.0
    %vm2810 = vcmp.ge.f32.partialorder %v2726, 0.0
    %vm2811 = vcmp.ge.f32.partialorder %v2801, 0.0
    %vm2812 = vcmp.ge.f32.partialorder %v2803, 0.0
    %v2813 = vmul.f32 %v2718, 0.01
    %v2814 = vmul.f32 %v2720, 0.01
    %v2815 = vmul.f32 %v2795, 0.01
    %v2816 = vmul.f32 %v2797, 0.01
    %v2817 = vmul.f32 %v2724, 0.01
    %v2818 = vmul.f32 %v2726, 0.01
    %v2819 = vmul.f32 %v2801, 0.01
    %v2820 = vmul.f32 %v2803, 0.01
    %v2821 = vsel %vm2805, %v2718, %v2813
    %v2822 = vsel %vm2806, %v2720, %v2814
    %v2823 = vsel %vm2807, %v2795, %v2815
    %v2824 = vsel %vm2808, %v2797, %v2816
    %v2825 = vsel %vm2809, %v2724, %v2817
    %v2826 = vsel %vm2810, %v2726, %v2818
    %v2827 = vsel %vm2811, %v2801, %v2819
    %v2828 = vsel %vm2812, %v2803, %v2820
    %2829 = vrot.lane.b32.xlu0 %v1907, 118
    %v2830 = vpop.permute.xlu0 %2829
    %2831 = vrot.lane.b32.xlu0 %v1908, 118
    %v2832 = vpop.permute.xlu0 %2831
    %v2833 = vsel %vm836, %v2830, 0
    %v2835 = vsel %vm836, %v2832, 0
    %v2838 = vsel %vm843, %v2825, 0
    %v2841 = vsel %vm843, %v2826, 0
    %v2844 = vsel %vm843, %v2827, 0
    %v2847 = vsel %vm843, %v2828, 0
    %2849 = vmatprep.subr.mxu0 %v2822
    %2850 = vmatpush1.msra.mxu0 %v2821
    %2851 = vmatprep.subr.mxu0 %v2841
    %2852 = vmatpush1.msra.mxu0 %v2838
    %2853 = vmatprep.subr.mxu0 0.0
    %2854 = vmatpush1.msra.mxu0 0.0
    %2855 = vmatprep.subr.mxu0 0.0
    %2856 = vmatpush1.msra.mxu0 0.0
    %2857 = vmatprep.subr.mxu0 0.0
    %2858 = vmatpush1.msra.mxu0 0.0
    %2859 = vmatprep.subr.mxu0 0.0
    %2860 = vmatpush1.msra.mxu0 0.0
    %2861 = vmatprep.subr.mxu0 0.0
    %2862 = vmatpush1.msra.mxu0 0.0
    %2863 = vmatprep.subr.mxu0 0.0
    %2864 = vmatpush1.msra.mxu0 0.0
    %2865 = vmatprep.subr.mxu0 0.0
    %2866 = vmatpush1.msra.mxu0 0.0
    %2867 = vmatprep.subr.mxu0 0.0
    %2868 = vmatpush1.msra.mxu0 0.0
    %2869 = vmatprep.subr.mxu0 0.0
    %2870 = vmatpush1.msra.mxu0 0.0
    %2871 = vmatprep.subr.mxu0 0.0
    %2872 = vmatpush1.msra.mxu0 0.0
    %2873 = vmatprep.subr.mxu0 0.0
    %2874 = vmatpush1.msra.mxu0 0.0
    %2875 = vmatprep.subr.mxu0 0.0
    %2876 = vmatpush1.msra.mxu0 0.0
    %2877 = vmatprep.subr.mxu0 0.0
    %2878 = vmatpush1.msra.mxu0 0.0
    %2879 = vmatprep.subr.mxu0 0.0
    %2880 = vmatpush1.msra.mxu0 0.0
    %2881 = vmatprep.subr.mxu0 0.0
    %2882 = vmatpush1.msra.mxu0 0.0
    %2883 = vmatprep.subr.mxu0 0.0
    %2884 = vmatpush1.msra.mxu0 0.0
    %2885 = vmatprep.subr.mxu0 0.0
    %2886 = vmatpush1.msra.mxu0 0.0
    %2887 = vmatprep.subr.mxu0 0.0
    %2888 = vmatpush1.msra.mxu0 0.0
    %2889 = vmatprep.subr.mxu0 0.0
    %2890 = vmatpush1.msra.mxu0 0.0
    %2891 = vmatprep.subr.mxu0 0.0
    %2892 = vmatpush1.msra.mxu0 0.0
    %2893 = vmatprep.subr.mxu0 0.0
    %2894 = vmatpush1.msra.mxu0 0.0
    %2895 = vmatprep.subr.mxu0 0.0
    %2896 = vmatpush1.msra.mxu0 0.0
    %2897 = vmatprep.subr.mxu0 0.0
    %2898 = vmatpush1.msra.mxu0 0.0
    %2899 = vmatprep.subr.mxu0 0.0
    %2900 = vmatpush1.msra.mxu0 0.0
    %2901 = vmatprep.subr.mxu0 0.0
    %2902 = vmatpush1.msra.mxu0 0.0
    %2903 = vmatprep.subr.mxu0 0.0
    %2904 = vmatpush1.msra.mxu0 0.0
    %2905 = vmatprep.subr.mxu0 0.0
    %2906 = vmatpush1.msra.mxu0 0.0
    %2907 = vmatprep.subr.mxu0 0.0
    %2908 = vmatpush1.msra.mxu0 0.0
    %2909 = vmatprep.subr.mxu0 0.0
    %2910 = vmatpush1.msra.mxu0 0.0
    %2911 = vmatprep.subr.mxu0 0.0
    %2912 = vmatpush1.msra.mxu0 0.0
    %2913 = vmatprep.mubr.f32.mxu0 0.0
    %2914 = vmatmul.mubr.f32.gmra.mrb[0].mxu0 %v2833
    %v2915 = vpop.f32.mrb[0].mxu0
    %v2916 = vadd.f32 0.0, %v2915
    %v2917 = vpop.f32.mrb[0].mxu0
    %v2918 = vadd.f32 0.0, %v2917
    %2919 = vmatprep.mubr.f32.mxu0 0.0
    %2920 = vmatmul.mubr.f32.gmra.mrb[0].mxu0 %v2835
    %v2921 = vpop.f32.mrb[0].mxu0
    %v2922 = vadd.f32 0.0, %v2921
    %v2923 = vpop.f32.mrb[0].mxu0
    %v2924 = vadd.f32 0.0, %v2923
    %2925 = vdwg.mxu0
    %2926 = vmatprep.subr.mxu0 %v2824
    %2927 = vmatpush1.msra.mxu0 %v2823
    %2928 = vmatprep.subr.mxu0 %v2847
    %2929 = vmatpush1.msra.mxu0 %v2844
    %2930 = vmatprep.subr.mxu0 0.0
    %2931 = vmatpush1.msra.mxu0 0.0
    %2932 = vmatprep.subr.mxu0 0.0
    %2933 = vmatpush1.msra.mxu0 0.0
    %2934 = vmatprep.subr.mxu0 0.0
    %2935 = vmatpush1.msra.mxu0 0.0
    %2936 = vmatprep.subr.mxu0 0.0
    %2937 = vmatpush1.msra.mxu0 0.0
    %2938 = vmatprep.subr.mxu0 0.0
    %2939 = vmatpush1.msra.mxu0 0.0
    %2940 = vmatprep.subr.mxu0 0.0
    %2941 = vmatpush1.msra.mxu0 0.0
    %2942 = vmatprep.subr.mxu0 0.0
    %2943 = vmatpush1.msra.mxu0 0.0
    %2944 = vmatprep.subr.mxu0 0.0
    %2945 = vmatpush1.msra.mxu0 0.0
    %2946 = vmatprep.subr.mxu0 0.0
    %2947 = vmatpush1.msra.mxu0 0.0
    %2948 = vmatprep.subr.mxu0 0.0
    %2949 = vmatpush1.msra.mxu0 0.0
    %2950 = vmatprep.subr.mxu0 0.0
    %2951 = vmatpush1.msra.mxu0 0.0
    %2952 = vmatprep.subr.mxu0 0.0
    %2953 = vmatpush1.msra.mxu0 0.0
    %2954 = vmatprep.subr.mxu0 0.0
    %2955 = vmatpush1.msra.mxu0 0.0
    %2956 = vmatprep.subr.mxu0 0.0
    %2957 = vmatpush1.msra.mxu0 0.0
    %2958 = vmatprep.subr.mxu0 0.0
    %2959 = vmatpush1.msra.mxu0 0.0
    %2960 = vmatprep.subr.mxu0 0.0
    %2961 = vmatpush1.msra.mxu0 0.0
    %2962 = vmatprep.subr.mxu0 0.0
    %2963 = vmatpush1.msra.mxu0 0.0
    %2964 = vmatprep.subr.mxu0 0.0
    %2965 = vmatpush1.msra.mxu0 0.0
    %2966 = vmatprep.subr.mxu0 0.0
    %2967 = vmatpush1.msra.mxu0 0.0
    %2968 = vmatprep.subr.mxu0 0.0
    %2969 = vmatpush1.msra.mxu0 0.0
    %2970 = vmatprep.subr.mxu0 0.0
    %2971 = vmatpush1.msra.mxu0 0.0
    %2972 = vmatprep.subr.mxu0 0.0
    %2973 = vmatpush1.msra.mxu0 0.0
    %2974 = vmatprep.subr.mxu0 0.0
    %2975 = vmatpush1.msra.mxu0 0.0
    %2976 = vmatprep.subr.mxu0 0.0
    %2977 = vmatpush1.msra.mxu0 0.0
    %2978 = vmatprep.subr.mxu0 0.0
    %2979 = vmatpush1.msra.mxu0 0.0
    %2980 = vmatprep.subr.mxu0 0.0
    %2981 = vmatpush1.msra.mxu0 0.0
    %2982 = vmatprep.subr.mxu0 0.0
    %2983 = vmatpush1.msra.mxu0 0.0
    %2984 = vmatprep.subr.mxu0 0.0
    %2985 = vmatpush1.msra.mxu0 0.0
    %2986 = vmatprep.subr.mxu0 0.0
    %2987 = vmatpush1.msra.mxu0 0.0
    %2988 = vmatprep.subr.mxu0 0.0
    %2989 = vmatpush1.msra.mxu0 0.0
    %2990 = vmatprep.mubr.f32.mxu0 0.0
    %2991 = vmatmul.mubr.f32.gmra.mrb[0].mxu0 %v2833
    %v2992 = vpop.f32.mrb[0].mxu0
    %v2993 = vadd.f32 0.0, %v2992
    %v2994 = vpop.f32.mrb[0].mxu0
    %v2995 = vadd.f32 0.0, %v2994
    %2996 = vmatprep.mubr.f32.mxu0 0.0
    %2997 = vmatmul.mubr.f32.gmra.mrb[0].mxu0 %v2835
    %v2998 = vpop.f32.mrb[0].mxu0
    %v2999 = vadd.f32 0.0, %v2998
    %v3000 = vpop.f32.mrb[0].mxu0
    %v3001 = vadd.f32 0.0, %v3000
    %3002 = vdwg.mxu0
    %v3003 = vxor.u32 %v2916, 2147483648
    %v3004 = vxor.u32 %v2918, 2147483648
    %v3005 = vxor.u32 %v2993, 2147483648
    %v3006 = vxor.u32 %v2995, 2147483648
    %v3007 = vxor.u32 %v2922, 2147483648
    %v3008 = vxor.u32 %v2924, 2147483648
    %v3009 = vxor.u32 %v2999, 2147483648
    %v3010 = vxor.u32 %v3001, 2147483648
    %v3011 = vmul.f32 %v3003, 1.442695
    %v3012 = vpow.pop %v3011
    %v3013 = vmul.f32 %v3004, 1.442695
    %v3014 = vpow.pop %v3013
    %v3015 = vmul.f32 %v3005, 1.442695
    %v3016 = vpow.pop %v3015
    %v3017 = vmul.f32 %v3006, 1.442695
    %v3018 = vpow.pop %v3017
    %v3019 = vmul.f32 %v3007, 1.442695
    %v3020 = vpow.pop %v3019
    %v3021 = vmul.f32 %v3008, 1.442695
    %v3022 = vpow.pop %v3021
    %v3023 = vmul.f32 %v3009, 1.442695
    %v3024 = vpow.pop %v3023
    %v3025 = vmul.f32 %v3010, 1.442695
    %v3026 = vpow.pop %v3025
    %v3027 = vadd.f32 %v3012, 1.0
    %v3028 = vadd.f32 %v3014, 1.0
    %v3029 = vadd.f32 %v3016, 1.0
    %v3030 = vadd.f32 %v3018, 1.0
    %v3031 = vadd.f32 %v3020, 1.0
    %v3032 = vadd.f32 %v3022, 1.0
    %v3033 = vadd.f32 %v3024, 1.0
    %v3034 = vadd.f32 %v3026, 1.0
    %v3035 = vrcp.pop %v3027
    %v3036 = vmul.f32 1.0, %v3035
    %v3037 = vrcp.pop %v3028
    %v3038 = vmul.f32 1.0, %v3037
    %v3039 = vrcp.pop %v3029
    %v3040 = vmul.f32 1.0, %v3039
    %v3041 = vrcp.pop %v3030
    %v3042 = vmul.f32 1.0, %v3041
    %v3043 = vrcp.pop %v3031
    %v3044 = vmul.f32 1.0, %v3043
    %v3045 = vrcp.pop %v3032
    %v3046 = vmul.f32 1.0, %v3045
    %v3047 = vrcp.pop %v3033
    %v3048 = vmul.f32 1.0, %v3047
    %v3049 = vrcp.pop %v3034
    %v3050 = vmul.f32 1.0, %v3049
    %v3051 = vld [vmem:[#allocation2 + $0x8] sm:$0xf]
    %v3052 = vld [vmem:[#allocation2 + $0x10] sm:$0xf]
    %v3053 = vld [vmem:[#allocation2 + $0x18] sm:$0xf]
    %v3054 = vld [vmem:[#allocation2 + $0x20] sm:$0xf]
    %v3055 = vsel %vm1260, %v3051, 0.0
    %v3056 = vsel %vm1260, %v3052, 0.0
    %v3057 = vadd.f32 %v3055, %v3056
    %3058 = vadd.xlane.f32.xlu0 %v3057
    %v3059 = vpop.xlane.xlu0 %3058
    %v3060 = vmul.f32 %v3059, %v1266
    %v3061 = vsel %vm1260, %v3053, 0.0
    %v3062 = vsel %vm1260, %v3054, 0.0
    %v3063 = vadd.f32 %v3061, %v3062
    %3064 = vadd.xlane.f32.xlu0 %v3063
    %v3065 = vpop.xlane.xlu0 %3064
    %v3066 = vmul.f32 %v3065, %v1266
    %v3067 = vsel %vm342, %v3060, %v3066
    %3068 = vset.pattern.permute.xlu0 24
    %3069 = vperm.xlu0 %3068, %v1907
    %v3070 = vpop.permute.xlu0 %3069
    %3072 = vrot.lane.b32.xlu0 %v1907, 108
    %v3073 = vpop.permute.xlu0 %3072
    %v3074 = vsel %vm1281, %v3073, 0
    %v3077 = vsel %vm1260, %v3067, 0
    %3079 = vmatprep.subr.mxu0 0.0
    %3080 = vmatpush1.msra.mxu0 %v3077
    %3081 = vmatprep.subr.mxu0 0.0
    %3082 = vmatpush1.msra.mxu0 0.0
    %3083 = vmatprep.subr.mxu0 0.0
    %3084 = vmatpush1.msra.mxu0 0.0
    %3085 = vmatprep.subr.mxu0 0.0
    %3086 = vmatpush1.msra.mxu0 0.0
    %3087 = vmatprep.subr.mxu0 0.0
    %3088 = vmatpush1.msra.mxu0 0.0
    %3089 = vmatprep.subr.mxu0 0.0
    %3090 = vmatpush1.msra.mxu0 0.0
    %3091 = vmatprep.subr.mxu0 0.0
    %3092 = vmatpush1.msra.mxu0 0.0
    %3093 = vmatprep.subr.mxu0 0.0
    %3094 = vmatpush1.msra.mxu0 0.0
    %3095 = vmatprep.subr.mxu0 0.0
    %3096 = vmatpush1.msra.mxu0 0.0
    %3097 = vmatprep.subr.mxu0 0.0
    %3098 = vmatpush1.msra.mxu0 0.0
    %3099 = vmatprep.subr.mxu0 0.0
    %3100 = vmatpush1.msra.mxu0 0.0
    %3101 = vmatprep.subr.mxu0 0.0
    %3102 = vmatpush1.msra.mxu0 0.0
    %3103 = vmatprep.subr.mxu0 0.0
    %3104 = vmatpush1.msra.mxu0 0.0
    %3105 = vmatprep.subr.mxu0 0.0
    %3106 = vmatpush1.msra.mxu0 0.0
    %3107 = vmatprep.subr.mxu0 0.0
    %3108 = vmatpush1.msra.mxu0 0.0
    %3109 = vmatprep.subr.mxu0 0.0
    %3110 = vmatpush1.msra.mxu0 0.0
    %3111 = vmatprep.subr.mxu0 0.0
    %3112 = vmatpush1.msra.mxu0 0.0
    %3113 = vmatprep.subr.mxu0 0.0
    %3114 = vmatpush1.msra.mxu0 0.0
    %3115 = vmatprep.subr.mxu0 0.0
    %3116 = vmatpush1.msra.mxu0 0.0
    %3117 = vmatprep.subr.mxu0 0.0
    %3118 = vmatpush1.msra.mxu0 0.0
    %3119 = vmatprep.subr.mxu0 0.0
    %3120 = vmatpush1.msra.mxu0 0.0
    %3121 = vmatprep.subr.mxu0 0.0
    %3122 = vmatpush1.msra.mxu0 0.0
    %3123 = vmatprep.subr.mxu0 0.0
    %3124 = vmatpush1.msra.mxu0 0.0
    %3125 = vmatprep.subr.mxu0 0.0
    %3126 = vmatpush1.msra.mxu0 0.0
    %3127 = vmatprep.subr.mxu0 0.0
    %3128 = vmatpush1.msra.mxu0 0.0
    %3129 = vmatprep.subr.mxu0 0.0
    %3130 = vmatpush1.msra.mxu0 0.0
    %3131 = vmatprep.subr.mxu0 0.0
    %3132 = vmatpush1.msra.mxu0 0.0
    %3133 = vmatprep.subr.mxu0 0.0
    %3134 = vmatpush1.msra.mxu0 0.0
    %3135 = vmatprep.subr.mxu0 0.0
    %3136 = vmatpush1.msra.mxu0 0.0
    %3137 = vmatprep.subr.mxu0 0.0
    %3138 = vmatpush1.msra.mxu0 0.0
    %3139 = vmatprep.subr.mxu0 0.0
    %3140 = vmatpush1.msra.mxu0 0.0
    %3141 = vmatprep.subr.mxu0 0.0
    %3142 = vmatpush1.msra.mxu0 0.0
    %3143 = vmatprep.mubr.f32.mxu0 0.0
    %3144 = vmatmul.mubr.f32.gmra.mrb[0].mxu0 %v3074
    %v3145 = vpop.f32.mrb[0].mxu0
    %v3146 = vadd.f32 %v3070, %v3145
    %v3147 = vpop.f32.mrb[0].mxu0
    %3148 = vdwg.mxu0
    %vm3149 = vcmp.ge.f32.partialorder %v3146, 0.0
    %v3150 = vmul.f32 %v3146, 0.01
    %v3151 = vsel %vm3149, %v3146, %v3150
    %3152 = vset.pattern.permute.xlu0 29
    %3153 = vperm.xlu0 %3152, %v1907
    %v3154 = vpop.permute.xlu0 %3153
    %3156 = vrot.lane.b32.xlu0 %v1907, 103
    %v3157 = vpop.permute.xlu0 %3156
    %v3158 = vsel %vm1281, %v3157, 0
    %v3161 = vsel %vm1260, %v3151, 0
    %3163 = vmatprep.subr.mxu0 0.0
    %3164 = vmatpush1.msra.mxu0 %v3161
    %3165 = vmatprep.subr.mxu0 0.0
    %3166 = vmatpush1.msra.mxu0 0.0
    %3167 = vmatprep.subr.mxu0 0.0
    %3168 = vmatpush1.msra.mxu0 0.0
    %3169 = vmatprep.subr.mxu0 0.0
    %3170 = vmatpush1.msra.mxu0 0.0
    %3171 = vmatprep.subr.mxu0 0.0
    %3172 = vmatpush1.msra.mxu0 0.0
    %3173 = vmatprep.subr.mxu0 0.0
    %3174 = vmatpush1.msra.mxu0 0.0
    %3175 = vmatprep.subr.mxu0 0.0
    %3176 = vmatpush1.msra.mxu0 0.0
    %3177 = vmatprep.subr.mxu0 0.0
    %3178 = vmatpush1.msra.mxu0 0.0
    %3179 = vmatprep.subr.mxu0 0.0
    %3180 = vmatpush1.msra.mxu0 0.0
    %3181 = vmatprep.subr.mxu0 0.0
    %3182 = vmatpush1.msra.mxu0 0.0
    %3183 = vmatprep.subr.mxu0 0.0
    %3184 = vmatpush1.msra.mxu0 0.0
    %3185 = vmatprep.subr.mxu0 0.0
    %3186 = vmatpush1.msra.mxu0 0.0
    %3187 = vmatprep.subr.mxu0 0.0
    %3188 = vmatpush1.msra.mxu0 0.0
    %3189 = vmatprep.subr.mxu0 0.0
    %3190 = vmatpush1.msra.mxu0 0.0
    %3191 = vmatprep.subr.mxu0 0.0
    %3192 = vmatpush1.msra.mxu0 0.0
    %3193 = vmatprep.subr.mxu0 0.0
    %3194 = vmatpush1.msra.mxu0 0.0
    %3195 = vmatprep.subr.mxu0 0.0
    %3196 = vmatpush1.msra.mxu0 0.0
    %3197 = vmatprep.subr.mxu0 0.0
    %3198 = vmatpush1.msra.mxu0 0.0
    %3199 = vmatprep.subr.mxu0 0.0
    %3200 = vmatpush1.msra.mxu0 0.0
    %3201 = vmatprep.subr.mxu0 0.0
    %3202 = vmatpush1.msra.mxu0 0.0
    %3203 = vmatprep.subr.mxu0 0.0
    %3204 = vmatpush1.msra.mxu0 0.0
    %3205 = vmatprep.subr.mxu0 0.0
    %3206 = vmatpush1.msra.mxu0 0.0
    %3207 = vmatprep.subr.mxu0 0.0
    %3208 = vmatpush1.msra.mxu0 0.0
    %3209 = vmatprep.subr.mxu0 0.0
    %3210 = vmatpush1.msra.mxu0 0.0
    %3211 = vmatprep.subr.mxu0 0.0
    %3212 = vmatpush1.msra.mxu0 0.0
    %3213 = vmatprep.subr.mxu0 0.0
    %3214 = vmatpush1.msra.mxu0 0.0
    %3215 = vmatprep.subr.mxu0 0.0
    %3216 = vmatpush1.msra.mxu0 0.0
    %3217 = vmatprep.subr.mxu0 0.0
    %3218 = vmatpush1.msra.mxu0 0.0
    %3219 = vmatprep.subr.mxu0 0.0
    %3220 = vmatpush1.msra.mxu0 0.0
    %3221 = vmatprep.subr.mxu0 0.0
    %3222 = vmatpush1.msra.mxu0 0.0
    %3223 = vmatprep.subr.mxu0 0.0
    %3224 = vmatpush1.msra.mxu0 0.0
    %3225 = vmatprep.subr.mxu0 0.0
    %3226 = vmatpush1.msra.mxu0 0.0
    %3227 = vmatprep.mubr.f32.mxu0 0.0
    %3228 = vmatmul.mubr.f32.gmra.mrb[0].mxu0 %v3158
    %v3229 = vpop.f32.mrb[0].mxu0
    %v3230 = vadd.f32 %v3154, %v3229
    %v3231 = vpop.f32.mrb[0].mxu0
    %3232 = vdwg.mxu0
    %v3233 = vld [vmem:[#allocation3] sm:$0xff]
    %v3234 = vld [vmem:[#allocation3 + $0x8] sm:$0xff]
    %v3235 = vld [vmem:[#allocation3 + $0x10] sm:$0xff]
    %v3236 = vld [vmem:[#allocation3 + $0x18] sm:$0xff]
    %v3237 = vlaneseq
    %v3238 = vshrl.u32 %v3237, 7
    %v3239 = vsub.s32 0, %v3238
    %v3240 = vrot.slane %v3036, %v3239
    %v3241 = vlaneseq
    %v3242 = vshrl.u32 %v3241, 7
    %v3243 = vsub.s32 0, %v3242
    %v3244 = vrot.slane %v3038, %v3243
    %v3245 = vlaneseq
    %v3246 = vshrl.u32 %v3245, 7
    %v3247 = vsub.s32 0, %v3246
    %v3248 = vrot.slane %v3040, %v3247
    %v3249 = vlaneseq
    %v3250 = vshrl.u32 %v3249, 7
    %v3251 = vsub.s32 0, %v3250
    %v3252 = vrot.slane %v3042, %v3251
    %v3253 = vmul.f32 %v3233, %v3240
    %v3254 = vmul.f32 %v3234, %v3244
    %v3255 = vmul.f32 %v3235, %v3248
    %v3256 = vmul.f32 %v3236, %v3252
    %3257 = vst [vmem:[#allocation3] sm:$0xff] %v3253
    %3258 = vst [vmem:[#allocation3 + $0x8] sm:$0xff] %v3254
    %3259 = vst [vmem:[#allocation3 + $0x10] sm:$0xff] %v3255
    %3260 = vst [vmem:[#allocation3 + $0x18] sm:$0xff] %v3256
    %v3261 = vld [vmem:[#allocation3 + $0x20] sm:$0xff]
    %v3262 = vld [vmem:[#allocation3 + $0x28] sm:$0xff]
    %v3263 = vld [vmem:[#allocation3 + $0x30] sm:$0xff]
    %v3264 = vld [vmem:[#allocation3 + $0x38] sm:$0xff]
    %v3265 = vlaneseq
    %v3266 = vshrl.u32 %v3265, 7
    %v3267 = vsub.s32 1, %v3266
    %v3268 = vrot.slane %v3036, %v3267
    %v3269 = vlaneseq
    %v3270 = vshrl.u32 %v3269, 7
    %v3271 = vsub.s32 1, %v3270
    %v3272 = vrot.slane %v3038, %v3271
    %v3273 = vlaneseq
    %v3274 = vshrl.u32 %v3273, 7
    %v3275 = vsub.s32 1, %v3274
    %v3276 = vrot.slane %v3040, %v3275
    %v3277 = vlaneseq
    %v3278 = vshrl.u32 %v3277, 7
    %v3279 = vsub.s32 1, %v3278
    %v3280 = vrot.slane %v3042, %v3279
    %v3281 = vmul.f32 %v3261, %v3268
    %v3282 = vmul.f32 %v3262, %v3272
    %v3283 = vmul.f32 %v3263, %v3276
    %v3284 = vmul.f32 %v3264, %v3280
    %3285 = vst [vmem:[#allocation3 + $0x20] sm:$0xff] %v3281
    %3286 = vst [vmem:[#allocation3 + $0x28] sm:$0xff] %v3282
    %3287 = vst [vmem:[#allocation3 + $0x30] sm:$0xff] %v3283
    %3288 = vst [vmem:[#allocation3 + $0x38] sm:$0xff] %v3284
    %v3289 = vld [vmem:[#allocation3 + $0x40] sm:$0xff]
    %v3290 = vld [vmem:[#allocation3 + $0x48] sm:$0xff]
    %v3291 = vld [vmem:[#allocation3 + $0x50] sm:$0xff]
    %v3292 = vld [vmem:[#allocation3 + $0x58] sm:$0xff]
    %v3293 = vlaneseq
    %v3294 = vshrl.u32 %v3293, 7
    %v3295 = vsub.s32 2, %v3294
    %v3296 = vrot.slane %v3036, %v3295
    %v3297 = vlaneseq
    %v3298 = vshrl.u32 %v3297, 7
    %v3299 = vsub.s32 2, %v3298
    %v3300 = vrot.slane %v3038, %v3299
    %v3301 = vlaneseq
    %v3302 = vshrl.u32 %v3301, 7
    %v3303 = vsub.s32 2, %v3302
    %v3304 = vrot.slane %v3040, %v3303
    %v3305 = vlaneseq
    %v3306 = vshrl.u32 %v3305, 7
    %v3307 = vsub.s32 2, %v3306
    %v3308 = vrot.slane %v3042, %v3307
    %v3309 = vmul.f32 %v3289, %v3296
    %v3310 = vmul.f32 %v3290, %v3300
    %v3311 = vmul.f32 %v3291, %v3304
    %v3312 = vmul.f32 %v3292, %v3308
    %3313 = vst [vmem:[#allocation3 + $0x40] sm:$0xff] %v3309
    %3314 = vst [vmem:[#allocation3 + $0x48] sm:$0xff] %v3310
    %3315 = vst [vmem:[#allocation3 + $0x50] sm:$0xff] %v3311
    %3316 = vst [vmem:[#allocation3 + $0x58] sm:$0xff] %v3312
    %v3317 = vld [vmem:[#allocation3 + $0x60] sm:$0xff]
    %v3318 = vld [vmem:[#allocation3 + $0x68] sm:$0xff]
    %v3319 = vld [vmem:[#allocation3 + $0x70] sm:$0xff]
    %v3320 = vld [vmem:[#allocation3 + $0x78] sm:$0xff]
    %v3321 = vlaneseq
    %v3322 = vshrl.u32 %v3321, 7
    %v3323 = vsub.s32 3, %v3322
    %v3324 = vrot.slane %v3036, %v3323
    %v3325 = vlaneseq
    %v3326 = vshrl.u32 %v3325, 7
    %v3327 = vsub.s32 3, %v3326
    %v3328 = vrot.slane %v3038, %v3327
    %v3329 = vlaneseq
    %v3330 = vshrl.u32 %v3329, 7
    %v3331 = vsub.s32 3, %v3330
    %v3332 = vrot.slane %v3040, %v3331
    %v3333 = vlaneseq
    %v3334 = vshrl.u32 %v3333, 7
    %v3335 = vsub.s32 3, %v3334
    %v3336 = vrot.slane %v3042, %v3335
    %v3337 = vmul.f32 %v3317, %v3324
    %v3338 = vmul.f32 %v3318, %v3328
    %v3339 = vmul.f32 %v3319, %v3332
    %v3340 = vmul.f32 %v3320, %v3336
    %3341 = vst [vmem:[#allocation3 + $0x60] sm:$0xff] %v3337
    %3342 = vst [vmem:[#allocation3 + $0x68] sm:$0xff] %v3338
    %3343 = vst [vmem:[#allocation3 + $0x70] sm:$0xff] %v3339
    %3344 = vst [vmem:[#allocation3 + $0x78] sm:$0xff] %v3340
    %v3345 = vld [vmem:[#allocation3 + $0x80] sm:$0xff]
    %v3346 = vld [vmem:[#allocation3 + $0x88] sm:$0xff]
    %v3347 = vld [vmem:[#allocation3 + $0x90] sm:$0xff]
    %v3348 = vld [vmem:[#allocation3 + $0x98] sm:$0xff]
    %v3349 = vlaneseq
    %v3350 = vshrl.u32 %v3349, 7
    %v3351 = vsub.s32 4, %v3350
    %v3352 = vrot.slane %v3036, %v3351
    %v3353 = vlaneseq
    %v3354 = vshrl.u32 %v3353, 7
    %v3355 = vsub.s32 4, %v3354
    %v3356 = vrot.slane %v3038, %v3355
    %v3357 = vlaneseq
    %v3358 = vshrl.u32 %v3357, 7
    %v3359 = vsub.s32 4, %v3358
    %v3360 = vrot.slane %v3040, %v3359
    %v3361 = vlaneseq
    %v3362 = vshrl.u32 %v3361, 7
    %v3363 = vsub.s32 4, %v3362
    %v3364 = vrot.slane %v3042, %v3363
    %v3365 = vmul.f32 %v3345, %v3352
    %v3366 = vmul.f32 %v3346, %v3356
    %v3367 = vmul.f32 %v3347, %v3360
    %v3368 = vmul.f32 %v3348, %v3364
    %3369 = vst [vmem:[#allocation3 + $0x80] sm:$0xff] %v3365
    %3370 = vst [vmem:[#allocation3 + $0x88] sm:$0xff] %v3366
    %3371 = vst [vmem:[#allocation3 + $0x90] sm:$0xff] %v3367
    %3372 = vst [vmem:[#allocation3 + $0x98] sm:$0xff] %v3368
    %v3373 = vld [vmem:[#allocation3 + $0xa0] sm:$0xff]
    %v3374 = vld [vmem:[#allocation3 + $0xa8] sm:$0xff]
    %v3375 = vld [vmem:[#allocation3 + $0xb0] sm:$0xff]
    %v3376 = vld [vmem:[#allocation3 + $0xb8] sm:$0xff]
    %v3377 = vlaneseq
    %v3378 = vshrl.u32 %v3377, 7
    %v3379 = vsub.s32 5, %v3378
    %v3380 = vrot.slane %v3036, %v3379
    %v3381 = vlaneseq
    %v3382 = vshrl.u32 %v3381, 7
    %v3383 = vsub.s32 5, %v3382
    %v3384 = vrot.slane %v3038, %v3383
    %v3385 = vlaneseq
    %v3386 = vshrl.u32 %v3385, 7
    %v3387 = vsub.s32 5, %v3386
    %v3388 = vrot.slane %v3040, %v3387
    %v3389 = vlaneseq
    %v3390 = vshrl.u32 %v3389, 7
    %v3391 = vsub.s32 5, %v3390
    %v3392 = vrot.slane %v3042, %v3391
    %v3393 = vmul.f32 %v3373, %v3380
    %v3394 = vmul.f32 %v3374, %v3384
    %v3395 = vmul.f32 %v3375, %v3388
    %v3396 = vmul.f32 %v3376, %v3392
    %3397 = vst [vmem:[#allocation3 + $0xa0] sm:$0xff] %v3393
    %3398 = vst [vmem:[#allocation3 + $0xa8] sm:$0xff] %v3394
    %3399 = vst [vmem:[#allocation3 + $0xb0] sm:$0xff] %v3395
    %3400 = vst [vmem:[#allocation3 + $0xb8] sm:$0xff] %v3396
    %v3401 = vld [vmem:[#allocation3 + $0xc0] sm:$0xff]
    %v3402 = vld [vmem:[#allocation3 + $0xc8] sm:$0xff]
    %v3403 = vld [vmem:[#allocation3 + $0xd0] sm:$0xff]
    %v3404 = vld [vmem:[#allocation3 + $0xd8] sm:$0xff]
    %v3405 = vlaneseq
    %v3406 = vshrl.u32 %v3405, 7
    %v3407 = vsub.s32 6, %v3406
    %v3408 = vrot.slane %v3036, %v3407
    %v3409 = vlaneseq
    %v3410 = vshrl.u32 %v3409, 7
    %v3411 = vsub.s32 6, %v3410
    %v3412 = vrot.slane %v3038, %v3411
    %v3413 = vlaneseq
    %v3414 = vshrl.u32 %v3413, 7
    %v3415 = vsub.s32 6, %v3414
    %v3416 = vrot.slane %v3040, %v3415
    %v3417 = vlaneseq
    %v3418 = vshrl.u32 %v3417, 7
    %v3419 = vsub.s32 6, %v3418
    %v3420 = vrot.slane %v3042, %v3419
    %v3421 = vmul.f32 %v3401, %v3408
    %v3422 = vmul.f32 %v3402, %v3412
    %v3423 = vmul.f32 %v3403, %v3416
    %v3424 = vmul.f32 %v3404, %v3420
    %3425 = vst [vmem:[#allocation3 + $0xc0] sm:$0xff] %v3421
    %3426 = vst [vmem:[#allocation3 + $0xc8] sm:$0xff] %v3422
    %3427 = vst [vmem:[#allocation3 + $0xd0] sm:$0xff] %v3423
    %3428 = vst [vmem:[#allocation3 + $0xd8] sm:$0xff] %v3424
    %v3429 = vld [vmem:[#allocation3 + $0xe0] sm:$0xff]
    %v3430 = vld [vmem:[#allocation3 + $0xe8] sm:$0xff]
    %v3431 = vld [vmem:[#allocation3 + $0xf0] sm:$0xff]
    %v3432 = vld [vmem:[#allocation3 + $0xf8] sm:$0xff]
    %v3433 = vlaneseq
    %v3434 = vshrl.u32 %v3433, 7
    %v3435 = vsub.s32 7, %v3434
    %v3436 = vrot.slane %v3036, %v3435
    %v3437 = vlaneseq
    %v3438 = vshrl.u32 %v3437, 7
    %v3439 = vsub.s32 7, %v3438
    %v3440 = vrot.slane %v3038, %v3439
    %v3441 = vlaneseq
    %v3442 = vshrl.u32 %v3441, 7
    %v3443 = vsub.s32 7, %v3442
    %v3444 = vrot.slane %v3040, %v3443
    %v3445 = vlaneseq
    %v3446 = vshrl.u32 %v3445, 7
    %v3447 = vsub.s32 7, %v3446
    %v3448 = vrot.slane %v3042, %v3447
    %v3449 = vmul.f32 %v3429, %v3436
    %v3450 = vmul.f32 %v3430, %v3440
    %v3451 = vmul.f32 %v3431, %v3444
    %v3452 = vmul.f32 %v3432, %v3448
    %3453 = vst [vmem:[#allocation3 + $0xe0] sm:$0xff] %v3449
    %3454 = vst [vmem:[#allocation3 + $0xe8] sm:$0xff] %v3450
    %3455 = vst [vmem:[#allocation3 + $0xf0] sm:$0xff] %v3451
    %3456 = vst [vmem:[#allocation3 + $0xf8] sm:$0xff] %v3452
    %v3457 = vld [vmem:[#allocation3 + $0x100] sm:$0xff]
    %v3458 = vld [vmem:[#allocation3 + $0x108] sm:$0xff]
    %v3459 = vld [vmem:[#allocation3 + $0x110] sm:$0xff]
    %v3460 = vld [vmem:[#allocation3 + $0x118] sm:$0xff]
    %v3461 = vlaneseq
    %v3462 = vshrl.u32 %v3461, 7
    %v3463 = vsub.s32 0, %v3462
    %v3464 = vrot.slane %v3044, %v3463
    %v3465 = vlaneseq
    %v3466 = vshrl.u32 %v3465, 7
    %v3467 = vsub.s32 0, %v3466
    %v3468 = vrot.slane %v3046, %v3467
    %v3469 = vlaneseq
    %v3470 = vshrl.u32 %v3469, 7
    %v3471 = vsub.s32 0, %v3470
    %v3472 = vrot.slane %v3048, %v3471
    %v3473 = vlaneseq
    %v3474 = vshrl.u32 %v3473, 7
    %v3475 = vsub.s32 0, %v3474
    %v3476 = vrot.slane %v3050, %v3475
    %v3477 = vmul.f32 %v3457, %v3464
    %v3478 = vmul.f32 %v3458, %v3468
    %v3479 = vmul.f32 %v3459, %v3472
    %v3480 = vmul.f32 %v3460, %v3476
    %3481 = vst [vmem:[#allocation3 + $0x100] sm:$0xff] %v3477
    %3482 = vst [vmem:[#allocation3 + $0x108] sm:$0xff] %v3478
    %3483 = vst [vmem:[#allocation3 + $0x110] sm:$0xff] %v3479
    %3484 = vst [vmem:[#allocation3 + $0x118] sm:$0xff] %v3480
    %v3485 = vld [vmem:[#allocation3] sm:$0xff]
    %v3486 = vld [vmem:[#allocation3 + $0x8] sm:$0xff]
    %v3487 = vld [vmem:[#allocation3 + $0x10] sm:$0xff]
    %v3488 = vld [vmem:[#allocation3 + $0x18] sm:$0xff]
    %v3489 = vld [vmem:[#allocation3 + $0x20] sm:$0xff]
    %v3490 = vld [vmem:[#allocation3 + $0x28] sm:$0xff]
    %v3491 = vld [vmem:[#allocation3 + $0x30] sm:$0xff]
    %v3492 = vld [vmem:[#allocation3 + $0x38] sm:$0xff]
    %v3493 = vld [vmem:[#allocation3 + $0x40] sm:$0xff]
    %v3494 = vld [vmem:[#allocation3 + $0x48] sm:$0xff]
    %v3495 = vld [vmem:[#allocation3 + $0x50] sm:$0xff]
    %v3496 = vld [vmem:[#allocation3 + $0x58] sm:$0xff]
    %v3497 = vld [vmem:[#allocation3 + $0x60] sm:$0xff]
    %v3498 = vld [vmem:[#allocation3 + $0x68] sm:$0xff]
    %v3499 = vld [vmem:[#allocation3 + $0x70] sm:$0xff]
    %v3500 = vld [vmem:[#allocation3 + $0x78] sm:$0xff]
    %v3501 = vld [vmem:[#allocation3 + $0x80] sm:$0xff]
    %v3502 = vld [vmem:[#allocation3 + $0x88] sm:$0xff]
    %v3503 = vld [vmem:[#allocation3 + $0x90] sm:$0xff]
    %v3504 = vld [vmem:[#allocation3 + $0x98] sm:$0xff]
    %v3505 = vld [vmem:[#allocation3 + $0xa0] sm:$0xff]
    %v3506 = vld [vmem:[#allocation3 + $0xa8] sm:$0xff]
    %v3507 = vld [vmem:[#allocation3 + $0xb0] sm:$0xff]
    %v3508 = vld [vmem:[#allocation3 + $0xb8] sm:$0xff]
    %v3509 = vld [vmem:[#allocation3 + $0xc0] sm:$0xff]
    %v3510 = vld [vmem:[#allocation3 + $0xc8] sm:$0xff]
    %v3511 = vld [vmem:[#allocation3 + $0xd0] sm:$0xff]
    %v3512 = vld [vmem:[#allocation3 + $0xd8] sm:$0xff]
    %v3513 = vld [vmem:[#allocation3 + $0xe0] sm:$0xff]
    %v3514 = vld [vmem:[#allocation3 + $0xe8] sm:$0xff]
    %v3515 = vld [vmem:[#allocation3 + $0xf0] sm:$0xff]
    %v3516 = vld [vmem:[#allocation3 + $0xf8] sm:$0xff]
    %v3517 = vld [vmem:[#allocation3 + $0x100] sm:$0xff]
    %v3518 = vld [vmem:[#allocation3 + $0x108] sm:$0xff]
    %v3519 = vld [vmem:[#allocation3 + $0x110] sm:$0xff]
    %v3520 = vld [vmem:[#allocation3 + $0x118] sm:$0xff]
    %v3521 = vrot.slane %v1905, 2
    %v3522 = vsel %vm651, %v3521, 0
    %3524 = vmatprep.subr.mxu0 %v3486
    %3525 = vmatpush1.msra.mxu0 %v3485
    %3526 = vmatprep.subr.mxu0 %v3490
    %3527 = vmatpush1.msra.mxu0 %v3489
    %3528 = vmatprep.subr.mxu0 %v3494
    %3529 = vmatpush1.msra.mxu0 %v3493
    %3530 = vmatprep.subr.mxu0 %v3498
    %3531 = vmatpush1.msra.mxu0 %v3497
    %3532 = vmatprep.subr.mxu0 %v3502
    %3533 = vmatpush1.msra.mxu0 %v3501
    %3534 = vmatprep.subr.mxu0 %v3506
    %3535 = vmatpush1.msra.mxu0 %v3505
    %3536 = vmatprep.subr.mxu0 %v3510
    %3537 = vmatpush1.msra.mxu0 %v3509
    %3538 = vmatprep.subr.mxu0 %v3514
    %3539 = vmatpush1.msra.mxu0 %v3513
    %3540 = vmatprep.subr.mxu0 %v3518
    %3541 = vmatpush1.msra.mxu0 %v3517
    %3542 = vmatprep.subr.mxu0 0.0
    %3543 = vmatpush1.msra.mxu0 0.0
    %3544 = vmatprep.subr.mxu0 0.0
    %3545 = vmatpush1.msra.mxu0 0.0
    %3546 = vmatprep.subr.mxu0 0.0
    %3547 = vmatpush1.msra.mxu0 0.0
    %3548 = vmatprep.subr.mxu0 0.0
    %3549 = vmatpush1.msra.mxu0 0.0
    %3550 = vmatprep.subr.mxu0 0.0
    %3551 = vmatpush1.msra.mxu0 0.0
    %3552 = vmatprep.subr.mxu0 0.0
    %3553 = vmatpush1.msra.mxu0 0.0
    %3554 = vmatprep.subr.mxu0 0.0
    %3555 = vmatpush1.msra.mxu0 0.0
    %3556 = vmatprep.subr.mxu0 0.0
    %3557 = vmatpush1.msra.mxu0 0.0
    %3558 = vmatprep.subr.mxu0 0.0
    %3559 = vmatpush1.msra.mxu0 0.0
    %3560 = vmatprep.subr.mxu0 0.0
    %3561 = vmatpush1.msra.mxu0 0.0
    %3562 = vmatprep.subr.mxu0 0.0
    %3563 = vmatpush1.msra.mxu0 0.0
    %3564 = vmatprep.subr.mxu0 0.0
    %3565 = vmatpush1.msra.mxu0 0.0
    %3566 = vmatprep.subr.mxu0 0.0
    %3567 = vmatpush1.msra.mxu0 0.0
    %3568 = vmatprep.subr.mxu0 0.0
    %3569 = vmatpush1.msra.mxu0 0.0
    %3570 = vmatprep.subr.mxu0 0.0
    %3571 = vmatpush1.msra.mxu0 0.0
    %3572 = vmatprep.subr.mxu0 0.0
    %3573 = vmatpush1.msra.mxu0 0.0
    %3574 = vmatprep.subr.mxu0 0.0
    %3575 = vmatpush1.msra.mxu0 0.0
    %3576 = vmatprep.subr.mxu0 0.0
    %3577 = vmatpush1.msra.mxu0 0.0
    %3578 = vmatprep.subr.mxu0 0.0
    %3579 = vmatpush1.msra.mxu0 0.0
    %3580 = vmatprep.subr.mxu0 0.0
    %3581 = vmatpush1.msra.mxu0 0.0
    %3582 = vmatprep.subr.mxu0 0.0
    %3583 = vmatpush1.msra.mxu0 0.0
    %3584 = vmatprep.subr.mxu0 0.0
    %3585 = vmatpush1.msra.mxu0 0.0
    %3586 = vmatprep.subr.mxu0 0.0
    %3587 = vmatpush1.msra.mxu0 0.0
    %3588 = vmatprep.mubr.f32.mxu0 0.0
    %3589 = vmatmul.mubr.f32.gmra.mrb[0].mxu0 %v3522
    %v3590 = vpop.f32.mrb[0].mxu0
    %v3591 = vadd.f32 0.0, %v3590
    %v3592 = vpop.f32.mrb[0].mxu0
    %v3593 = vadd.f32 0.0, %v3592
    %3594 = vdwg.mxu0
    %3595 = vmatprep.subr.mxu0 %v3488
    %3596 = vmatpush1.msra.mxu0 %v3487
    %3597 = vmatprep.subr.mxu0 %v3492
    %3598 = vmatpush1.msra.mxu0 %v3491
    %3599 = vmatprep.subr.mxu0 %v3496
    %3600 = vmatpush1.msra.mxu0 %v3495
    %3601 = vmatprep.subr.mxu0 %v3500
    %3602 = vmatpush1.msra.mxu0 %v3499
    %3603 = vmatprep.subr.mxu0 %v3504
    %3604 = vmatpush1.msra.mxu0 %v3503
    %3605 = vmatprep.subr.mxu0 %v3508
    %3606 = vmatpush1.msra.mxu0 %v3507
    %3607 = vmatprep.subr.mxu0 %v3512
    %3608 = vmatpush1.msra.mxu0 %v3511
    %3609 = vmatprep.subr.mxu0 %v3516
    %3610 = vmatpush1.msra.mxu0 %v3515
    %3611 = vmatprep.subr.mxu0 %v3520
    %3612 = vmatpush1.msra.mxu0 %v3519
    %3613 = vmatprep.subr.mxu0 0.0
    %3614 = vmatpush1.msra.mxu0 0.0
    %3615 = vmatprep.subr.mxu0 0.0
    %3616 = vmatpush1.msra.mxu0 0.0
    %3617 = vmatprep.subr.mxu0 0.0
    %3618 = vmatpush1.msra.mxu0 0.0
    %3619 = vmatprep.subr.mxu0 0.0
    %3620 = vmatpush1.msra.mxu0 0.0
    %3621 = vmatprep.subr.mxu0 0.0
    %3622 = vmatpush1.msra.mxu0 0.0
    %3623 = vmatprep.subr.mxu0 0.0
    %3624 = vmatpush1.msra.mxu0 0.0
    %3625 = vmatprep.subr.mxu0 0.0
    %3626 = vmatpush1.msra.mxu0 0.0
    %3627 = vmatprep.subr.mxu0 0.0
    %3628 = vmatpush1.msra.mxu0 0.0
    %3629 = vmatprep.subr.mxu0 0.0
    %3630 = vmatpush1.msra.mxu0 0.0
    %3631 = vmatprep.subr.mxu0 0.0
    %3632 = vmatpush1.msra.mxu0 0.0
    %3633 = vmatprep.subr.mxu0 0.0
    %3634 = vmatpush1.msra.mxu0 0.0
    %3635 = vmatprep.subr.mxu0 0.0
    %3636 = vmatpush1.msra.mxu0 0.0
    %3637 = vmatprep.subr.mxu0 0.0
    %3638 = vmatpush1.msra.mxu0 0.0
    %3639 = vmatprep.subr.mxu0 0.0
    %3640 = vmatpush1.msra.mxu0 0.0
    %3641 = vmatprep.subr.mxu0 0.0
    %3642 = vmatpush1.msra.mxu0 0.0
    %3643 = vmatprep.subr.mxu0 0.0
    %3644 = vmatpush1.msra.mxu0 0.0
    %3645 = vmatprep.subr.mxu0 0.0
    %3646 = vmatpush1.msra.mxu0 0.0
    %3647 = vmatprep.subr.mxu0 0.0
    %3648 = vmatpush1.msra.mxu0 0.0
    %3649 = vmatprep.subr.mxu0 0.0
    %3650 = vmatpush1.msra.mxu0 0.0
    %3651 = vmatprep.subr.mxu0 0.0
    %3652 = vmatpush1.msra.mxu0 0.0
    %3653 = vmatprep.subr.mxu0 0.0
    %3654 = vmatpush1.msra.mxu0 0.0
    %3655 = vmatprep.subr.mxu0 0.0
    %3656 = vmatpush1.msra.mxu0 0.0
    %3657 = vmatprep.subr.mxu0 0.0
    %3658 = vmatpush1.msra.mxu0 0.0
    %3659 = vmatprep.mubr.f32.mxu0 0.0
    %3660 = vmatmul.mubr.f32.gmra.mrb[0].mxu0 %v3522
    %v3661 = vpop.f32.mrb[0].mxu0
    %v3662 = vadd.f32 0.0, %v3661
    %v3663 = vpop.f32.mrb[0].mxu0
    %v3664 = vadd.f32 0.0, %v3663
    %3665 = vdwg.mxu0
    %v3666 = vld [vmem:[#allocation4] sm:$0xff]
    %v3669 = vcombine.low %v3591, %v3593
    %v3671 = vadd.f32 %v3666, %v3669
    %3673 = vset.pattern.permute.xlu0 0
    %3674 = vperm.xlu0 %3673, %v3230
    %v3675 = vpop.permute.xlu0 %3674
    %v3677 = vunpack.c.l.s4 839922192
    %v3678 = vunpack.c.0.s8 %v3677
    %v3679 = vlaneseq
    %v3680 = vshrl.u32 %v3679, 7
    %v3681 = vsub.s32 %v3678, %v3680
    %v3682 = vrot.slane %v3675, %v3681
    %v3684 = vadd.f32 %v3671, %v3682
    %3685 = vst [vmem:[#allocation12] sm:$0xff] %v3684
    %v3686 = vld [vmem:[%s92] sm:$0xff]
    %v3689 = vcombine.low %v3662, %v3664
    %v3691 = vadd.f32 %v3686, %v3689
    %3692 = vset.pattern.permute.xlu0 1
    %3693 = vperm.xlu0 %3692, %v3230
    %v3694 = vpop.permute.xlu0 %3693
    %v3696 = vunpack.c.l.s4 839922192
    %v3697 = vunpack.c.0.s8 %v3696
    %v3698 = vlaneseq
    %v3699 = vshrl.u32 %v3698, 7
    %v3700 = vsub.s32 %v3697, %v3699
    %v3701 = vrot.slane %v3694, %v3700
    %v3703 = vadd.f32 %v3691, %v3701
    %s3704 = scalar_lea.vmem [#allocation12], 8
    %3705 = vst [vmem:[%s3704] sm:$0xff] %v3703
    // Predicated region
    $region34: #{tpu_custom_call.1} parent=1 // pred_check
      _
    $region35: #{tpu_custom_call.1} parent=1 // pred_check_branch
      %3707 = sbr.rel (0) target = $region37
    $region36: #{tpu_custom_call.1} parent=1 // pred_region
      %s3709 = ssub.s32 256, 256
      %3710 = vsyncadd [#allocation6], %s3709
      %s3711 = sshll.u32 [#allocation12], 4
      %s3712 = int_to_ptr.vmem [resolvable:$true] %s3711
      %3717 = dma.vmem_to_hbm [thread:$0]  %s3712, 256, %s4, [#allocation6], 128, 128, 8
    $region37: #{tpu_custom_call.1} parent=1 // pred_fallthru
      _
    // Predicated region
    $region38: #{tpu_custom_call.1} parent=1 // pred_check
      _
    $region39: #{tpu_custom_call.1} parent=1 // pred_check_branch
      %3719 = sbr.rel (0) target = $region41
    $region40: #{tpu_custom_call.1} parent=1 // pred_region
      %3720 = dma.done [#allocation6], 256
    $region41: #{tpu_custom_call.1} parent=1 // pred_fallthru
      _
    %3721 = vsyncpa [#allocation5], 1
    %3722 = vsyncpa [#allocation8], 1
    %3723 = vsyncpa [#allocation11], 1
    %3724 = vsyncpa [#allocation6], 1

</llo_original>
